<compile_context>
chip_gen: v7x
topology: tpu7x:2x2x1
jax: 0.10.0
libtpu: 0.0.40
codegen_flags: <defaults>
</compile_context>

<pallas_src>
import math
import numpy as np

import jax
import jax.numpy as jnp
from jax.experimental import pallas as pl
from jax.experimental.pallas import tpu as pltpu

# ---------------- model hyper-parameters (small, consistent with the module) ----
BATCH = 2
IN_CHANNELS = 4
INPUT_SIZE = 16
PATCH = 2
HIDDEN = 32
DEPTH = 2
NUM_HEADS = 4
HEAD_DIM = HIDDEN // NUM_HEADS
MLP_RATIO = 4
PROJ_CLASS_DIM = 32          # projection_class_embeddings_input_dim
FREQ_DIM = 256               # TimestepEmbedder frequency_embedding_size
PRED_SIGMA = True
OUT_CHANNELS = IN_CHANNELS * 2 if PRED_SIGMA else IN_CHANNELS
GRID_H = INPUT_SIZE // PATCH
GRID_W = INPUT_SIZE // PATCH
NUM_PATCHES = GRID_H * GRID_W            # 64 tokens
MLP_HIDDEN = int(HIDDEN * MLP_RATIO)     # 128
PATCH_OUT = PATCH * PATCH * OUT_CHANNELS  # 32

OUT_LANES = 128              # lane-dense (unmasked-vst) output width; valid lanes = PATCH_OUT

# Packed per-block weight slab layout (rows x lanes), f32:
#   rows [0:HIDDEN)  -> weight rows,  row HIDDEN -> bias row, rows HIDDEN+1..39 -> zero pad
#   lanes [0 : 3D)            w_qkv   (Q third scaled by 1/sqrt(head_dim))
#   lanes [3D : 4D)           w_proj
#   lanes [4D : 4D+Hm)        w_fc1
#   lanes [4D+Hm : 4D+2Hm)    w_fc2^T
SLAB_ROWS = 40                              # 32 weight rows + 1 bias row, padded to x8
SLAB_COLS = 4 * HIDDEN + 2 * MLP_HIDDEN     # 384 (multiple of 128)

# ---------------- sincos positional embedding (host-side precompute, numpy) -----
def get_1d_sincos_pos_embed_from_grid(embed_dim, pos):
    assert embed_dim % 2 == 0
    omega = np.arange(embed_dim // 2, dtype=np.float64)
    omega /= embed_dim / 2.0
    omega = 1.0 / 10000 ** omega
    pos = pos.reshape(-1)
    out = np.einsum('m,d->md', pos, omega)
    return np.concatenate([np.sin(out), np.cos(out)], axis=1)

def get_2d_sincos_pos_embed_from_grid(embed_dim, grid):
    assert embed_dim % 2 == 0
    emb_h = get_1d_sincos_pos_embed_from_grid(embed_dim // 2, grid[0])
    emb_w = get_1d_sincos_pos_embed_from_grid(embed_dim // 2, grid[1])
    return np.concatenate([emb_h, emb_w], axis=1)

def get_2d_sincos_pos_embed(embed_dim, grid_size):
    if isinstance(grid_size, int):
        grid_size = (grid_size, grid_size)
    grid_h = np.arange(grid_size[0], dtype=np.float32)
    grid_w = np.arange(grid_size[1], dtype=np.float32)
    grid = np.meshgrid(grid_w, grid_h)
    grid = np.stack(grid, axis=0)
    grid = grid.reshape([2, 1, grid_size[1], grid_size[0]])
    return get_2d_sincos_pos_embed_from_grid(embed_dim, grid)

# ---------------- small helpers (used both in-kernel and in XLA glue) -------------
def _layernorm(x, eps=1e-6):
    mu = jnp.mean(x, axis=-1, keepdims=True)
    xc = x - mu
    var = jnp.mean(xc * xc, axis=-1, keepdims=True)
    return xc * jax.lax.rsqrt(var + eps)

def _gelu_tanh(x):
    return 0.5 * x * (1.0 + jnp.tanh(0.7978845608028654 * (x + 0.044715 * x * x * x)))

def _silu(x):
    return x * jax.nn.sigmoid(x)

# ---------------- Pallas kernel: fused transformer (all blocks + final layer) -----
def _make_fused_dit_kernel(B, T, D, H, hd, Hm):
    BT = B * T

    def kernel(tok_ref, mods_ref, modf_ref, wslab_ref, wlin_ref, blin_ref,
               o_ref, x_scr):
        d = pl.program_id(0)

        # Load the token slab into the resident VMEM scratch at the first step.
        @pl.when(d == 0)
        def _():
            x_scr[...] = tok_ref[...]

        x = x_scr[...]                                       # (B, T, D) f32

        # ---- static slices out of the packed per-block weight slab -------------
        wqkv  = wslab_ref[0, 0:D, 0:3 * D]                   # (D, 3D), Q pre-scaled
        wproj = wslab_ref[0, 0:D, 3 * D:4 * D]               # (D, D)
        wfc1  = wslab_ref[0, 0:D, 4 * D:4 * D + Hm]          # (D, Hm)
        wfc2t = wslab_ref[0, 0:D, 4 * D + Hm:4 * D + 2 * Hm]  # (D, Hm) == w_fc2^T
        bqkv  = wslab_ref[0, D:D + 1, 0:3 * D]               # (1, 3D), Q pre-scaled
        bproj = wslab_ref[0, D:D + 1, 3 * D:4 * D]           # (1, D)
        bfc1  = wslab_ref[0, D:D + 1, 4 * D:4 * D + Hm]      # (1, Hm)
        bfc2  = wslab_ref[0, D:D + 1, 4 * D + Hm:4 * D + Hm + D]   # (1, D)

        mod = mods_ref[0]                                    # (B, 6, D)

        def mvec(i):                                         # per-batch row vector (B, 1, D)
            return mod[:, i:i + 1, :]

        # ---- attention branch: modulate(LN(x)) -> MHA -> gated residual --------
        h = _layernorm(x) * (1.0 + mvec(1)) + mvec(0)        # (B, T, D)
        qkv = jnp.dot(h.reshape(BT, D), wqkv,
                      preferred_element_type=jnp.float32) + bqkv        # (BT, 3D)

        batch_outs = []
        for b in range(B):                    # static unroll; batches must not mix
            r = b * T
            head_outs = []
            for hh in range(H):               # static unroll over heads
                c = hh * hd
                q = qkv[r:r + T, c:c + hd]                    # (T, hd), already scaled
                k = qkv[r:r + T, D + c:D + c + hd]            # (T, hd)
                v = qkv[r:r + T, 2 * D + c:2 * D + c + hd]    # (T, hd)
                # scores = q @ k^T (contract last dims; no materialized transpose)
                s = jnp.einsum('tk,sk->ts', q, k,
                               preferred_element_type=jnp.float32)       # (T, T)
                s = s - jnp.max(s, axis=-1, keepdims=True)
                e = jnp.exp(s)
                p = e * pl.reciprocal(jnp.sum(e, axis=-1, keepdims=True),
                                      approx=True)
                head_outs.append(jnp.dot(p, v,
                                         preferred_element_type=jnp.float32))  # (T, hd)
            batch_outs.append(jnp.concatenate(head_outs, axis=-1))       # (T, D)
        o_all = jnp.concatenate(batch_outs, axis=0)                      # (BT, D)

        attn = jnp.dot(o_all, wproj, preferred_element_type=jnp.float32) + bproj
        x = x + mvec(2) * attn.reshape(B, T, D)

        # ---- MLP branch: modulate(LN(x)) -> GELU(tanh) MLP -> gated residual ---
        h2 = _layernorm(x) * (1.0 + mvec(4)) + mvec(3)                   # (B, T, D)
        h2 = jnp.dot(h2.reshape(BT, D), wfc1,
                     preferred_element_type=jnp.float32) + bfc1          # (BT, Hm)
        h2 = _gelu_tanh(h2)
        # h2 @ w_fc2 with w_fc2 stored transposed in the slab (contract last dims)
        h2 = jnp.einsum('tm,dm->td', h2, wfc2t,
                        preferred_element_type=jnp.float32) + bfc2       # (BT, D)
        x = x + mvec(5) * h2.reshape(B, T, D)

        x_scr[...] = x

        # ---- FinalLayer fused into the last depth step --------------------------
        @pl.when(d == pl.num_programs(0) - 1)
        def _():
            modf = modf_ref[...]                             # (B, 2, D): [shift, scale]
            hf = _layernorm(x) * (1.0 + modf[:, 1:2, :]) + modf[:, 0:1, :]
            # w_lin / b_lin are zero-padded to 128 lanes -> lane-dense unmasked store.
            out = jnp.dot(hf.reshape(BT, D), wlin_ref[...],
                          preferred_element_type=jnp.float32) + blin_ref[...]
            o_ref[...] = out                                 # (BT, OUT_LANES)

    return kernel

def fused_transformer(tokens, mods, mod_f, packed):
    B, T, D = tokens.shape
    depth = mods.shape[0]
    return pl.pallas_call(
        _make_fused_dit_kernel(B, T, D, NUM_HEADS, HEAD_DIM, MLP_HIDDEN),
        out_shape=jax.ShapeDtypeStruct((B * T, OUT_LANES), jnp.float32),
        grid=(depth,),
        in_specs=[
            pl.BlockSpec((B, T, D), lambda d: (0, 0, 0)),                # tokens
            pl.BlockSpec((1, B, 6, D), lambda d: (d, 0, 0, 0)),          # per-block adaLN mods
            pl.BlockSpec((B, 2, D), lambda d: (0, 0, 0)),                # final-layer mod
            pl.BlockSpec((1, SLAB_ROWS, SLAB_COLS), lambda d: (d, 0, 0)),  # packed weights
            pl.BlockSpec((D, OUT_LANES), lambda d: (0, 0)),              # final linear w (padded)
            pl.BlockSpec((1, OUT_LANES), lambda d: (0, 0)),              # final linear b (padded)
        ],
        out_specs=pl.BlockSpec((B * T, OUT_LANES), lambda d: (0, 0)),
        scratch_shapes=[pltpu.VMEM((B, T, D), jnp.float32)],
        compiler_params=pltpu.CompilerParams(dimension_semantics=("arbitrary",)),
    )(tokens, mods, mod_f, packed["w_slab"], packed["w_lin_pad"], packed["b_lin_pad"])

# ---------------- glue: timestep sinusoidal embedding ----------------------------
def timestep_embedding(t, dim, max_period=10000):
    half = dim // 2
    freqs = jnp.exp(-math.log(max_period) * jnp.arange(half, dtype=jnp.float32) / half)
    args = t[:, None].astype(jnp.float32) * freqs[None, :]
    return jnp.concatenate([jnp.cos(args), jnp.sin(args)], axis=-1)

# ---------------- deterministic parameter init ------------------------------------
def init_params(key):
    def nrm(k, shape, std=0.02):
        return (std * jax.random.normal(k, shape)).astype(jnp.float32)

    keys = jax.random.split(key, 64)
    ki = iter(range(64))
    p = {}
    # PatchEmbed: Conv2d(C, HIDDEN, k=p, s=p) expressed as matmul over flattened patches.
    p["w_pe"] = nrm(keys[next(ki)], (IN_CHANNELS * PATCH * PATCH, HIDDEN))
    p["b_pe"] = nrm(keys[next(ki)], (HIDDEN,))
    # TimestepEmbedder MLP: Linear(256, H), SiLU, Linear(H, H)
    p["w_t0"] = nrm(keys[next(ki)], (FREQ_DIM, HIDDEN))
    p["b_t0"] = nrm(keys[next(ki)], (HIDDEN,))
    p["w_t1"] = nrm(keys[next(ki)], (HIDDEN, HIDDEN))
    p["b_t1"] = nrm(keys[next(ki)], (HIDDEN,))
    # c_embedder: Linear(PROJ_CLASS_DIM, H)
    p["w_c"] = nrm(keys[next(ki)], (PROJ_CLASS_DIM, HIDDEN))
    p["b_c"] = nrm(keys[next(ki)], (HIDDEN,))
    # sincos pos_embed buffer
    p["pos_embed"] = jnp.asarray(
        get_2d_sincos_pos_embed(HIDDEN, (GRID_H, GRID_W)), dtype=jnp.float32)[None]
    # transformer blocks
    blocks = []
    for _ in range(DEPTH):
        blk = {
            "w_ada": nrm(keys[next(ki)], (HIDDEN, 6 * HIDDEN)),
            "b_ada": nrm(keys[next(ki)], (6 * HIDDEN,)),
            "w_qkv": nrm(keys[next(ki)], (HIDDEN, 3 * HIDDEN)),
            "b_qkv": nrm(keys[next(ki)], (3 * HIDDEN,)),
            "w_proj": nrm(keys[next(ki)], (HIDDEN, HIDDEN)),
            "b_proj": nrm(keys[next(ki)], (HIDDEN,)),
            "w_fc1": nrm(keys[next(ki)], (HIDDEN, MLP_HIDDEN)),
            "b_fc1": nrm(keys[next(ki)], (MLP_HIDDEN,)),
            "w_fc2": nrm(keys[next(ki)], (MLP_HIDDEN, HIDDEN)),
            "b_fc2": nrm(keys[next(ki)], (HIDDEN,)),
        }
        blocks.append(blk)
    p["blocks"] = blocks
    # FinalLayer
    p["w_ada_f"] = nrm(keys[next(ki)], (HIDDEN, 2 * HIDDEN))
    p["b_ada_f"] = nrm(keys[next(ki)], (2 * HIDDEN,))
    p["w_lin"] = nrm(keys[next(ki)], (HIDDEN, PATCH_OUT))
    p["b_lin"] = nrm(keys[next(ki)], (PATCH_OUT,))
    return p

# ---------------- pack/stack weights for the fused kernel --------------------------
def pack_params(p):
    D, Hm = HIDDEN, MLP_HIDDEN
    scale = HEAD_DIM ** -0.5
    slabs = []
    w_ada_cols, b_ada_cols = [], []
    for blk in p["blocks"]:
        w_qkv, b_qkv = blk["w_qkv"], blk["b_qkv"]
        # fold 1/sqrt(head_dim) into the Q third of the fused qkv weights + bias
        w_qkv_s = jnp.concatenate([w_qkv[:, :D] * scale, w_qkv[:, D:]], axis=1)
        b_qkv_s = jnp.concatenate([b_qkv[:D] * scale, b_qkv[D:]], axis=0)
        w_rows = jnp.concatenate(
            [w_qkv_s, blk["w_proj"], blk["w_fc1"], blk["w_fc2"].T], axis=1)   # (D, SLAB_COLS)
        bias_row = jnp.concatenate(
            [b_qkv_s, blk["b_proj"], blk["b_fc1"], blk["b_fc2"],
             jnp.zeros((SLAB_COLS - (3 * D + D + Hm + D),), jnp.float32)],
            axis=0)[None]                                                      # (1, SLAB_COLS)
        pad_rows = jnp.zeros((SLAB_ROWS - D - 1, SLAB_COLS), jnp.float32)
        slabs.append(jnp.concatenate([w_rows, bias_row, pad_rows], axis=0))   # (40, 384)
        w_ada_cols.append(blk["w_ada"])
        b_ada_cols.append(blk["b_ada"])
    # all block adaLN matrices + the FinalLayer adaLN concatenated -> ONE matmul on t0
    w_ada_cols.append(p["w_ada_f"])
    b_ada_cols.append(p["b_ada_f"])
    # FinalLayer linear zero-padded to 128 output lanes (lane-dense unmasked store)
    w_lin_pad = jnp.zeros((D, OUT_LANES), jnp.float32).at[:, :PATCH_OUT].set(p["w_lin"])
    b_lin_pad = jnp.zeros((1, OUT_LANES), jnp.float32).at[:, :PATCH_OUT].set(p["b_lin"])
    return {
        "w_slab": jnp.stack(slabs),                         # (DEPTH, 40, 384)
        "w_ada_all": jnp.concatenate(w_ada_cols, axis=1),   # (D, DEPTH*6*D + 2*D)
        "b_ada_all": jnp.concatenate(b_ada_cols, axis=0),
        "w_lin_pad": w_lin_pad,
        "b_lin_pad": b_lin_pad,
    }

# ---------------- full DiT forward -------------------------------------------------
def dit_forward(params, packed, x, timestep, class_labels, y=None):
    # x: (N, C, H, W) NCHW; y unused (concat_y=False, cross_class=False config).
    # TODO(synk): concat_y / cross_class / drop_path / auto_grad_checkpoint paths are
    # disabled in this configuration (inference, no windowed blocks) and omitted.
    x = x.astype(jnp.float32)
    timestep = timestep.astype(jnp.float32)
    class_labels = class_labels.astype(jnp.float32)

    N, C, Himg, Wimg = x.shape
    ph, pw = Himg // PATCH, Wimg // PATCH

    # --- tiny embedder linears left to XLA (launch cost >> compute at these sizes) ---
    xp = x.reshape(N, C, ph, PATCH, pw, PATCH)
    xp = jnp.transpose(xp, (0, 2, 4, 1, 3, 5)).reshape(N * ph * pw, C * PATCH * PATCH)
    tokens = (xp @ params["w_pe"] + params["b_pe"]).reshape(N, ph * pw, HIDDEN)
    tokens = tokens + params["pos_embed"]

    t_freq = timestep_embedding(timestep, FREQ_DIM)
    t_hidden = t_freq @ params["w_t0"] + params["b_t0"]
    t_emb = _silu(t_hidden) @ params["w_t1"] + params["b_t1"]
    c_emb = class_labels @ params["w_c"] + params["b_c"]
    t0 = t_emb + c_emb

    # --- every block's + final adaLN modulation in a single matmul (t0 is shared) ---
    mod_all = _silu(t0) @ packed["w_ada_all"] + packed["b_ada_all"]
    split = DEPTH * 6 * HIDDEN
    mods = mod_all[:, :split].reshape(N, DEPTH, 6, HIDDEN)
    mods = jnp.transpose(mods, (1, 0, 2, 3))                 # (DEPTH, N, 6, HIDDEN)
    mod_f = mod_all[:, split:].reshape(N, 2, HIDDEN)

    # --- fused transformer: all DEPTH blocks + FinalLayer in ONE pallas_call ---
    out_slab = fused_transformer(tokens, mods, mod_f, packed)     # (N*T, 128) lane-dense
    out_tokens = out_slab[:, :PATCH_OUT].reshape(N, ph * pw, PATCH_OUT)

    # --- unpatchify: (N, T, p*p*c) -> (N, c, H, W) ---
    xo = out_tokens.reshape(N, ph, pw, PATCH, PATCH, OUT_CHANNELS)
    xo = jnp.einsum('nhwpqc->nchpwq', xo)
    return xo.reshape(N, OUT_CHANNELS, ph * PATCH, pw * PATCH)

# ---------------- main --------------------------------------------------------------
if __name__ == "__main__":
    key = jax.random.PRNGKey(0)
    kx, kt, kc, ky, kp = jax.random.split(key, 5)

    x = jax.random.normal(kx, (BATCH, IN_CHANNELS, INPUT_SIZE, INPUT_SIZE), jnp.float32)
    timestep = jax.random.uniform(kt, (BATCH,), jnp.float32, 0.0, 1000.0)
    class_labels = jax.random.normal(kc, (BATCH, PROJ_CLASS_DIM), jnp.float32)
    y = jax.random.normal(ky, (BATCH, IN_CHANNELS, INPUT_SIZE, INPUT_SIZE), jnp.float32)  # unused

    params = init_params(kp)
    packed = pack_params(params)

    fwd = jax.jit(dit_forward)
    out = fwd(params, packed, x, timestep, class_labels, y)
    out = jax.block_until_ready(out)

    assert out.shape == (BATCH, OUT_CHANNELS, INPUT_SIZE, INPUT_SIZE), out.shape
    assert bool(jnp.all(jnp.isfinite(out)))
    print("KERNEL_OK")
</pallas_src>

<mosaic_0001>
module attributes {stable_mosaic.version = 11 : i64} {
  func.func @kernel(%arg0: i32, %arg1: memref<2x64x32xf32, #tpu.memory_space<vmem>>, %arg2: memref<1x2x6x32xf32, #tpu.memory_space<vmem>>, %arg3: memref<2x2x32xf32, #tpu.memory_space<vmem>>, %arg4: memref<1x40x384xf32, #tpu.memory_space<vmem>>, %arg5: memref<32x128xf32, #tpu.memory_space<vmem>>, %arg6: memref<1x128xf32, #tpu.memory_space<vmem>>, %arg7: memref<128x128xf32, #tpu.memory_space<vmem>>, %arg8: memref<2x64x32xf32, #tpu.memory_space<vmem>>) attributes {dimension_semantics = [#tpu.dimension_semantics<arbitrary>], iteration_bounds = array<i64: 2>, scalar_prefetch = 0 : i64, scratch_operands = 1 : i64, tpu.core_type = #tpu.core_type<tc>, window_params = [{pipeline_mode = #tpu.pipeline_mode<synchronous>, transform_indices = @transform_0, window_bounds = array<i64: 2, 64, 32>}, {transform_indices = @transform_1, window_bounds = array<i64: 1, 2, 6, 32>}, {pipeline_mode = #tpu.pipeline_mode<synchronous>, transform_indices = @transform_2, window_bounds = array<i64: 2, 2, 32>}, {transform_indices = @transform_3, window_bounds = array<i64: 1, 40, 384>}, {pipeline_mode = #tpu.pipeline_mode<synchronous>, transform_indices = @transform_4, window_bounds = array<i64: 32, 128>}, {pipeline_mode = #tpu.pipeline_mode<synchronous>, transform_indices = @transform_5, window_bounds = array<i64: 1, 128>}, {pipeline_mode = #tpu.pipeline_mode<synchronous>, transform_indices = @transform_6, window_bounds = array<i64: 128, 128>}]} {
    %c0_i32 = arith.constant 0 : i32
    %0 = arith.cmpi eq, %arg0, %c0_i32 : i32
    %1 = arith.extui %0 : i1 to i32
    %c0_i32_0 = arith.constant 0 : i32
    %2 = arith.cmpi ne, %1, %c0_i32_0 : i32
    scf.if %2 {
      %c0_82 = arith.constant 0 : index
      %c0_83 = arith.constant 0 : index
      %c0_84 = arith.constant 0 : index
      %234 = vector.load %arg1[%c0_82, %c0_83, %c0_84] : memref<2x64x32xf32, #tpu.memory_space<vmem>>, vector<2x64x32xf32>
      %c0_85 = arith.constant 0 : index
      %c0_86 = arith.constant 0 : index
      %c0_87 = arith.constant 0 : index
      %235 = vector.load %arg8[%c0_85, %c0_86, %c0_87] : memref<2x64x32xf32, #tpu.memory_space<vmem>>, vector<2x64x32xf32>
      tpu.vector_store %arg8[%c0_85, %c0_86, %c0_87], %234 {strides = array<i32>} : memref<2x64x32xf32, #tpu.memory_space<vmem>>, vector<2x64x32xf32>,
    } else {
    }
    %c0 = arith.constant 0 : index
    %c0_1 = arith.constant 0 : index
    %c0_2 = arith.constant 0 : index
    %3 = vector.load %arg8[%c0, %c0_1, %c0_2] : memref<2x64x32xf32, #tpu.memory_space<vmem>>, vector<2x64x32xf32>
    %c0_3 = arith.constant 0 : index
    %c0_4 = arith.constant 0 : index
    %c0_5 = arith.constant 0 : index
    %4 = vector.load %arg4[%c0_3, %c0_4, %c0_5] : memref<1x40x384xf32, #tpu.memory_space<vmem>>, vector<1x32x96xf32>
    %5 = vector.shape_cast %4 : vector<1x32x96xf32> to vector<32x96xf32>
    %c0_6 = arith.constant 0 : index
    %c0_7 = arith.constant 0 : index
    %c96 = arith.constant 96 : index
    %6 = vector.load %arg4[%c0_6, %c0_7, %c96] : memref<1x40x384xf32, #tpu.memory_space<vmem>>, vector<1x32x32xf32>
    %7 = vector.shape_cast %6 : vector<1x32x32xf32> to vector<32x32xf32>
    %c0_8 = arith.constant 0 : index
    %c0_9 = arith.constant 0 : index
    %c128 = arith.constant 128 : index
    %8 = vector.load %arg4[%c0_8, %c0_9, %c128] : memref<1x40x384xf32, #tpu.memory_space<vmem>>, vector<1x32x128xf32>
    %9 = vector.shape_cast %8 : vector<1x32x128xf32> to vector<32x128xf32>
    %c0_10 = arith.constant 0 : index
    %c0_11 = arith.constant 0 : index
    %c256 = arith.constant 256 : index
    %10 = vector.load %arg4[%c0_10, %c0_11, %c256] : memref<1x40x384xf32, #tpu.memory_space<vmem>>, vector<1x32x128xf32>
    %11 = vector.shape_cast %10 : vector<1x32x128xf32> to vector<32x128xf32>
    %c0_12 = arith.constant 0 : index
    %c32 = arith.constant 32 : index
    %c0_13 = arith.constant 0 : index
    %12 = vector.load %arg4[%c0_12, %c32, %c0_13] : memref<1x40x384xf32, #tpu.memory_space<vmem>>, vector<1x1x96xf32>
    %13 = vector.shape_cast %12 : vector<1x1x96xf32> to vector<1x96xf32>
    %c0_14 = arith.constant 0 : index
    %c32_15 = arith.constant 32 : index
    %c96_16 = arith.constant 96 : index
    %14 = vector.load %arg4[%c0_14, %c32_15, %c96_16] : memref<1x40x384xf32, #tpu.memory_space<vmem>>, vector<1x1x32xf32>
    %15 = vector.shape_cast %14 : vector<1x1x32xf32> to vector<1x32xf32>
    %c0_17 = arith.constant 0 : index
    %c32_18 = arith.constant 32 : index
    %c128_19 = arith.constant 128 : index
    %16 = vector.load %arg4[%c0_17, %c32_18, %c128_19] : memref<1x40x384xf32, #tpu.memory_space<vmem>>, vector<1x1x128xf32>
    %17 = vector.shape_cast %16 : vector<1x1x128xf32> to vector<1x128xf32>
    %c0_20 = arith.constant 0 : index
    %c32_21 = arith.constant 32 : index
    %c256_22 = arith.constant 256 : index
    %18 = vector.load %arg4[%c0_20, %c32_21, %c256_22] : memref<1x40x384xf32, #tpu.memory_space<vmem>>, vector<1x1x32xf32>
    %19 = vector.shape_cast %18 : vector<1x1x32xf32> to vector<1x32xf32>
    %c0_23 = arith.constant 0 : index
    %c0_24 = arith.constant 0 : index
    %c0_25 = arith.constant 0 : index
    %c0_26 = arith.constant 0 : index
    %20 = vector.load %arg2[%c0_23, %c0_24, %c0_25, %c0_26] : memref<1x2x6x32xf32, #tpu.memory_space<vmem>>, vector<1x2x6x32xf32>
    %21 = vector.shape_cast %20 : vector<1x2x6x32xf32> to vector<2x6x32xf32>
    %cst = arith.constant dense<0.000000e+00> : vector<2x64xf32>
    %22 = vector.multi_reduction <add>, %3, %cst [2] : vector<2x64x32xf32> to vector<2x64xf32>
    %23 = vector.shape_cast %22 : vector<2x64xf32> to vector<2x64x1xf32>
    %cst_27 = arith.constant 3.200000e+01 : f32
    %24 = vector.broadcast %cst_27 : f32 to vector<2x64x1xf32>
    %25 = arith.divf %23, %24 : vector<2x64x1xf32>
    %26 = vector.broadcast %25 : vector<2x64x1xf32> to vector<2x64x32xf32>
    %27 = arith.subf %3, %26 : vector<2x64x32xf32>
    %28 = arith.mulf %27, %27 : vector<2x64x32xf32>
    %cst_28 = arith.constant dense<0.000000e+00> : vector<2x64xf32>
    %29 = vector.multi_reduction <add>, %28, %cst_28 [2] : vector<2x64x32xf32> to vector<2x64xf32>
    %30 = vector.shape_cast %29 : vector<2x64xf32> to vector<2x64x1xf32>
    %cst_29 = arith.constant 3.200000e+01 : f32
    %31 = vector.broadcast %cst_29 : f32 to vector<2x64x1xf32>
    %32 = arith.divf %30, %31 : vector<2x64x1xf32>
    %cst_30 = arith.constant 9.99999997E-7 : f32
    %33 = vector.broadcast %cst_30 : f32 to vector<2x64x1xf32>
    %34 = arith.addf %32, %33 : vector<2x64x1xf32>
    %35 = math.rsqrt %34 : vector<2x64x1xf32>
    %36 = vector.broadcast %35 : vector<2x64x1xf32> to vector<2x64x32xf32>
    %37 = arith.mulf %27, %36 : vector<2x64x32xf32>
    %38 = vector.extract_strided_slice %21 {offsets = [0, 1, 0], sizes = [2, 1, 32], strides = [1, 1, 1]} : vector<2x6x32xf32> to vector<2x1x32xf32>
    %cst_31 = arith.constant 1.000000e+00 : f32
    %39 = vector.broadcast %cst_31 : f32 to vector<2x1x32xf32>
    %40 = arith.addf %39, %38 : vector<2x1x32xf32>
    %41 = vector.broadcast %40 : vector<2x1x32xf32> to vector<2x64x32xf32>
    %42 = arith.mulf %37, %41 : vector<2x64x32xf32>
    %43 = vector.extract_strided_slice %21 {offsets = [0, 0, 0], sizes = [2, 1, 32], strides = [1, 1, 1]} : vector<2x6x32xf32> to vector<2x1x32xf32>
    %44 = vector.broadcast %43 : vector<2x1x32xf32> to vector<2x64x32xf32>
    %45 = arith.addf %42, %44 : vector<2x64x32xf32>
    %46 = vector.shape_cast %45 : vector<2x64x32xf32> to vector<128x32xf32>
    %cst_32 = arith.constant dense<0.000000e+00> : vector<128x96xf32>
    %47 = tpu.matmul %46, %5, %cst_32 {dimension_numbers = #tpu.dot_dimension_numbers<[1], [0], [0], [1], [0, 0, 1, 1], [], []>} : vector<128x32xf32>, vector<32x96xf32>, vector<128x96xf32> -> vector<128x96xf32>
    %48 = vector.broadcast %13 : vector<1x96xf32> to vector<128x96xf32>
    %49 = arith.addf %47, %48 : vector<128x96xf32>
    %50 = vector.extract_strided_slice %49 {offsets = [0, 0], sizes = [64, 8], strides = [1, 1]} : vector<128x96xf32> to vector<64x8xf32>
    %51 = vector.extract_strided_slice %49 {offsets = [0, 32], sizes = [64, 8], strides = [1, 1]} : vector<128x96xf32> to vector<64x8xf32>
    %52 = vector.extract_strided_slice %49 {offsets = [0, 64], sizes = [64, 8], strides = [1, 1]} : vector<128x96xf32> to vector<64x8xf32>
    "tpu.trace_start"() <{level = 10 : i32, message = "tk,sk->ts"}> : () -> ()
    %cst_33 = arith.constant dense<0.000000e+00> : vector<64x64xf32>
    %53 = tpu.matmul %50, %51, %cst_33 {dimension_numbers = #tpu.dot_dimension_numbers<[1], [1], [0], [0], [0, 0, 1, 0], [], []>} : vector<64x8xf32>, vector<64x8xf32>, vector<64x64xf32> -> vector<64x64xf32>
    "tpu.trace_stop"() : () -> ()
    %cst_34 = arith.constant dense<0xFF800000> : vector<64xf32>
    %54 = vector.multi_reduction <maximumf>, %53, %cst_34 [1] : vector<64x64xf32> to vector<64xf32>
    %55 = vector.shape_cast %54 : vector<64xf32> to vector<64x1xf32>
    %56 = vector.broadcast %55 : vector<64x1xf32> to vector<64x64xf32>
    %57 = arith.subf %53, %56 : vector<64x64xf32>
    %58 = math.exp %57 : vector<64x64xf32>
    %cst_35 = arith.constant dense<0.000000e+00> : vector<64xf32>
    %59 = vector.multi_reduction <add>, %58, %cst_35 [1] : vector<64x64xf32> to vector<64xf32>
    %60 = vector.shape_cast %59 : vector<64xf32> to vector<64x1xf32>
    %61 = tpu.reciprocal %60 {approx = true} : vector<64x1xf32> -> vector<64x1xf32>
    %62 = vector.broadcast %61 : vector<64x1xf32> to vector<64x64xf32>
    %63 = arith.mulf %58, %62 : vector<64x64xf32>
    %cst_36 = arith.constant dense<0.000000e+00> : vector<64x8xf32>
    %64 = tpu.matmul %63, %52, %cst_36 {dimension_numbers = #tpu.dot_dimension_numbers<[1], [0], [0], [1], [0, 0, 1, 1], [], []>} : vector<64x64xf32>, vector<64x8xf32>, vector<64x8xf32> -> vector<64x8xf32>
    %65 = vector.extract_strided_slice %49 {offsets = [0, 8], sizes = [64, 8], strides = [1, 1]} : vector<128x96xf32> to vector<64x8xf32>
    %66 = vector.extract_strided_slice %49 {offsets = [0, 40], sizes = [64, 8], strides = [1, 1]} : vector<128x96xf32> to vector<64x8xf32>
    %67 = vector.extract_strided_slice %49 {offsets = [0, 72], sizes = [64, 8], strides = [1, 1]} : vector<128x96xf32> to vector<64x8xf32>
    "tpu.trace_start"() <{level = 10 : i32, message = "tk,sk->ts"}> : () -> ()
    %cst_37 = arith.constant dense<0.000000e+00> : vector<64x64xf32>
    %68 = tpu.matmul %65, %66, %cst_37 {dimension_numbers = #tpu.dot_dimension_numbers<[1], [1], [0], [0], [0, 0, 1, 0], [], []>} : vector<64x8xf32>, vector<64x8xf32>, vector<64x64xf32> -> vector<64x64xf32>
    "tpu.trace_stop"() : () -> ()
    %cst_38 = arith.constant dense<0xFF800000> : vector<64xf32>
    %69 = vector.multi_reduction <maximumf>, %68, %cst_38 [1] : vector<64x64xf32> to vector<64xf32>
    %70 = vector.shape_cast %69 : vector<64xf32> to vector<64x1xf32>
    %71 = vector.broadcast %70 : vector<64x1xf32> to vector<64x64xf32>
    %72 = arith.subf %68, %71 : vector<64x64xf32>
    %73 = math.exp %72 : vector<64x64xf32>
    %cst_39 = arith.constant dense<0.000000e+00> : vector<64xf32>
    %74 = vector.multi_reduction <add>, %73, %cst_39 [1] : vector<64x64xf32> to vector<64xf32>
    %75 = vector.shape_cast %74 : vector<64xf32> to vector<64x1xf32>
    %76 = tpu.reciprocal %75 {approx = true} : vector<64x1xf32> -> vector<64x1xf32>
    %77 = vector.broadcast %76 : vector<64x1xf32> to vector<64x64xf32>
    %78 = arith.mulf %73, %77 : vector<64x64xf32>
    %cst_40 = arith.constant dense<0.000000e+00> : vector<64x8xf32>
    %79 = tpu.matmul %78, %67, %cst_40 {dimension_numbers = #tpu.dot_dimension_numbers<[1], [0], [0], [1], [0, 0, 1, 1], [], []>} : vector<64x64xf32>, vector<64x8xf32>, vector<64x8xf32> -> vector<64x8xf32>
    %80 = vector.extract_strided_slice %49 {offsets = [0, 16], sizes = [64, 8], strides = [1, 1]} : vector<128x96xf32> to vector<64x8xf32>
    %81 = vector.extract_strided_slice %49 {offsets = [0, 48], sizes = [64, 8], strides = [1, 1]} : vector<128x96xf32> to vector<64x8xf32>
    %82 = vector.extract_strided_slice %49 {offsets = [0, 80], sizes = [64, 8], strides = [1, 1]} : vector<128x96xf32> to vector<64x8xf32>
    "tpu.trace_start"() <{level = 10 : i32, message = "tk,sk->ts"}> : () -> ()
    %cst_41 = arith.constant dense<0.000000e+00> : vector<64x64xf32>
    %83 = tpu.matmul %80, %81, %cst_41 {dimension_numbers = #tpu.dot_dimension_numbers<[1], [1], [0], [0], [0, 0, 1, 0], [], []>} : vector<64x8xf32>, vector<64x8xf32>, vector<64x64xf32> -> vector<64x64xf32>
    "tpu.trace_stop"() : () -> ()
    %cst_42 = arith.constant dense<0xFF800000> : vector<64xf32>
    %84 = vector.multi_reduction <maximumf>, %83, %cst_42 [1] : vector<64x64xf32> to vector<64xf32>
    %85 = vector.shape_cast %84 : vector<64xf32> to vector<64x1xf32>
    %86 = vector.broadcast %85 : vector<64x1xf32> to vector<64x64xf32>
    %87 = arith.subf %83, %86 : vector<64x64xf32>
    %88 = math.exp %87 : vector<64x64xf32>
    %cst_43 = arith.constant dense<0.000000e+00> : vector<64xf32>
    %89 = vector.multi_reduction <add>, %88, %cst_43 [1] : vector<64x64xf32> to vector<64xf32>
    %90 = vector.shape_cast %89 : vector<64xf32> to vector<64x1xf32>
    %91 = tpu.reciprocal %90 {approx = true} : vector<64x1xf32> -> vector<64x1xf32>
    %92 = vector.broadcast %91 : vector<64x1xf32> to vector<64x64xf32>
    %93 = arith.mulf %88, %92 : vector<64x64xf32>
    %cst_44 = arith.constant dense<0.000000e+00> : vector<64x8xf32>
    %94 = tpu.matmul %93, %82, %cst_44 {dimension_numbers = #tpu.dot_dimension_numbers<[1], [0], [0], [1], [0, 0, 1, 1], [], []>} : vector<64x64xf32>, vector<64x8xf32>, vector<64x8xf32> -> vector<64x8xf32>
    %95 = vector.extract_strided_slice %49 {offsets = [0, 24], sizes = [64, 8], strides = [1, 1]} : vector<128x96xf32> to vector<64x8xf32>
    %96 = vector.extract_strided_slice %49 {offsets = [0, 56], sizes = [64, 8], strides = [1, 1]} : vector<128x96xf32> to vector<64x8xf32>
    %97 = vector.extract_strided_slice %49 {offsets = [0, 88], sizes = [64, 8], strides = [1, 1]} : vector<128x96xf32> to vector<64x8xf32>
    "tpu.trace_start"() <{level = 10 : i32, message = "tk,sk->ts"}> : () -> ()
    %cst_45 = arith.constant dense<0.000000e+00> : vector<64x64xf32>
    %98 = tpu.matmul %95, %96, %cst_45 {dimension_numbers = #tpu.dot_dimension_numbers<[1], [1], [0], [0], [0, 0, 1, 0], [], []>} : vector<64x8xf32>, vector<64x8xf32>, vector<64x64xf32> -> vector<64x64xf32>
    "tpu.trace_stop"() : () -> ()
    %cst_46 = arith.constant dense<0xFF800000> : vector<64xf32>
    %99 = vector.multi_reduction <maximumf>, %98, %cst_46 [1] : vector<64x64xf32> to vector<64xf32>
    %100 = vector.shape_cast %99 : vector<64xf32> to vector<64x1xf32>
    %101 = vector.broadcast %100 : vector<64x1xf32> to vector<64x64xf32>
    %102 = arith.subf %98, %101 : vector<64x64xf32>
    %103 = math.exp %102 : vector<64x64xf32>
    %cst_47 = arith.constant dense<0.000000e+00> : vector<64xf32>
    %104 = vector.multi_reduction <add>, %103, %cst_47 [1] : vector<64x64xf32> to vector<64xf32>
    %105 = vector.shape_cast %104 : vector<64xf32> to vector<64x1xf32>
    %106 = tpu.reciprocal %105 {approx = true} : vector<64x1xf32> -> vector<64x1xf32>
    %107 = vector.broadcast %106 : vector<64x1xf32> to vector<64x64xf32>
    %108 = arith.mulf %103, %107 : vector<64x64xf32>
    %cst_48 = arith.constant dense<0.000000e+00> : vector<64x8xf32>
    %109 = tpu.matmul %108, %97, %cst_48 {dimension_numbers = #tpu.dot_dimension_numbers<[1], [0], [0], [1], [0, 0, 1, 1], [], []>} : vector<64x64xf32>, vector<64x8xf32>, vector<64x8xf32> -> vector<64x8xf32>
    %110 = tpu.concatenate %64, %79, %94, %109 in 1 : vector<64x8xf32>, vector<64x8xf32>, vector<64x8xf32>, vector<64x8xf32> -> vector<64x32xf32>
    %111 = vector.extract_strided_slice %49 {offsets = [64, 0], sizes = [64, 8], strides = [1, 1]} : vector<128x96xf32> to vector<64x8xf32>
    %112 = vector.extract_strided_slice %49 {offsets = [64, 32], sizes = [64, 8], strides = [1, 1]} : vector<128x96xf32> to vector<64x8xf32>
    %113 = vector.extract_strided_slice %49 {offsets = [64, 64], sizes = [64, 8], strides = [1, 1]} : vector<128x96xf32> to vector<64x8xf32>
    "tpu.trace_start"() <{level = 10 : i32, message = "tk,sk->ts"}> : () -> ()
    %cst_49 = arith.constant dense<0.000000e+00> : vector<64x64xf32>
    %114 = tpu.matmul %111, %112, %cst_49 {dimension_numbers = #tpu.dot_dimension_numbers<[1], [1], [0], [0], [0, 0, 1, 0], [], []>} : vector<64x8xf32>, vector<64x8xf32>, vector<64x64xf32> -> vector<64x64xf32>
    "tpu.trace_stop"() : () -> ()
    %cst_50 = arith.constant dense<0xFF800000> : vector<64xf32>
    %115 = vector.multi_reduction <maximumf>, %114, %cst_50 [1] : vector<64x64xf32> to vector<64xf32>
    %116 = vector.shape_cast %115 : vector<64xf32> to vector<64x1xf32>
    %117 = vector.broadcast %116 : vector<64x1xf32> to vector<64x64xf32>
    %118 = arith.subf %114, %117 : vector<64x64xf32>
    %119 = math.exp %118 : vector<64x64xf32>
    %cst_51 = arith.constant dense<0.000000e+00> : vector<64xf32>
    %120 = vector.multi_reduction <add>, %119, %cst_51 [1] : vector<64x64xf32> to vector<64xf32>
    %121 = vector.shape_cast %120 : vector<64xf32> to vector<64x1xf32>
    %122 = tpu.reciprocal %121 {approx = true} : vector<64x1xf32> -> vector<64x1xf32>
    %123 = vector.broadcast %122 : vector<64x1xf32> to vector<64x64xf32>
    %124 = arith.mulf %119, %123 : vector<64x64xf32>
    %cst_52 = arith.constant dense<0.000000e+00> : vector<64x8xf32>
    %125 = tpu.matmul %124, %113, %cst_52 {dimension_numbers = #tpu.dot_dimension_numbers<[1], [0], [0], [1], [0, 0, 1, 1], [], []>} : vector<64x64xf32>, vector<64x8xf32>, vector<64x8xf32> -> vector<64x8xf32>
    %126 = vector.extract_strided_slice %49 {offsets = [64, 8], sizes = [64, 8], strides = [1, 1]} : vector<128x96xf32> to vector<64x8xf32>
    %127 = vector.extract_strided_slice %49 {offsets = [64, 40], sizes = [64, 8], strides = [1, 1]} : vector<128x96xf32> to vector<64x8xf32>
    %128 = vector.extract_strided_slice %49 {offsets = [64, 72], sizes = [64, 8], strides = [1, 1]} : vector<128x96xf32> to vector<64x8xf32>
    "tpu.trace_start"() <{level = 10 : i32, message = "tk,sk->ts"}> : () -> ()
    %cst_53 = arith.constant dense<0.000000e+00> : vector<64x64xf32>
    %129 = tpu.matmul %126, %127, %cst_53 {dimension_numbers = #tpu.dot_dimension_numbers<[1], [1], [0], [0], [0, 0, 1, 0], [], []>} : vector<64x8xf32>, vector<64x8xf32>, vector<64x64xf32> -> vector<64x64xf32>
    "tpu.trace_stop"() : () -> ()
    %cst_54 = arith.constant dense<0xFF800000> : vector<64xf32>
    %130 = vector.multi_reduction <maximumf>, %129, %cst_54 [1] : vector<64x64xf32> to vector<64xf32>
    %131 = vector.shape_cast %130 : vector<64xf32> to vector<64x1xf32>
    %132 = vector.broadcast %131 : vector<64x1xf32> to vector<64x64xf32>
    %133 = arith.subf %129, %132 : vector<64x64xf32>
    %134 = math.exp %133 : vector<64x64xf32>
    %cst_55 = arith.constant dense<0.000000e+00> : vector<64xf32>
    %135 = vector.multi_reduction <add>, %134, %cst_55 [1] : vector<64x64xf32> to vector<64xf32>
    %136 = vector.shape_cast %135 : vector<64xf32> to vector<64x1xf32>
    %137 = tpu.reciprocal %136 {approx = true} : vector<64x1xf32> -> vector<64x1xf32>
    %138 = vector.broadcast %137 : vector<64x1xf32> to vector<64x64xf32>
    %139 = arith.mulf %134, %138 : vector<64x64xf32>
    %cst_56 = arith.constant dense<0.000000e+00> : vector<64x8xf32>
    %140 = tpu.matmul %139, %128, %cst_56 {dimension_numbers = #tpu.dot_dimension_numbers<[1], [0], [0], [1], [0, 0, 1, 1], [], []>} : vector<64x64xf32>, vector<64x8xf32>, vector<64x8xf32> -> vector<64x8xf32>
    %141 = vector.extract_strided_slice %49 {offsets = [64, 16], sizes = [64, 8], strides = [1, 1]} : vector<128x96xf32> to vector<64x8xf32>
    %142 = vector.extract_strided_slice %49 {offsets = [64, 48], sizes = [64, 8], strides = [1, 1]} : vector<128x96xf32> to vector<64x8xf32>
    %143 = vector.extract_strided_slice %49 {offsets = [64, 80], sizes = [64, 8], strides = [1, 1]} : vector<128x96xf32> to vector<64x8xf32>
    "tpu.trace_start"() <{level = 10 : i32, message = "tk,sk->ts"}> : () -> ()
    %cst_57 = arith.constant dense<0.000000e+00> : vector<64x64xf32>
    %144 = tpu.matmul %141, %142, %cst_57 {dimension_numbers = #tpu.dot_dimension_numbers<[1], [1], [0], [0], [0, 0, 1, 0], [], []>} : vector<64x8xf32>, vector<64x8xf32>, vector<64x64xf32> -> vector<64x64xf32>
    "tpu.trace_stop"() : () -> ()
    %cst_58 = arith.constant dense<0xFF800000> : vector<64xf32>
    %145 = vector.multi_reduction <maximumf>, %144, %cst_58 [1] : vector<64x64xf32> to vector<64xf32>
    %146 = vector.shape_cast %145 : vector<64xf32> to vector<64x1xf32>
    %147 = vector.broadcast %146 : vector<64x1xf32> to vector<64x64xf32>
    %148 = arith.subf %144, %147 : vector<64x64xf32>
    %149 = math.exp %148 : vector<64x64xf32>
    %cst_59 = arith.constant dense<0.000000e+00> : vector<64xf32>
    %150 = vector.multi_reduction <add>, %149, %cst_59 [1] : vector<64x64xf32> to vector<64xf32>
    %151 = vector.shape_cast %150 : vector<64xf32> to vector<64x1xf32>
    %152 = tpu.reciprocal %151 {approx = true} : vector<64x1xf32> -> vector<64x1xf32>
    %153 = vector.broadcast %152 : vector<64x1xf32> to vector<64x64xf32>
    %154 = arith.mulf %149, %153 : vector<64x64xf32>
    %cst_60 = arith.constant dense<0.000000e+00> : vector<64x8xf32>
    %155 = tpu.matmul %154, %143, %cst_60 {dimension_numbers = #tpu.dot_dimension_numbers<[1], [0], [0], [1], [0, 0, 1, 1], [], []>} : vector<64x64xf32>, vector<64x8xf32>, vector<64x8xf32> -> vector<64x8xf32>
    %156 = vector.extract_strided_slice %49 {offsets = [64, 24], sizes = [64, 8], strides = [1, 1]} : vector<128x96xf32> to vector<64x8xf32>
    %157 = vector.extract_strided_slice %49 {offsets = [64, 56], sizes = [64, 8], strides = [1, 1]} : vector<128x96xf32> to vector<64x8xf32>
    %158 = vector.extract_strided_slice %49 {offsets = [64, 88], sizes = [64, 8], strides = [1, 1]} : vector<128x96xf32> to vector<64x8xf32>
    "tpu.trace_start"() <{level = 10 : i32, message = "tk,sk->ts"}> : () -> ()
    %cst_61 = arith.constant dense<0.000000e+00> : vector<64x64xf32>
    %159 = tpu.matmul %156, %157, %cst_61 {dimension_numbers = #tpu.dot_dimension_numbers<[1], [1], [0], [0], [0, 0, 1, 0], [], []>} : vector<64x8xf32>, vector<64x8xf32>, vector<64x64xf32> -> vector<64x64xf32>
    "tpu.trace_stop"() : () -> ()
    %cst_62 = arith.constant dense<0xFF800000> : vector<64xf32>
    %160 = vector.multi_reduction <maximumf>, %159, %cst_62 [1] : vector<64x64xf32> to vector<64xf32>
    %161 = vector.shape_cast %160 : vector<64xf32> to vector<64x1xf32>
    %162 = vector.broadcast %161 : vector<64x1xf32> to vector<64x64xf32>
    %163 = arith.subf %159, %162 : vector<64x64xf32>
    %164 = math.exp %163 : vector<64x64xf32>
    %cst_63 = arith.constant dense<0.000000e+00> : vector<64xf32>
    %165 = vector.multi_reduction <add>, %164, %cst_63 [1] : vector<64x64xf32> to vector<64xf32>
    %166 = vector.shape_cast %165 : vector<64xf32> to vector<64x1xf32>
    %167 = tpu.reciprocal %166 {approx = true} : vector<64x1xf32> -> vector<64x1xf32>
    %168 = vector.broadcast %167 : vector<64x1xf32> to vector<64x64xf32>
    %169 = arith.mulf %164, %168 : vector<64x64xf32>
    %cst_64 = arith.constant dense<0.000000e+00> : vector<64x8xf32>
    %170 = tpu.matmul %169, %158, %cst_64 {dimension_numbers = #tpu.dot_dimension_numbers<[1], [0], [0], [1], [0, 0, 1, 1], [], []>} : vector<64x64xf32>, vector<64x8xf32>, vector<64x8xf32> -> vector<64x8xf32>
    %171 = tpu.concatenate %125, %140, %155, %170 in 1 : vector<64x8xf32>, vector<64x8xf32>, vector<64x8xf32>, vector<64x8xf32> -> vector<64x32xf32>
    %172 = tpu.concatenate %110, %171 in 0 : vector<64x32xf32>, vector<64x32xf32> -> vector<128x32xf32>
    %cst_65 = arith.constant dense<0.000000e+00> : vector<128x32xf32>
    %173 = tpu.matmul %172, %7, %cst_65 {dimension_numbers = #tpu.dot_dimension_numbers<[1], [0], [0], [1], [0, 0, 1, 1], [], []>} : vector<128x32xf32>, vector<32x32xf32>, vector<128x32xf32> -> vector<128x32xf32>
    %174 = vector.broadcast %15 : vector<1x32xf32> to vector<128x32xf32>
    %175 = arith.addf %173, %174 : vector<128x32xf32>
    %176 = vector.extract_strided_slice %21 {offsets = [0, 2, 0], sizes = [2, 1, 32], strides = [1, 1, 1]} : vector<2x6x32xf32> to vector<2x1x32xf32>
    %177 = vector.shape_cast %175 : vector<128x32xf32> to vector<2x64x32xf32>
    %178 = vector.broadcast %176 : vector<2x1x32xf32> to vector<2x64x32xf32>
    %179 = arith.mulf %178, %177 : vector<2x64x32xf32>
    %180 = arith.addf %3, %179 : vector<2x64x32xf32>
    %cst_66 = arith.constant dense<0.000000e+00> : vector<2x64xf32>
    %181 = vector.multi_reduction <add>, %180, %cst_66 [2] : vector<2x64x32xf32> to vector<2x64xf32>
    %182 = vector.shape_cast %181 : vector<2x64xf32> to vector<2x64x1xf32>
    %cst_67 = arith.constant 3.200000e+01 : f32
    %183 = vector.broadcast %cst_67 : f32 to vector<2x64x1xf32>
    %184 = arith.divf %182, %183 : vector<2x64x1xf32>
    %185 = vector.broadcast %184 : vector<2x64x1xf32> to vector<2x64x32xf32>
    %186 = arith.subf %180, %185 : vector<2x64x32xf32>
    %187 = arith.mulf %186, %186 : vector<2x64x32xf32>
    %cst_68 = arith.constant dense<0.000000e+00> : vector<2x64xf32>
    %188 = vector.multi_reduction <add>, %187, %cst_68 [2] : vector<2x64x32xf32> to vector<2x64xf32>
    %189 = vector.shape_cast %188 : vector<2x64xf32> to vector<2x64x1xf32>
    %cst_69 = arith.constant 3.200000e+01 : f32
    %190 = vector.broadcast %cst_69 : f32 to vector<2x64x1xf32>
    %191 = arith.divf %189, %190 : vector<2x64x1xf32>
    %cst_70 = arith.constant 9.99999997E-7 : f32
    %192 = vector.broadcast %cst_70 : f32 to vector<2x64x1xf32>
    %193 = arith.addf %191, %192 : vector<2x64x1xf32>
    %194 = math.rsqrt %193 : vector<2x64x1xf32>
    %195 = vector.broadcast %194 : vector<2x64x1xf32> to vector<2x64x32xf32>
    %196 = arith.mulf %186, %195 : vector<2x64x32xf32>
    %197 = vector.extract_strided_slice %21 {offsets = [0, 4, 0], sizes = [2, 1, 32], strides = [1, 1, 1]} : vector<2x6x32xf32> to vector<2x1x32xf32>
    %cst_71 = arith.constant 1.000000e+00 : f32
    %198 = vector.broadcast %cst_71 : f32 to vector<2x1x32xf32>
    %199 = arith.addf %198, %197 : vector<2x1x32xf32>
    %200 = vector.broadcast %199 : vector<2x1x32xf32> to vector<2x64x32xf32>
    %201 = arith.mulf %196, %200 : vector<2x64x32xf32>
    %202 = vector.extract_strided_slice %21 {offsets = [0, 3, 0], sizes = [2, 1, 32], strides = [1, 1, 1]} : vector<2x6x32xf32> to vector<2x1x32xf32>
    %203 = vector.broadcast %202 : vector<2x1x32xf32> to vector<2x64x32xf32>
    %204 = arith.addf %201, %203 : vector<2x64x32xf32>
    %205 = vector.shape_cast %204 : vector<2x64x32xf32> to vector<128x32xf32>
    %cst_72 = arith.constant dense<0.000000e+00> : vector<128x128xf32>
    %206 = tpu.matmul %205, %9, %cst_72 {dimension_numbers = #tpu.dot_dimension_numbers<[1], [0], [0], [1], [0, 0, 1, 1], [], []>} : vector<128x32xf32>, vector<32x128xf32>, vector<128x128xf32> -> vector<128x128xf32>
    %207 = vector.broadcast %17 : vector<1x128xf32> to vector<128x128xf32>
    %208 = arith.addf %206, %207 : vector<128x128xf32>
    %cst_73 = arith.constant 5.000000e-01 : f32
    %209 = vector.broadcast %cst_73 : f32 to vector<128x128xf32>
    %210 = arith.mulf %209, %208 : vector<128x128xf32>
    %cst_74 = arith.constant 4.471500e-02 : f32
    %211 = vector.broadcast %cst_74 : f32 to vector<128x128xf32>
    %212 = arith.mulf %211, %208 : vector<128x128xf32>
    %213 = arith.mulf %212, %208 : vector<128x128xf32>
    %214 = arith.mulf %213, %208 : vector<128x128xf32>
    %215 = arith.addf %208, %214 : vector<128x128xf32>
    %cst_75 = arith.constant 0.797884583 : f32
    %216 = vector.broadcast %cst_75 : f32 to vector<128x128xf32>
    %217 = arith.mulf %216, %215 : vector<128x128xf32>
    %218 = math.tanh %217 : vector<128x128xf32>
    %cst_76 = arith.constant 1.000000e+00 : f32
    %219 = vector.broadcast %cst_76 : f32 to vector<128x128xf32>
    %220 = arith.addf %219, %218 : vector<128x128xf32>
    %221 = arith.mulf %210, %220 : vector<128x128xf32>
    "tpu.trace_start"() <{level = 10 : i32, message = "tm,dm->td"}> : () -> ()
    %cst_77 = arith.constant dense<0.000000e+00> : vector<128x32xf32>
    %222 = tpu.matmul %221, %11, %cst_77 {dimension_numbers = #tpu.dot_dimension_numbers<[1], [1], [0], [0], [0, 0, 1, 0], [], []>} : vector<128x128xf32>, vector<32x128xf32>, vector<128x32xf32> -> vector<128x32xf32>
    "tpu.trace_stop"() : () -> ()
    %223 = vector.broadcast %19 : vector<1x32xf32> to vector<128x32xf32>
    %224 = arith.addf %222, %223 : vector<128x32xf32>
    %225 = vector.extract_strided_slice %21 {offsets = [0, 5, 0], sizes = [2, 1, 32], strides = [1, 1, 1]} : vector<2x6x32xf32> to vector<2x1x32xf32>
    %226 = vector.shape_cast %224 : vector<128x32xf32> to vector<2x64x32xf32>
    %227 = vector.broadcast %225 : vector<2x1x32xf32> to vector<2x64x32xf32>
    %228 = arith.mulf %227, %226 : vector<2x64x32xf32>
    %229 = arith.addf %180, %228 : vector<2x64x32xf32>
    %c0_78 = arith.constant 0 : index
    %c0_79 = arith.constant 0 : index
    %c0_80 = arith.constant 0 : index
    %230 = vector.load %arg8[%c0_78, %c0_79, %c0_80] : memref<2x64x32xf32, #tpu.memory_space<vmem>>, vector<2x64x32xf32>
    tpu.vector_store %arg8[%c0_78, %c0_79, %c0_80], %229 {strides = array<i32>} : memref<2x64x32xf32, #tpu.memory_space<vmem>>, vector<2x64x32xf32>,
    %c1_i32 = arith.constant 1 : i32
    %231 = arith.cmpi eq, %arg0, %c1_i32 : i32
    %232 = arith.extui %231 : i1 to i32
    %c0_i32_81 = arith.constant 0 : i32
    %233 = arith.cmpi ne, %232, %c0_i32_81 : i32
    scf.if %233 {
      %c0_82 = arith.constant 0 : index
      %c0_83 = arith.constant 0 : index
      %c0_84 = arith.constant 0 : index
      %234 = vector.load %arg3[%c0_82, %c0_83, %c0_84] : memref<2x2x32xf32, #tpu.memory_space<vmem>>, vector<2x2x32xf32>
      %cst_85 = arith.constant dense<0.000000e+00> : vector<2x64xf32>
      %235 = vector.multi_reduction <add>, %229, %cst_85 [2] : vector<2x64x32xf32> to vector<2x64xf32>
      %236 = vector.shape_cast %235 : vector<2x64xf32> to vector<2x64x1xf32>
      %cst_86 = arith.constant 3.200000e+01 : f32
      %237 = vector.broadcast %cst_86 : f32 to vector<2x64x1xf32>
      %238 = arith.divf %236, %237 : vector<2x64x1xf32>
      %239 = vector.broadcast %238 : vector<2x64x1xf32> to vector<2x64x32xf32>
      %240 = arith.subf %229, %239 : vector<2x64x32xf32>
      %241 = arith.mulf %240, %240 : vector<2x64x32xf32>
      %cst_87 = arith.constant dense<0.000000e+00> : vector<2x64xf32>
      %242 = vector.multi_reduction <add>, %241, %cst_87 [2] : vector<2x64x32xf32> to vector<2x64xf32>
      %243 = vector.shape_cast %242 : vector<2x64xf32> to vector<2x64x1xf32>
      %cst_88 = arith.constant 3.200000e+01 : f32
      %244 = vector.broadcast %cst_88 : f32 to vector<2x64x1xf32>
      %245 = arith.divf %243, %244 : vector<2x64x1xf32>
      %cst_89 = arith.constant 9.99999997E-7 : f32
      %246 = vector.broadcast %cst_89 : f32 to vector<2x64x1xf32>
      %247 = arith.addf %245, %246 : vector<2x64x1xf32>
      %248 = math.rsqrt %247 : vector<2x64x1xf32>
      %249 = vector.broadcast %248 : vector<2x64x1xf32> to vector<2x64x32xf32>
      %250 = arith.mulf %240, %249 : vector<2x64x32xf32>
      %251 = vector.extract_strided_slice %234 {offsets = [0, 1, 0], sizes = [2, 1, 32], strides = [1, 1, 1]} : vector<2x2x32xf32> to vector<2x1x32xf32>
      %cst_90 = arith.constant 1.000000e+00 : f32
      %252 = vector.broadcast %cst_90 : f32 to vector<2x1x32xf32>
      %253 = arith.addf %252, %251 : vector<2x1x32xf32>
      %254 = vector.broadcast %253 : vector<2x1x32xf32> to vector<2x64x32xf32>
      %255 = arith.mulf %250, %254 : vector<2x64x32xf32>
      %256 = vector.extract_strided_slice %234 {offsets = [0, 0, 0], sizes = [2, 1, 32], strides = [1, 1, 1]} : vector<2x2x32xf32> to vector<2x1x32xf32>
      %257 = vector.broadcast %256 : vector<2x1x32xf32> to vector<2x64x32xf32>
      %258 = arith.addf %255, %257 : vector<2x64x32xf32>
      %259 = vector.shape_cast %258 : vector<2x64x32xf32> to vector<128x32xf32>
      %c0_91 = arith.constant 0 : index
      %c0_92 = arith.constant 0 : index
      %260 = vector.load %arg5[%c0_91, %c0_92] : memref<32x128xf32, #tpu.memory_space<vmem>>, vector<32x128xf32>
      %cst_93 = arith.constant dense<0.000000e+00> : vector<128x128xf32>
      %261 = tpu.matmul %259, %260, %cst_93 {dimension_numbers = #tpu.dot_dimension_numbers<[1], [0], [0], [1], [0, 0, 1, 1], [], []>} : vector<128x32xf32>, vector<32x128xf32>, vector<128x128xf32> -> vector<128x128xf32>
      %c0_94 = arith.constant 0 : index
      %c0_95 = arith.constant 0 : index
      %262 = vector.load %arg6[%c0_94, %c0_95] : memref<1x128xf32, #tpu.memory_space<vmem>>, vector<1x128xf32>
      %263 = vector.broadcast %262 : vector<1x128xf32> to vector<128x128xf32>
      %264 = arith.addf %261, %263 : vector<128x128xf32>
      %c0_96 = arith.constant 0 : index
      %c0_97 = arith.constant 0 : index
      %265 = vector.load %arg7[%c0_96, %c0_97] : memref<128x128xf32, #tpu.memory_space<vmem>>, vector<128x128xf32>
      tpu.vector_store %arg7[%c0_96, %c0_97], %264 {strides = array<i32>} : memref<128x128xf32, #tpu.memory_space<vmem>>, vector<128x128xf32>,
    } else {
    }
    return
  }
  func.func @transform_0(%arg0: i32) -> (i32, i32, i32) {
    %c0_i32 = arith.constant 0 : i32
    %c0_i32_0 = arith.constant 0 : i32
    %c0_i32_1 = arith.constant 0 : i32
    %c0_i32_2 = arith.constant 0 : i32
    return %c0_i32, %c0_i32_0, %c0_i32_1 : i32, i32, i32
  }
  func.func @transform_1(%arg0: i32) -> (i32, i32, i32, i32) {
    %c0_i32 = arith.constant 0 : i32
    %c0_i32_0 = arith.constant 0 : i32
    %c0_i32_1 = arith.constant 0 : i32
    %c0_i32_2 = arith.constant 0 : i32
    return %arg0, %c0_i32, %c0_i32_0, %c0_i32_1 : i32, i32, i32, i32
  }
  func.func @transform_2(%arg0: i32) -> (i32, i32, i32) {
    %c0_i32 = arith.constant 0 : i32
    %c0_i32_0 = arith.constant 0 : i32
    %c0_i32_1 = arith.constant 0 : i32
    %c0_i32_2 = arith.constant 0 : i32
    return %c0_i32, %c0_i32_0, %c0_i32_1 : i32, i32, i32
  }
  func.func @transform_3(%arg0: i32) -> (i32, i32, i32) {
    %c0_i32 = arith.constant 0 : i32
    %c0_i32_0 = arith.constant 0 : i32
    %c0_i32_1 = arith.constant 0 : i32
    return %arg0, %c0_i32, %c0_i32_0 : i32, i32, i32
  }
  func.func @transform_4(%arg0: i32) -> (i32, i32) {
    %c0_i32 = arith.constant 0 : i32
    %c0_i32_0 = arith.constant 0 : i32
    %c0_i32_1 = arith.constant 0 : i32
    return %c0_i32, %c0_i32_0 : i32, i32
  }
  func.func @transform_5(%arg0: i32) -> (i32, i32) {
    %c0_i32 = arith.constant 0 : i32
    %c0_i32_0 = arith.constant 0 : i32
    %c0_i32_1 = arith.constant 0 : i32
    return %c0_i32, %c0_i32_0 : i32, i32
  }
  func.func @transform_6(%arg0: i32) -> (i32, i32) {
    %c0_i32 = arith.constant 0 : i32
    %c0_i32_0 = arith.constant 0 : i32
    %c0_i32_1 = arith.constant 0 : i32
    return %c0_i32, %c0_i32_0 : i32, i32
  }
}

</mosaic_0001>

<llo_original>
// kernel: dit_forward.1
$region0: #{dit_forward.1}
  #allocation0 [shape = 'u32[]', space=smem, size = 0x4, offset = 0x4, fixed_abs, tag = 'smem constant byte address 0x4 - core index']
  #allocation1 [shape = 'u32[144,128]{1,0:T(1,128)}', space=vmem, size = 0x12000, scoped, tag = 'internal scratch']
  #allocation2 [shape = 'f32[2,64,32]{2,1,0:T(8,128)}', space=vmem, size = 0x10000, scoped, tag = 'scratch operand']
  %s0 = inlined_call_operand.vmem [shape: f32[2,64,32], index: 0, kind: input, shape index: {}]
  %s1 = inlined_call_operand.vmem [shape: f32[2,2,6,32], index: 1, kind: input, shape index: {}]
  %s2 = inlined_call_operand.vmem [shape: f32[2,2,32], index: 2, kind: input, shape index: {}]
  %s3 = inlined_call_operand.vmem [shape: f32[2,40,384], index: 3, kind: input, shape index: {}]
  %s4 = inlined_call_operand.vmem [shape: f32[32,128], index: 4, kind: input, shape index: {}]
  %s5 = inlined_call_operand.vmem [shape: f32[1,128], index: 5, kind: input, shape index: {}]
  %s6 = inlined_call_operand.vmem [shape: f32[128,128], index: 6, kind: output, shape index: {}]
  %s7 = sld [smem:[#allocation0]]
  $region65: #{dit_forward.1} parent=0
    _
  %s9 = ssub.s32 1, %s7
  %s10 = scalar_select 0, %s9, %s7
  loop: start=0, step=1, limit=4
  $region2: #{dit_forward.1} parent=0 // loop_pre_header
    _
  $region3: #{dit_forward.1} parent=0 // loop_header
    %s12 = sphi 0, %s16
    %p13 = scmp.ge.s32.totalorder %s12, 4
    %s20 = sphi 0, %s20
    %s22 = sphi 0, %s20
    %s23 = sphi 0, %s22
    %s37 = sphi 0, %s23
    %s43 = sphi 0, %s45
    %s46 = sphi 0, %s43
    %s47 = sphi 0, %s46
    %s63 = sphi 0, %s47
    %s67 = sphi 0, %s67
    %s69 = sphi 0, %s67
    %s70 = sphi 0, %s69
    %s84 = sphi 0, %s70
    %s90 = sphi 0, %s92
    %s93 = sphi 0, %s90
    %s94 = sphi 0, %s93
    %s110 = sphi 0, %s94
    %s114 = sphi 0, %s114
    %s116 = sphi 0, %s114
    %s117 = sphi 0, %s116
    %s131 = sphi 0, %s117
    %s135 = sphi 0, %s135
    %s137 = sphi 0, %s135
    %s138 = sphi 0, %s137
    %s152 = sphi 0, %s138
    %s156 = sphi 0, %s156
    %s158 = sphi 0, %s156
    %s159 = sphi 0, %s158
    %s173 = sphi 0, %s159
  $region4: #{dit_forward.1} parent=0 // loop_header_branch
    %15 = sbr.rel (%p13) target = $region8
  $region5: #{dit_forward.1} parent=0 // loop_body
    %s17 = ssub.s32 %s12, 1
    %s18 = ssub.s32 %s12, 2
    %s19 = sadd.s32 %s12, 1
    %s21 = sadd.s32 %s20, 1
    %p24 = scmp.eq.s32.totalorder %s12, 1
    %p25 = scmp.ne.s32.totalorder %s20, %s22
    %p26 = scmp.eq.s32.totalorder %s12, 0
    %p27 = por %p25, %p26
    %p28 = scmp.ne.s32.totalorder %s20, %s22
    %p29 = scmp.eq.s32.totalorder %s17, 1
    %p30 = por %p28, %p29
    %p31 = scmp.ne.s32.totalorder %s22, %s23
    %p32 = scmp.eq.s32.totalorder %s17, 0
    %p33 = por %p31, %p32
    %p34 = scmp.ne.s32.totalorder %s22, %s23
    %p35 = scmp.eq.s32.totalorder %s18, 1
    %p36 = por %p34, %p35
    %p38 = scmp.ne.s32.totalorder %s23, %s37
    %p39 = scmp.eq.s32.totalorder %s18, 0
    %p40 = por %p38, %p39
    %s41 = ssub.s32 %s12, %s19
    %p42 = scmp.eq.s32.totalorder %s41, 0
    %s44 = sadd.s32 %s43, 1
    %s45 = scalar_select %p42, %s43, %s44
    %p48 = pneg %p42
    %p49 = scmp.eq.s32.totalorder %s12, 1
    %p50 = por %p48, %p49
    %p51 = scmp.ne.s32.totalorder %s43, %s46
    %p52 = scmp.eq.s32.totalorder %s12, 0
    %p53 = por %p51, %p52
    %p54 = scmp.ne.s32.totalorder %s43, %s46
    %p55 = scmp.eq.s32.totalorder %s17, 1
    %p56 = por %p54, %p55
    %p57 = scmp.ne.s32.totalorder %s46, %s47
    %p58 = scmp.eq.s32.totalorder %s17, 0
    %p59 = por %p57, %p58
    %p60 = scmp.ne.s32.totalorder %s46, %s47
    %p61 = scmp.eq.s32.totalorder %s18, 1
    %p62 = por %p60, %p61
    %p64 = scmp.ne.s32.totalorder %s47, %s63
    %p65 = scmp.eq.s32.totalorder %s18, 0
    %p66 = por %p64, %p65
    %s68 = sadd.s32 %s67, 1
    %p71 = scmp.eq.s32.totalorder %s12, 1
    %p72 = scmp.ne.s32.totalorder %s67, %s69
    %p73 = scmp.eq.s32.totalorder %s12, 0
    %p74 = por %p72, %p73
    %p75 = scmp.ne.s32.totalorder %s67, %s69
    %p76 = scmp.eq.s32.totalorder %s17, 1
    %p77 = por %p75, %p76
    %p78 = scmp.ne.s32.totalorder %s69, %s70
    %p79 = scmp.eq.s32.totalorder %s17, 0
    %p80 = por %p78, %p79
    %p81 = scmp.ne.s32.totalorder %s69, %s70
    %p82 = scmp.eq.s32.totalorder %s18, 1
    %p83 = por %p81, %p82
    %p85 = scmp.ne.s32.totalorder %s70, %s84
    %p86 = scmp.eq.s32.totalorder %s18, 0
    %p87 = por %p85, %p86
    %s88 = ssub.s32 %s12, %s19
    %p89 = scmp.eq.s32.totalorder %s88, 0
    %s91 = sadd.s32 %s90, 1
    %s92 = scalar_select %p89, %s90, %s91
    %p95 = pneg %p89
    %p96 = scmp.eq.s32.totalorder %s12, 1
    %p97 = por %p95, %p96
    %p98 = scmp.ne.s32.totalorder %s90, %s93
    %p99 = scmp.eq.s32.totalorder %s12, 0
    %p100 = por %p98, %p99
    %p101 = scmp.ne.s32.totalorder %s90, %s93
    %p102 = scmp.eq.s32.totalorder %s17, 1
    %p103 = por %p101, %p102
    %p104 = scmp.ne.s32.totalorder %s93, %s94
    %p105 = scmp.eq.s32.totalorder %s17, 0
    %p106 = por %p104, %p105
    %p107 = scmp.ne.s32.totalorder %s93, %s94
    %p108 = scmp.eq.s32.totalorder %s18, 1
    %p109 = por %p107, %p108
    %p111 = scmp.ne.s32.totalorder %s94, %s110
    %p112 = scmp.eq.s32.totalorder %s18, 0
    %p113 = por %p111, %p112
    %s115 = sadd.s32 %s114, 1
    %p118 = scmp.eq.s32.totalorder %s12, 1
    %p119 = scmp.ne.s32.totalorder %s114, %s116
    %p120 = scmp.eq.s32.totalorder %s12, 0
    %p121 = por %p119, %p120
    %p122 = scmp.ne.s32.totalorder %s114, %s116
    %p123 = scmp.eq.s32.totalorder %s17, 1
    %p124 = por %p122, %p123
    %p125 = scmp.ne.s32.totalorder %s116, %s117
    %p126 = scmp.eq.s32.totalorder %s17, 0
    %p127 = por %p125, %p126
    %p128 = scmp.ne.s32.totalorder %s116, %s117
    %p129 = scmp.eq.s32.totalorder %s18, 1
    %p130 = por %p128, %p129
    %p132 = scmp.ne.s32.totalorder %s117, %s131
    %p133 = scmp.eq.s32.totalorder %s18, 0
    %p134 = por %p132, %p133
    %s136 = sadd.s32 %s135, 1
    %p139 = scmp.eq.s32.totalorder %s12, 1
    %p140 = scmp.ne.s32.totalorder %s135, %s137
    %p141 = scmp.eq.s32.totalorder %s12, 0
    %p142 = por %p140, %p141
    %p143 = scmp.ne.s32.totalorder %s135, %s137
    %p144 = scmp.eq.s32.totalorder %s17, 1
    %p145 = por %p143, %p144
    %p146 = scmp.ne.s32.totalorder %s137, %s138
    %p147 = scmp.eq.s32.totalorder %s17, 0
    %p148 = por %p146, %p147
    %p149 = scmp.ne.s32.totalorder %s137, %s138
    %p150 = scmp.eq.s32.totalorder %s18, 1
    %p151 = por %p149, %p150
    %p153 = scmp.ne.s32.totalorder %s138, %s152
    %p154 = scmp.eq.s32.totalorder %s18, 0
    %p155 = por %p153, %p154
    %s157 = sadd.s32 %s156, 1
    %p160 = scmp.eq.s32.totalorder %s12, 1
    %p161 = scmp.ne.s32.totalorder %s156, %s158
    %p162 = scmp.eq.s32.totalorder %s12, 0
    %p163 = por %p161, %p162
    %p164 = scmp.ne.s32.totalorder %s156, %s158
    %p165 = scmp.eq.s32.totalorder %s17, 1
    %p166 = por %p164, %p165
    %p167 = scmp.ne.s32.totalorder %s158, %s159
    %p168 = scmp.eq.s32.totalorder %s17, 0
    %p169 = por %p167, %p168
    %p170 = scmp.ne.s32.totalorder %s158, %s159
    %p171 = scmp.eq.s32.totalorder %s18, 1
    %p172 = por %p170, %p171
    %p174 = scmp.ne.s32.totalorder %s159, %s173
    %p175 = scmp.eq.s32.totalorder %s18, 0
    %p176 = por %p174, %p175
    %p177 = scmp.le.s32.totalorder 1, %s12
    %p178 = scmp.lt.s32.totalorder %s12, 3
    %p179 = pnand %p177, %p178
    %p180 = pneg %p179
    // Predicated region
    $region9: #{dit_forward.1} parent=5 // pred_check
      _
    $region10: #{dit_forward.1} parent=5 // pred_check_branch
      %182 = sbr.rel (%p179) target = $region12
    $region11: #{dit_forward.1} parent=5 // pred_region
      %s183 = ssub.s32 %s12, 1
      // Predicated region
      $region13: #{dit_forward.1} parent=11 // pred_check
        %p184 = pneg %p33
      $region14: #{dit_forward.1} parent=11 // pred_check_branch
        %186 = sbr.rel (%p184) target = $region16
      $region15: #{dit_forward.1} parent=11 // pred_region
        _
      $region16: #{dit_forward.1} parent=11 // pred_fallthru
        _
      // Predicated region
      $region17: #{dit_forward.1} parent=11 // pred_check
        %p187 = pneg %p80
      $region18: #{dit_forward.1} parent=11 // pred_check_branch
        %189 = sbr.rel (%p187) target = $region20
      $region19: #{dit_forward.1} parent=11 // pred_region
        _
      $region20: #{dit_forward.1} parent=11 // pred_fallthru
        _
      // Predicated region
      $region21: #{dit_forward.1} parent=11 // pred_check
        %p190 = pneg %p127
      $region22: #{dit_forward.1} parent=11 // pred_check_branch
        %192 = sbr.rel (%p190) target = $region24
      $region23: #{dit_forward.1} parent=11 // pred_region
        _
      $region24: #{dit_forward.1} parent=11 // pred_fallthru
        _
      // Predicated region
      $region25: #{dit_forward.1} parent=11 // pred_check
        %p193 = pneg %p148
      $region26: #{dit_forward.1} parent=11 // pred_check_branch
        %195 = sbr.rel (%p193) target = $region28
      $region27: #{dit_forward.1} parent=11 // pred_region
        _
      $region28: #{dit_forward.1} parent=11 // pred_fallthru
        _
    $region12: #{dit_forward.1} parent=5 // pred_fallthru
      _
    %p196 = scmp.lt.s32.totalorder %s12, 2
    // Predicated region
    $region29: #{dit_forward.1} parent=5 // pred_check
      %p197 = pneg %p196
    $region30: #{dit_forward.1} parent=5 // pred_check_branch
      %199 = sbr.rel (%p197) target = $region32
    $region31: #{dit_forward.1} parent=5 // pred_region
      // Predicated region
      $region33: #{dit_forward.1} parent=31 // pred_check
        %p200 = pneg %p53
      $region34: #{dit_forward.1} parent=31 // pred_check_branch
        %202 = sbr.rel (%p200) target = $region36
      $region35: #{dit_forward.1} parent=31 // pred_region
        %p203 = scmp.lt.s32.totalorder %s12, 1
        %s204 = scalar_select %p203, %s12, 1
        %s205 = smul.addr %s204, 2
        %s206 = smul.addr %s205, 8
        %s207 = scalar_lea.vmem %s1, %s206
      $region36: #{dit_forward.1} parent=31 // pred_fallthru
        _
      // Predicated region
      $region37: #{dit_forward.1} parent=31 // pred_check
        %p208 = pneg %p100
      $region38: #{dit_forward.1} parent=31 // pred_check_branch
        %210 = sbr.rel (%p208) target = $region40
      $region39: #{dit_forward.1} parent=31 // pred_region
        %p211 = scmp.lt.s32.totalorder %s12, 1
        %s212 = scalar_select %p211, %s12, 1
        %s213 = smul.addr %s212, 15
        %s214 = smul.addr %s213, 8
        %s215 = scalar_lea.vmem %s3, %s214
      $region40: #{dit_forward.1} parent=31 // pred_fallthru
        _
    $region32: #{dit_forward.1} parent=5 // pred_fallthru
      _
    %p216 = scmp.le.s32.totalorder 1, %s12
    %p217 = scmp.lt.s32.totalorder %s12, 3
    %p218 = pnand %p216, %p217
    %p219 = pneg %p218
    // Predicated region
    $region41: #{dit_forward.1} parent=5 // pred_check
      _
    $region42: #{dit_forward.1} parent=5 // pred_check_branch
      %221 = sbr.rel (%p218) target = $region44
    $region43: #{dit_forward.1} parent=5 // pred_region
      %s222 = ssub.s32 %s12, 1
      %p223 = pneg %p33
      %p224 = pneg %p30
      %p225 = scmp.lt.s32.totalorder %s17, 1
      %s226 = scalar_select %p225, %s17, 1
      %s227 = smul.addr %s226, 2
      %s228 = smul.addr %s227, 8
      %s229 = scalar_lea.vmem %s1, %s228
      %p230 = pneg %p59
      %p231 = pneg %p56
      %p232 = pneg %p80
      %p233 = pneg %p77
      %p234 = scmp.lt.s32.totalorder %s17, 1
      %s235 = scalar_select %p234, %s17, 1
      %s236 = smul.addr %s235, 15
      %s237 = smul.addr %s236, 8
      %s238 = scalar_lea.vmem %s3, %s237
      %p239 = pneg %p106
      %p240 = pneg %p103
      %p241 = pneg %p127
      %p242 = pneg %p124
      %p243 = pneg %p148
      %p244 = pneg %p145
      %p245 = pneg %p169
      %p246 = pneg %p166
      %p247 = scmp.lt.s32.totalorder %s17, 1
      %s248 = scalar_select %p247, %s17, 1
      %s249 = smul.addr %s248, 2
      %s250 = smul.addr %s249, 8
      %s251 = scalar_lea.vmem %s1, %s250
      %p252 = scmp.lt.s32.totalorder %s17, 1
      %s253 = scalar_select %p252, %s17, 1
      %s254 = smul.addr %s253, 15
      %s255 = smul.addr %s254, 8
      %s256 = scalar_lea.vmem %s3, %s255
      %p257 = scmp.eq.s32.totalorder %s17, 0
      // Predicated region
      $region45: #{dit_forward.1} parent=43 // pred_check
        %p258 = pneg %p257
      $region46: #{dit_forward.1} parent=43 // pred_check_branch
        %260 = sbr.rel (%p258) target = $region48
      $region47: #{dit_forward.1} parent=43 // pred_region
        %v261 = vld [vmem:[%s0] sm:$0xff]
        %v262 = vld [vmem:[%s0 + $0x8] sm:$0xff]
        %v263 = vld [vmem:[%s0 + $0x10] sm:$0xff]
        %v264 = vld [vmem:[%s0 + $0x18] sm:$0xff]
        %v265 = vld [vmem:[%s0 + $0x20] sm:$0xff]
        %v266 = vld [vmem:[%s0 + $0x28] sm:$0xff]
        %v267 = vld [vmem:[%s0 + $0x30] sm:$0xff]
        %v268 = vld [vmem:[%s0 + $0x38] sm:$0xff]
        %v269 = vld [vmem:[%s0 + $0x40] sm:$0xff]
        %v270 = vld [vmem:[%s0 + $0x48] sm:$0xff]
        %v271 = vld [vmem:[%s0 + $0x50] sm:$0xff]
        %v272 = vld [vmem:[%s0 + $0x58] sm:$0xff]
        %v273 = vld [vmem:[%s0 + $0x60] sm:$0xff]
        %v274 = vld [vmem:[%s0 + $0x68] sm:$0xff]
        %v275 = vld [vmem:[%s0 + $0x70] sm:$0xff]
        %v276 = vld [vmem:[%s0 + $0x78] sm:$0xff]
        %vm277 = vcmask 261120
        %278 = vst.msk [vmem:[#allocation2] sm:$0xff] %vm277, %v261
        %279 = vst.msk [vmem:[#allocation2 + $0x8] sm:$0xff] %vm277, %v262
        %280 = vst.msk [vmem:[#allocation2 + $0x10] sm:$0xff] %vm277, %v263
        %281 = vst.msk [vmem:[#allocation2 + $0x18] sm:$0xff] %vm277, %v264
        %282 = vst.msk [vmem:[#allocation2 + $0x20] sm:$0xff] %vm277, %v265
        %283 = vst.msk [vmem:[#allocation2 + $0x28] sm:$0xff] %vm277, %v266
        %284 = vst.msk [vmem:[#allocation2 + $0x30] sm:$0xff] %vm277, %v267
        %285 = vst.msk [vmem:[#allocation2 + $0x38] sm:$0xff] %vm277, %v268
        %286 = vst.msk [vmem:[#allocation2 + $0x40] sm:$0xff] %vm277, %v269
        %287 = vst.msk [vmem:[#allocation2 + $0x48] sm:$0xff] %vm277, %v270
        %288 = vst.msk [vmem:[#allocation2 + $0x50] sm:$0xff] %vm277, %v271
        %289 = vst.msk [vmem:[#allocation2 + $0x58] sm:$0xff] %vm277, %v272
        %290 = vst.msk [vmem:[#allocation2 + $0x60] sm:$0xff] %vm277, %v273
        %291 = vst.msk [vmem:[#allocation2 + $0x68] sm:$0xff] %vm277, %v274
        %292 = vst.msk [vmem:[#allocation2 + $0x70] sm:$0xff] %vm277, %v275
        %293 = vst.msk [vmem:[#allocation2 + $0x78] sm:$0xff] %vm277, %v276
      $region48: #{dit_forward.1} parent=43 // pred_fallthru
        _
      %v294 = vld [vmem:[#allocation2] sm:$0xff]
      %v295 = vld [vmem:[#allocation2 + $0x8] sm:$0xff]
      %v296 = vld [vmem:[#allocation2 + $0x10] sm:$0xff]
      %v297 = vld [vmem:[#allocation2 + $0x18] sm:$0xff]
      %v298 = vld [vmem:[#allocation2 + $0x20] sm:$0xff]
      %v299 = vld [vmem:[#allocation2 + $0x28] sm:$0xff]
      %v300 = vld [vmem:[#allocation2 + $0x30] sm:$0xff]
      %v301 = vld [vmem:[#allocation2 + $0x38] sm:$0xff]
      %v302 = vld [vmem:[#allocation2 + $0x40] sm:$0xff]
      %v303 = vld [vmem:[#allocation2 + $0x48] sm:$0xff]
      %v304 = vld [vmem:[#allocation2 + $0x50] sm:$0xff]
      %v305 = vld [vmem:[#allocation2 + $0x58] sm:$0xff]
      %v306 = vld [vmem:[#allocation2 + $0x60] sm:$0xff]
      %v307 = vld [vmem:[#allocation2 + $0x68] sm:$0xff]
      %v308 = vld [vmem:[#allocation2 + $0x70] sm:$0xff]
      %v309 = vld [vmem:[#allocation2 + $0x78] sm:$0xff]
      %v310 = vld [vmem:[%s256] sm:$0xff]
      %v311 = vld [vmem:[%s256 + $0x18] sm:$0xff]
      %v312 = vld [vmem:[%s256 + $0x30] sm:$0xff]
      %v313 = vld [vmem:[%s256 + $0x48] sm:$0xff]
      %v314 = vld [vmem:[%s256 + $0x8] sm:$0xff]
      %v315 = vld [vmem:[%s256 + $0x20] sm:$0xff]
      %v316 = vld [vmem:[%s256 + $0x38] sm:$0xff]
      %v317 = vld [vmem:[%s256 + $0x50] sm:$0xff]
      %v318 = vld [vmem:[%s256 + $0x10] sm:$0xff]
      %v319 = vld [vmem:[%s256 + $0x28] sm:$0xff]
      %v320 = vld [vmem:[%s256 + $0x40] sm:$0xff]
      %v321 = vld [vmem:[%s256 + $0x58] sm:$0xff]
      %v322 = vld [vmem:[%s256 + $0x60] ss:$0 sm:$0xff]
      %v323 = vld [vmem:[%s256 + $0x68] ss:$0 sm:$0xff]
      %v324 = vld [vmem:[%s256 + $0x70] ss:$0 sm:$0xff]
      %v325 = vld [vmem:[%s251] sm:$0x3f]
      %v326 = vld [vmem:[%s251 + $0x8] sm:$0x3f]
      %vm327 = vcmask 261120
      %v328 = vsel %vm327, %v294, 0.0
      %329 = vadd.xlane.f32.xlu0 %v328
      %v330 = vpop.xlane.xlu0 %329
      %v331 = vsel %vm327, %v295, 0.0
      %332 = vadd.xlane.f32.xlu0 %v331
      %v333 = vpop.xlane.xlu0 %332
      %v334 = vsel %vm327, %v296, 0.0
      %335 = vadd.xlane.f32.xlu0 %v334
      %v336 = vpop.xlane.xlu0 %335
      %v337 = vsel %vm327, %v297, 0.0
      %338 = vadd.xlane.f32.xlu0 %v337
      %v339 = vpop.xlane.xlu0 %338
      %v340 = vsel %vm327, %v298, 0.0
      %341 = vadd.xlane.f32.xlu0 %v340
      %v342 = vpop.xlane.xlu0 %341
      %v343 = vsel %vm327, %v299, 0.0
      %344 = vadd.xlane.f32.xlu0 %v343
      %v345 = vpop.xlane.xlu0 %344
      %v346 = vsel %vm327, %v300, 0.0
      %347 = vadd.xlane.f32.xlu0 %v346
      %v348 = vpop.xlane.xlu0 %347
      %v349 = vsel %vm327, %v301, 0.0
      %350 = vadd.xlane.f32.xlu0 %v349
      %v351 = vpop.xlane.xlu0 %350
      %v352 = vsel %vm327, %v302, 0.0
      %353 = vadd.xlane.f32.xlu0 %v352
      %v354 = vpop.xlane.xlu0 %353
      %v355 = vsel %vm327, %v303, 0.0
      %356 = vadd.xlane.f32.xlu0 %v355
      %v357 = vpop.xlane.xlu0 %356
      %v358 = vsel %vm327, %v304, 0.0
      %359 = vadd.xlane.f32.xlu0 %v358
      %v360 = vpop.xlane.xlu0 %359
      %v361 = vsel %vm327, %v305, 0.0
      %362 = vadd.xlane.f32.xlu0 %v361
      %v363 = vpop.xlane.xlu0 %362
      %v364 = vsel %vm327, %v306, 0.0
      %365 = vadd.xlane.f32.xlu0 %v364
      %v366 = vpop.xlane.xlu0 %365
      %v367 = vsel %vm327, %v307, 0.0
      %368 = vadd.xlane.f32.xlu0 %v367
      %v369 = vpop.xlane.xlu0 %368
      %v370 = vsel %vm327, %v308, 0.0
      %371 = vadd.xlane.f32.xlu0 %v370
      %v372 = vpop.xlane.xlu0 %371
      %v373 = vsel %vm327, %v309, 0.0
      %374 = vadd.xlane.f32.xlu0 %v373
      %v375 = vpop.xlane.xlu0 %374
      %v376 = vrcp.pop 32.0
      %v377 = vmul.f32 %v330, %v376
      %v378 = vmul.f32 %v333, %v376
      %v379 = vmul.f32 %v336, %v376
      %v380 = vmul.f32 %v339, %v376
      %v381 = vmul.f32 %v342, %v376
      %v382 = vmul.f32 %v345, %v376
      %v383 = vmul.f32 %v348, %v376
      %v384 = vmul.f32 %v351, %v376
      %v385 = vmul.f32 %v354, %v376
      %v386 = vmul.f32 %v357, %v376
      %v387 = vmul.f32 %v360, %v376
      %v388 = vmul.f32 %v363, %v376
      %v389 = vmul.f32 %v366, %v376
      %v390 = vmul.f32 %v369, %v376
      %v391 = vmul.f32 %v372, %v376
      %v392 = vmul.f32 %v375, %v376
      %v393 = vsub.f32 %v294, %v377
      %v394 = vsub.f32 %v295, %v378
      %v395 = vsub.f32 %v296, %v379
      %v396 = vsub.f32 %v297, %v380
      %v397 = vsub.f32 %v298, %v381
      %v398 = vsub.f32 %v299, %v382
      %v399 = vsub.f32 %v300, %v383
      %v400 = vsub.f32 %v301, %v384
      %v401 = vsub.f32 %v302, %v385
      %v402 = vsub.f32 %v303, %v386
      %v403 = vsub.f32 %v304, %v387
      %v404 = vsub.f32 %v305, %v388
      %v405 = vsub.f32 %v306, %v389
      %v406 = vsub.f32 %v307, %v390
      %v407 = vsub.f32 %v308, %v391
      %v408 = vsub.f32 %v309, %v392
      %v409 = vmul.f32 %v393, %v393
      %v410 = vmul.f32 %v394, %v394
      %v411 = vmul.f32 %v395, %v395
      %v412 = vmul.f32 %v396, %v396
      %v413 = vmul.f32 %v397, %v397
      %v414 = vmul.f32 %v398, %v398
      %v415 = vmul.f32 %v399, %v399
      %v416 = vmul.f32 %v400, %v400
      %v417 = vmul.f32 %v401, %v401
      %v418 = vmul.f32 %v402, %v402
      %v419 = vmul.f32 %v403, %v403
      %v420 = vmul.f32 %v404, %v404
      %v421 = vmul.f32 %v405, %v405
      %v422 = vmul.f32 %v406, %v406
      %v423 = vmul.f32 %v407, %v407
      %v424 = vmul.f32 %v408, %v408
      %v425 = vsel %vm327, %v409, 0.0
      %426 = vadd.xlane.f32.xlu0 %v425
      %v427 = vpop.xlane.xlu0 %426
      %v428 = vsel %vm327, %v410, 0.0
      %429 = vadd.xlane.f32.xlu0 %v428
      %v430 = vpop.xlane.xlu0 %429
      %v431 = vsel %vm327, %v411, 0.0
      %432 = vadd.xlane.f32.xlu0 %v431
      %v433 = vpop.xlane.xlu0 %432
      %v434 = vsel %vm327, %v412, 0.0
      %435 = vadd.xlane.f32.xlu0 %v434
      %v436 = vpop.xlane.xlu0 %435
      %v437 = vsel %vm327, %v413, 0.0
      %438 = vadd.xlane.f32.xlu0 %v437
      %v439 = vpop.xlane.xlu0 %438
      %v440 = vsel %vm327, %v414, 0.0
      %441 = vadd.xlane.f32.xlu0 %v440
      %v442 = vpop.xlane.xlu0 %441
      %v443 = vsel %vm327, %v415, 0.0
      %444 = vadd.xlane.f32.xlu0 %v443
      %v445 = vpop.xlane.xlu0 %444
      %v446 = vsel %vm327, %v416, 0.0
      %447 = vadd.xlane.f32.xlu0 %v446
      %v448 = vpop.xlane.xlu0 %447
      %v449 = vsel %vm327, %v417, 0.0
      %450 = vadd.xlane.f32.xlu0 %v449
      %v451 = vpop.xlane.xlu0 %450
      %v452 = vsel %vm327, %v418, 0.0
      %453 = vadd.xlane.f32.xlu0 %v452
      %v454 = vpop.xlane.xlu0 %453
      %v455 = vsel %vm327, %v419, 0.0
      %456 = vadd.xlane.f32.xlu0 %v455
      %v457 = vpop.xlane.xlu0 %456
      %v458 = vsel %vm327, %v420, 0.0
      %459 = vadd.xlane.f32.xlu0 %v458
      %v460 = vpop.xlane.xlu0 %459
      %v461 = vsel %vm327, %v421, 0.0
      %462 = vadd.xlane.f32.xlu0 %v461
      %v463 = vpop.xlane.xlu0 %462
      %v464 = vsel %vm327, %v422, 0.0
      %465 = vadd.xlane.f32.xlu0 %v464
      %v466 = vpop.xlane.xlu0 %465
      %v467 = vsel %vm327, %v423, 0.0
      %468 = vadd.xlane.f32.xlu0 %v467
      %v469 = vpop.xlane.xlu0 %468
      %v470 = vsel %vm327, %v424, 0.0
      %471 = vadd.xlane.f32.xlu0 %v470
      %v472 = vpop.xlane.xlu0 %471
      %v473 = vmul.f32 %v427, %v376
      %v474 = vmul.f32 %v430, %v376
      %v475 = vmul.f32 %v433, %v376
      %v476 = vmul.f32 %v436, %v376
      %v477 = vmul.f32 %v439, %v376
      %v478 = vmul.f32 %v442, %v376
      %v479 = vmul.f32 %v445, %v376
      %v480 = vmul.f32 %v448, %v376
      %v481 = vmul.f32 %v451, %v376
      %v482 = vmul.f32 %v454, %v376
      %v483 = vmul.f32 %v457, %v376
      %v484 = vmul.f32 %v460, %v376
      %v485 = vmul.f32 %v463, %v376
      %v486 = vmul.f32 %v466, %v376
      %v487 = vmul.f32 %v469, %v376
      %v488 = vmul.f32 %v472, %v376
      %v489 = vadd.f32 %v473, 1e-06
      %v490 = vadd.f32 %v474, 1e-06
      %v491 = vadd.f32 %v475, 1e-06
      %v492 = vadd.f32 %v476, 1e-06
      %v493 = vadd.f32 %v477, 1e-06
      %v494 = vadd.f32 %v478, 1e-06
      %v495 = vadd.f32 %v479, 1e-06
      %v496 = vadd.f32 %v480, 1e-06
      %v497 = vadd.f32 %v481, 1e-06
      %v498 = vadd.f32 %v482, 1e-06
      %v499 = vadd.f32 %v483, 1e-06
      %v500 = vadd.f32 %v484, 1e-06
      %v501 = vadd.f32 %v485, 1e-06
      %v502 = vadd.f32 %v486, 1e-06
      %v503 = vadd.f32 %v487, 1e-06
      %v504 = vadd.f32 %v488, 1e-06
      %v505 = vrsqrt.pop %v489
      %v506 = vrsqrt.pop %v490
      %v507 = vrsqrt.pop %v491
      %v508 = vrsqrt.pop %v492
      %v509 = vrsqrt.pop %v493
      %v510 = vrsqrt.pop %v494
      %v511 = vrsqrt.pop %v495
      %v512 = vrsqrt.pop %v496
      %v513 = vrsqrt.pop %v497
      %v514 = vrsqrt.pop %v498
      %v515 = vrsqrt.pop %v499
      %v516 = vrsqrt.pop %v500
      %v517 = vrsqrt.pop %v501
      %v518 = vrsqrt.pop %v502
      %v519 = vrsqrt.pop %v503
      %v520 = vrsqrt.pop %v504
      %v521 = vmul.f32 %v393, %v505
      %v522 = vmul.f32 %v394, %v506
      %v523 = vmul.f32 %v395, %v507
      %v524 = vmul.f32 %v396, %v508
      %v525 = vmul.f32 %v397, %v509
      %v526 = vmul.f32 %v398, %v510
      %v527 = vmul.f32 %v399, %v511
      %v528 = vmul.f32 %v400, %v512
      %v529 = vmul.f32 %v401, %v513
      %v530 = vmul.f32 %v402, %v514
      %v531 = vmul.f32 %v403, %v515
      %v532 = vmul.f32 %v404, %v516
      %v533 = vmul.f32 %v405, %v517
      %v534 = vmul.f32 %v406, %v518
      %v535 = vmul.f32 %v407, %v519
      %v536 = vmul.f32 %v408, %v520
      %v537 = vadd.f32 %v325, 1.0
      %v538 = vadd.f32 %v326, 1.0
      %v539 = vlaneseq
      %v540 = vshrl.u32 %v539, 7
      %v541 = vsub.s32 1, %v540
      %v542 = vrot.slane %v537, %v541
      %v543 = vlaneseq
      %v544 = vshrl.u32 %v543, 7
      %v545 = vsub.s32 1, %v544
      %v546 = vrot.slane %v538, %v545
      %v547 = vmul.f32 %v521, %v542
      %v548 = vmul.f32 %v522, %v542
      %v549 = vmul.f32 %v523, %v542
      %v550 = vmul.f32 %v524, %v542
      %v551 = vmul.f32 %v525, %v542
      %v552 = vmul.f32 %v526, %v542
      %v553 = vmul.f32 %v527, %v542
      %v554 = vmul.f32 %v528, %v542
      %v555 = vmul.f32 %v529, %v546
      %v556 = vmul.f32 %v530, %v546
      %v557 = vmul.f32 %v531, %v546
      %v558 = vmul.f32 %v532, %v546
      %v559 = vmul.f32 %v533, %v546
      %v560 = vmul.f32 %v534, %v546
      %v561 = vmul.f32 %v535, %v546
      %v562 = vmul.f32 %v536, %v546
      %v563 = vlaneseq
      %v564 = vshrl.u32 %v563, 7
      %v565 = vsub.s32 0, %v564
      %v566 = vrot.slane %v325, %v565
      %v567 = vlaneseq
      %v568 = vshrl.u32 %v567, 7
      %v569 = vsub.s32 0, %v568
      %v570 = vrot.slane %v326, %v569
      %v571 = vadd.f32 %v547, %v566
      %v572 = vadd.f32 %v548, %v566
      %v573 = vadd.f32 %v549, %v566
      %v574 = vadd.f32 %v550, %v566
      %v575 = vadd.f32 %v551, %v566
      %v576 = vadd.f32 %v552, %v566
      %v577 = vadd.f32 %v553, %v566
      %v578 = vadd.f32 %v554, %v566
      %v579 = vadd.f32 %v555, %v570
      %v580 = vadd.f32 %v556, %v570
      %v581 = vadd.f32 %v557, %v570
      %v582 = vadd.f32 %v558, %v570
      %v583 = vadd.f32 %v559, %v570
      %v584 = vadd.f32 %v560, %v570
      %v585 = vadd.f32 %v561, %v570
      %v586 = vadd.f32 %v562, %v570
      %v588 = vsel %vm327, %v571, 0
      %v591 = vsel %vm327, %v572, 0
      %v594 = vsel %vm327, %v573, 0
      %v597 = vsel %vm327, %v574, 0
      %v600 = vsel %vm327, %v575, 0
      %v603 = vsel %vm327, %v576, 0
      %v606 = vsel %vm327, %v577, 0
      %v609 = vsel %vm327, %v578, 0
      %v612 = vsel %vm327, %v579, 0
      %v615 = vsel %vm327, %v580, 0
      %v618 = vsel %vm327, %v581, 0
      %v621 = vsel %vm327, %v582, 0
      %v624 = vsel %vm327, %v583, 0
      %v627 = vsel %vm327, %v584, 0
      %v630 = vsel %vm327, %v585, 0
      %v633 = vsel %vm327, %v586, 0
      %635 = vmatprep.subr.mxu0 0.0
      %636 = vmatpush1.msra.mxu0 %v310
      %637 = vmatprep.subr.mxu0 0.0
      %638 = vmatpush1.msra.mxu0 %v311
      %639 = vmatprep.subr.mxu0 0.0
      %640 = vmatpush1.msra.mxu0 %v312
      %641 = vmatprep.subr.mxu0 0.0
      %642 = vmatpush1.msra.mxu0 %v313
      %643 = vmatprep.subr.mxu0 0.0
      %644 = vmatpush1.msra.mxu0 0.0
      %645 = vmatprep.subr.mxu0 0.0
      %646 = vmatpush1.msra.mxu0 0.0
      %647 = vmatprep.subr.mxu0 0.0
      %648 = vmatpush1.msra.mxu0 0.0
      %649 = vmatprep.subr.mxu0 0.0
      %650 = vmatpush1.msra.mxu0 0.0
      %651 = vmatprep.subr.mxu0 0.0
      %652 = vmatpush1.msra.mxu0 0.0
      %653 = vmatprep.subr.mxu0 0.0
      %654 = vmatpush1.msra.mxu0 0.0
      %655 = vmatprep.subr.mxu0 0.0
      %656 = vmatpush1.msra.mxu0 0.0
      %657 = vmatprep.subr.mxu0 0.0
      %658 = vmatpush1.msra.mxu0 0.0
      %659 = vmatprep.subr.mxu0 0.0
      %660 = vmatpush1.msra.mxu0 0.0
      %661 = vmatprep.subr.mxu0 0.0
      %662 = vmatpush1.msra.mxu0 0.0
      %663 = vmatprep.subr.mxu0 0.0
      %664 = vmatpush1.msra.mxu0 0.0
      %665 = vmatprep.subr.mxu0 0.0
      %666 = vmatpush1.msra.mxu0 0.0
      %667 = vmatprep.subr.mxu0 0.0
      %668 = vmatpush1.msra.mxu0 0.0
      %669 = vmatprep.subr.mxu0 0.0
      %670 = vmatpush1.msra.mxu0 0.0
      %671 = vmatprep.subr.mxu0 0.0
      %672 = vmatpush1.msra.mxu0 0.0
      %673 = vmatprep.subr.mxu0 0.0
      %674 = vmatpush1.msra.mxu0 0.0
      %675 = vmatprep.subr.mxu0 0.0
      %676 = vmatpush1.msra.mxu0 0.0
      %677 = vmatprep.subr.mxu0 0.0
      %678 = vmatpush1.msra.mxu0 0.0
      %679 = vmatprep.subr.mxu0 0.0
      %680 = vmatpush1.msra.mxu0 0.0
      %681 = vmatprep.subr.mxu0 0.0
      %682 = vmatpush1.msra.mxu0 0.0
      %683 = vmatprep.subr.mxu0 0.0
      %684 = vmatpush1.msra.mxu0 0.0
      %685 = vmatprep.subr.mxu0 0.0
      %686 = vmatpush1.msra.mxu0 0.0
      %687 = vmatprep.subr.mxu0 0.0
      %688 = vmatpush1.msra.mxu0 0.0
      %689 = vmatprep.subr.mxu0 0.0
      %690 = vmatpush1.msra.mxu0 0.0
      %691 = vmatprep.subr.mxu0 0.0
      %692 = vmatpush1.msra.mxu0 0.0
      %693 = vmatprep.subr.mxu0 0.0
      %694 = vmatpush1.msra.mxu0 0.0
      %695 = vmatprep.subr.mxu0 0.0
      %696 = vmatpush1.msra.mxu0 0.0
      %697 = vmatprep.subr.mxu0 0.0
      %698 = vmatpush1.msra.mxu0 0.0
      %699 = vmatprep.mubr.f32.mxu0 0.0
      %700 = vmatmul.mubr.f32.gmra.mrb[0].mxu0 %v588
      %v701 = vpop.f32.mrb[0].mxu0
      %v702 = vadd.f32 %v322, %v701
      %v703 = vpop.f32.mrb[0].mxu0
      %704 = vmatprep.mubr.f32.mxu0 0.0
      %705 = vmatmul.mubr.f32.gmra.mrb[0].mxu0 %v591
      %v706 = vpop.f32.mrb[0].mxu0
      %v707 = vadd.f32 %v322, %v706
      %v708 = vpop.f32.mrb[0].mxu0
      %709 = vmatprep.mubr.f32.mxu0 0.0
      %710 = vmatmul.mubr.f32.gmra.mrb[0].mxu0 %v594
      %v711 = vpop.f32.mrb[0].mxu0
      %v712 = vadd.f32 %v322, %v711
      %v713 = vpop.f32.mrb[0].mxu0
      %714 = vmatprep.mubr.f32.mxu0 0.0
      %715 = vmatmul.mubr.f32.gmra.mrb[0].mxu0 %v597
      %v716 = vpop.f32.mrb[0].mxu0
      %v717 = vadd.f32 %v322, %v716
      %v718 = vpop.f32.mrb[0].mxu0
      %719 = vmatprep.mubr.f32.mxu0 0.0
      %720 = vmatmul.mubr.f32.gmra.mrb[0].mxu0 %v600
      %v721 = vpop.f32.mrb[0].mxu0
      %v722 = vadd.f32 %v322, %v721
      %v723 = vpop.f32.mrb[0].mxu0
      %724 = vmatprep.mubr.f32.mxu0 0.0
      %725 = vmatmul.mubr.f32.gmra.mrb[0].mxu0 %v603
      %v726 = vpop.f32.mrb[0].mxu0
      %v727 = vadd.f32 %v322, %v726
      %v728 = vpop.f32.mrb[0].mxu0
      %729 = vmatprep.mubr.f32.mxu0 0.0
      %730 = vmatmul.mubr.f32.gmra.mrb[0].mxu0 %v606
      %v731 = vpop.f32.mrb[0].mxu0
      %v732 = vadd.f32 %v322, %v731
      %v733 = vpop.f32.mrb[0].mxu0
      %734 = vmatprep.mubr.f32.mxu0 0.0
      %735 = vmatmul.mubr.f32.gmra.mrb[0].mxu0 %v609
      %v736 = vpop.f32.mrb[0].mxu0
      %v737 = vadd.f32 %v322, %v736
      %v738 = vpop.f32.mrb[0].mxu0
      %739 = vmatprep.mubr.f32.mxu0 0.0
      %740 = vmatmul.mubr.f32.gmra.mrb[0].mxu0 %v612
      %v741 = vpop.f32.mrb[0].mxu0
      %v742 = vadd.f32 %v322, %v741
      %v743 = vpop.f32.mrb[0].mxu0
      %744 = vmatprep.mubr.f32.mxu0 0.0
      %745 = vmatmul.mubr.f32.gmra.mrb[0].mxu0 %v615
      %v746 = vpop.f32.mrb[0].mxu0
      %v747 = vadd.f32 %v322, %v746
      %v748 = vpop.f32.mrb[0].mxu0
      %749 = vmatprep.mubr.f32.mxu0 0.0
      %750 = vmatmul.mubr.f32.gmra.mrb[0].mxu0 %v618
      %v751 = vpop.f32.mrb[0].mxu0
      %v752 = vadd.f32 %v322, %v751
      %v753 = vpop.f32.mrb[0].mxu0
      %754 = vmatprep.mubr.f32.mxu0 0.0
      %755 = vmatmul.mubr.f32.gmra.mrb[0].mxu0 %v621
      %v756 = vpop.f32.mrb[0].mxu0
      %v757 = vadd.f32 %v322, %v756
      %v758 = vpop.f32.mrb[0].mxu0
      %759 = vmatprep.mubr.f32.mxu0 0.0
      %760 = vmatmul.mubr.f32.gmra.mrb[0].mxu0 %v624
      %v761 = vpop.f32.mrb[0].mxu0
      %v762 = vadd.f32 %v322, %v761
      %v763 = vpop.f32.mrb[0].mxu0
      %764 = vmatprep.mubr.f32.mxu0 0.0
      %765 = vmatmul.mubr.f32.gmra.mrb[0].mxu0 %v627
      %v766 = vpop.f32.mrb[0].mxu0
      %v767 = vadd.f32 %v322, %v766
      %v768 = vpop.f32.mrb[0].mxu0
      %769 = vmatprep.mubr.f32.mxu0 0.0
      %770 = vmatmul.mubr.f32.gmra.mrb[0].mxu0 %v630
      %v771 = vpop.f32.mrb[0].mxu0
      %v772 = vadd.f32 %v322, %v771
      %v773 = vpop.f32.mrb[0].mxu0
      %774 = vmatprep.mubr.f32.mxu0 0.0
      %775 = vmatmul.mubr.f32.gmra.mrb[0].mxu0 %v633
      %v776 = vpop.f32.mrb[0].mxu0
      %v777 = vadd.f32 %v322, %v776
      %v778 = vpop.f32.mrb[0].mxu0
      %779 = vdwg.mxu0
      %788 = vrot.lane.b32.xlu0 %v702, 96
      %v789 = vpop.permute.xlu0 %788
      %790 = vrot.lane.b32.xlu0 %v707, 96
      %v791 = vpop.permute.xlu0 %790
      %792 = vrot.lane.b32.xlu0 %v712, 96
      %v793 = vpop.permute.xlu0 %792
      %794 = vrot.lane.b32.xlu0 %v717, 96
      %v795 = vpop.permute.xlu0 %794
      %796 = vrot.lane.b32.xlu0 %v722, 96
      %v797 = vpop.permute.xlu0 %796
      %798 = vrot.lane.b32.xlu0 %v727, 96
      %v799 = vpop.permute.xlu0 %798
      %800 = vrot.lane.b32.xlu0 %v732, 96
      %v801 = vpop.permute.xlu0 %800
      %802 = vrot.lane.b32.xlu0 %v737, 96
      %v803 = vpop.permute.xlu0 %802
      %vm804 = vcmask 64512
      %v805 = vsel %vm804, %v702, 0
      %v807 = vsel %vm804, %v707, 0
      %v809 = vsel %vm804, %v712, 0
      %v811 = vsel %vm804, %v717, 0
      %v813 = vsel %vm804, %v722, 0
      %v815 = vsel %vm804, %v727, 0
      %v817 = vsel %vm804, %v732, 0
      %v819 = vsel %vm804, %v737, 0
      %v821 = vsel %vm804, %v789, 0
      %v823 = vsel %vm804, %v791, 0
      %v825 = vsel %vm804, %v793, 0
      %v827 = vsel %vm804, %v795, 0
      %v829 = vsel %vm804, %v797, 0
      %v831 = vsel %vm804, %v799, 0
      %v833 = vsel %vm804, %v801, 0
      %v835 = vsel %vm804, %v803, 0
      %837 = vmatprep.subr.mxu0 0.0
      %838 = vmatpush1.xpose.msra.mxu0 %v821
      %839 = vmatprep.subr.mxu0 0.0
      %840 = vmatpush1.xpose.msra.mxu0 %v823
      %841 = vmatprep.subr.mxu0 0.0
      %842 = vmatpush1.xpose.msra.mxu0 %v825
      %843 = vmatprep.subr.mxu0 0.0
      %844 = vmatpush1.xpose.msra.mxu0 %v827
      %845 = vmatprep.subr.mxu0 0.0
      %846 = vmatpush1.xpose.msra.mxu0 %v829
      %847 = vmatprep.subr.mxu0 0.0
      %848 = vmatpush1.xpose.msra.mxu0 %v831
      %849 = vmatprep.subr.mxu0 0.0
      %850 = vmatpush1.xpose.msra.mxu0 %v833
      %851 = vmatprep.subr.mxu0 0.0
      %852 = vmatpush1.xpose.msra.mxu0 %v835
      %853 = vmatprep.subr.mxu0 0.0
      %854 = vmatpush1.xpose.msra.mxu0 0.0
      %855 = vmatprep.subr.mxu0 0.0
      %856 = vmatpush1.xpose.msra.mxu0 0.0
      %857 = vmatprep.subr.mxu0 0.0
      %858 = vmatpush1.xpose.msra.mxu0 0.0
      %859 = vmatprep.subr.mxu0 0.0
      %860 = vmatpush1.xpose.msra.mxu0 0.0
      %861 = vmatprep.subr.mxu0 0.0
      %862 = vmatpush1.xpose.msra.mxu0 0.0
      %863 = vmatprep.subr.mxu0 0.0
      %864 = vmatpush1.xpose.msra.mxu0 0.0
      %865 = vmatprep.subr.mxu0 0.0
      %866 = vmatpush1.xpose.msra.mxu0 0.0
      %867 = vmatprep.subr.mxu0 0.0
      %868 = vmatpush1.xpose.msra.mxu0 0.0
      %869 = vmatprep.subr.mxu0 0.0
      %870 = vmatpush1.xpose.msra.mxu0 0.0
      %871 = vmatprep.subr.mxu0 0.0
      %872 = vmatpush1.xpose.msra.mxu0 0.0
      %873 = vmatprep.subr.mxu0 0.0
      %874 = vmatpush1.xpose.msra.mxu0 0.0
      %875 = vmatprep.subr.mxu0 0.0
      %876 = vmatpush1.xpose.msra.mxu0 0.0
      %877 = vmatprep.subr.mxu0 0.0
      %878 = vmatpush1.xpose.msra.mxu0 0.0
      %879 = vmatprep.subr.mxu0 0.0
      %880 = vmatpush1.xpose.msra.mxu0 0.0
      %881 = vmatprep.subr.mxu0 0.0
      %882 = vmatpush1.xpose.msra.mxu0 0.0
      %883 = vmatprep.subr.mxu0 0.0
      %884 = vmatpush1.xpose.msra.mxu0 0.0
      %885 = vmatprep.subr.mxu0 0.0
      %886 = vmatpush1.xpose.msra.mxu0 0.0
      %887 = vmatprep.subr.mxu0 0.0
      %888 = vmatpush1.xpose.msra.mxu0 0.0
      %889 = vmatprep.subr.mxu0 0.0
      %890 = vmatpush1.xpose.msra.mxu0 0.0
      %891 = vmatprep.subr.mxu0 0.0
      %892 = vmatpush1.xpose.msra.mxu0 0.0
      %893 = vmatprep.subr.mxu0 0.0
      %894 = vmatpush1.xpose.msra.mxu0 0.0
      %895 = vmatprep.subr.mxu0 0.0
      %896 = vmatpush1.xpose.msra.mxu0 0.0
      %897 = vmatprep.subr.mxu0 0.0
      %898 = vmatpush1.xpose.msra.mxu0 0.0
      %899 = vmatprep.subr.mxu0 0.0
      %900 = vmatpush1.xpose.msra.mxu0 0.0
      %901 = vmatprep.mubr.f32.mxu0 0.0
      %902 = vmatmul.mubr.f32.gmra.mrb[0].mxu0 %v805
      %v903 = vpop.f32.mrb[0].mxu0
      %v904 = vadd.f32 0.0, %v903
      %v905 = vpop.f32.mrb[0].mxu0
      %906 = vmatprep.mubr.f32.mxu0 0.0
      %907 = vmatmul.mubr.f32.gmra.mrb[0].mxu0 %v807
      %v908 = vpop.f32.mrb[0].mxu0
      %v909 = vadd.f32 0.0, %v908
      %v910 = vpop.f32.mrb[0].mxu0
      %911 = vmatprep.mubr.f32.mxu0 0.0
      %912 = vmatmul.mubr.f32.gmra.mrb[0].mxu0 %v809
      %v913 = vpop.f32.mrb[0].mxu0
      %v914 = vadd.f32 0.0, %v913
      %v915 = vpop.f32.mrb[0].mxu0
      %916 = vmatprep.mubr.f32.mxu0 0.0
      %917 = vmatmul.mubr.f32.gmra.mrb[0].mxu0 %v811
      %v918 = vpop.f32.mrb[0].mxu0
      %v919 = vadd.f32 0.0, %v918
      %v920 = vpop.f32.mrb[0].mxu0
      %921 = vmatprep.mubr.f32.mxu0 0.0
      %922 = vmatmul.mubr.f32.gmra.mrb[0].mxu0 %v813
      %v923 = vpop.f32.mrb[0].mxu0
      %v924 = vadd.f32 0.0, %v923
      %v925 = vpop.f32.mrb[0].mxu0
      %926 = vmatprep.mubr.f32.mxu0 0.0
      %927 = vmatmul.mubr.f32.gmra.mrb[0].mxu0 %v815
      %v928 = vpop.f32.mrb[0].mxu0
      %v929 = vadd.f32 0.0, %v928
      %v930 = vpop.f32.mrb[0].mxu0
      %931 = vmatprep.mubr.f32.mxu0 0.0
      %932 = vmatmul.mubr.f32.gmra.mrb[0].mxu0 %v817
      %v933 = vpop.f32.mrb[0].mxu0
      %v934 = vadd.f32 0.0, %v933
      %v935 = vpop.f32.mrb[0].mxu0
      %936 = vmatprep.mubr.f32.mxu0 0.0
      %937 = vmatmul.mubr.f32.gmra.mrb[0].mxu0 %v819
      %v938 = vpop.f32.mrb[0].mxu0
      %v939 = vadd.f32 0.0, %v938
      %v940 = vpop.f32.mrb[0].mxu0
      %941 = vdwg.mxu0
      %vm942 = vcmask 523264
      %v943 = vsel %vm942, %v904, -inf
      %944 = vmax.xlane.f32.xlu0 %v943
      %v945 = vpop.xlane.xlu0 %944
      %v946 = vsel %vm942, %v909, -inf
      %947 = vmax.xlane.f32.xlu0 %v946
      %v948 = vpop.xlane.xlu0 %947
      %v949 = vsel %vm942, %v914, -inf
      %950 = vmax.xlane.f32.xlu0 %v949
      %v951 = vpop.xlane.xlu0 %950
      %v952 = vsel %vm942, %v919, -inf
      %953 = vmax.xlane.f32.xlu0 %v952
      %v954 = vpop.xlane.xlu0 %953
      %v955 = vsel %vm942, %v924, -inf
      %956 = vmax.xlane.f32.xlu0 %v955
      %v957 = vpop.xlane.xlu0 %956
      %v958 = vsel %vm942, %v929, -inf
      %959 = vmax.xlane.f32.xlu0 %v958
      %v960 = vpop.xlane.xlu0 %959
      %v961 = vsel %vm942, %v934, -inf
      %962 = vmax.xlane.f32.xlu0 %v961
      %v963 = vpop.xlane.xlu0 %962
      %v964 = vsel %vm942, %v939, -inf
      %965 = vmax.xlane.f32.xlu0 %v964
      %v966 = vpop.xlane.xlu0 %965
      %v967 = vsub.f32 %v904, %v945
      %v968 = vsub.f32 %v909, %v948
      %v969 = vsub.f32 %v914, %v951
      %v970 = vsub.f32 %v919, %v954
      %v971 = vsub.f32 %v924, %v957
      %v972 = vsub.f32 %v929, %v960
      %v973 = vsub.f32 %v934, %v963
      %v974 = vsub.f32 %v939, %v966
      %v975 = vmul.f32 %v967, 1.442695
      %v976 = vpow.pop %v975
      %v977 = vmul.f32 %v968, 1.442695
      %v978 = vpow.pop %v977
      %v979 = vmul.f32 %v969, 1.442695
      %v980 = vpow.pop %v979
      %v981 = vmul.f32 %v970, 1.442695
      %v982 = vpow.pop %v981
      %v983 = vmul.f32 %v971, 1.442695
      %v984 = vpow.pop %v983
      %v985 = vmul.f32 %v972, 1.442695
      %v986 = vpow.pop %v985
      %v987 = vmul.f32 %v973, 1.442695
      %v988 = vpow.pop %v987
      %v989 = vmul.f32 %v974, 1.442695
      %v990 = vpow.pop %v989
      %v991 = vsel %vm942, %v976, 0.0
      %992 = vadd.xlane.f32.xlu0 %v991
      %v993 = vpop.xlane.xlu0 %992
      %v994 = vsel %vm942, %v978, 0.0
      %995 = vadd.xlane.f32.xlu0 %v994
      %v996 = vpop.xlane.xlu0 %995
      %v997 = vsel %vm942, %v980, 0.0
      %998 = vadd.xlane.f32.xlu0 %v997
      %v999 = vpop.xlane.xlu0 %998
      %v1000 = vsel %vm942, %v982, 0.0
      %1001 = vadd.xlane.f32.xlu0 %v1000
      %v1002 = vpop.xlane.xlu0 %1001
      %v1003 = vsel %vm942, %v984, 0.0
      %1004 = vadd.xlane.f32.xlu0 %v1003
      %v1005 = vpop.xlane.xlu0 %1004
      %v1006 = vsel %vm942, %v986, 0.0
      %1007 = vadd.xlane.f32.xlu0 %v1006
      %v1008 = vpop.xlane.xlu0 %1007
      %v1009 = vsel %vm942, %v988, 0.0
      %1010 = vadd.xlane.f32.xlu0 %v1009
      %v1011 = vpop.xlane.xlu0 %1010
      %v1012 = vsel %vm942, %v990, 0.0
      %1013 = vadd.xlane.f32.xlu0 %v1012
      %v1014 = vpop.xlane.xlu0 %1013
      %v1015 = vrcp.pop %v993
      %v1016 = vrcp.pop %v996
      %v1017 = vrcp.pop %v999
      %v1018 = vrcp.pop %v1002
      %v1019 = vrcp.pop %v1005
      %v1020 = vrcp.pop %v1008
      %v1021 = vrcp.pop %v1011
      %v1022 = vrcp.pop %v1014
      %v1023 = vmul.f32 %v976, %v1015
      %v1024 = vmul.f32 %v978, %v1016
      %v1025 = vmul.f32 %v980, %v1017
      %v1026 = vmul.f32 %v982, %v1018
      %v1027 = vmul.f32 %v984, %v1019
      %v1028 = vmul.f32 %v986, %v1020
      %v1029 = vmul.f32 %v988, %v1021
      %v1030 = vmul.f32 %v990, %v1022
      %1031 = vrot.lane.b32.xlu0 %v702, 64
      %v1032 = vpop.permute.xlu0 %1031
      %1033 = vrot.lane.b32.xlu0 %v707, 64
      %v1034 = vpop.permute.xlu0 %1033
      %1035 = vrot.lane.b32.xlu0 %v712, 64
      %v1036 = vpop.permute.xlu0 %1035
      %1037 = vrot.lane.b32.xlu0 %v717, 64
      %v1038 = vpop.permute.xlu0 %1037
      %1039 = vrot.lane.b32.xlu0 %v722, 64
      %v1040 = vpop.permute.xlu0 %1039
      %1041 = vrot.lane.b32.xlu0 %v727, 64
      %v1042 = vpop.permute.xlu0 %1041
      %1043 = vrot.lane.b32.xlu0 %v732, 64
      %v1044 = vpop.permute.xlu0 %1043
      %1045 = vrot.lane.b32.xlu0 %v737, 64
      %v1046 = vpop.permute.xlu0 %1045
      %v1056 = vsel %vm942, %v1023, 0
      %v1059 = vsel %vm942, %v1024, 0
      %v1062 = vsel %vm942, %v1025, 0
      %v1065 = vsel %vm942, %v1026, 0
      %v1068 = vsel %vm942, %v1027, 0
      %v1071 = vsel %vm942, %v1028, 0
      %v1074 = vsel %vm942, %v1029, 0
      %v1077 = vsel %vm942, %v1030, 0
      %1079 = vmatprep.subr.mxu0 0.0
      %1080 = vmatpush1.msra.mxu0 %v1032
      %1081 = vmatprep.subr.mxu0 0.0
      %1082 = vmatpush1.msra.mxu0 %v1034
      %1083 = vmatprep.subr.mxu0 0.0
      %1084 = vmatpush1.msra.mxu0 %v1036
      %1085 = vmatprep.subr.mxu0 0.0
      %1086 = vmatpush1.msra.mxu0 %v1038
      %1087 = vmatprep.subr.mxu0 0.0
      %1088 = vmatpush1.msra.mxu0 %v1040
      %1089 = vmatprep.subr.mxu0 0.0
      %1090 = vmatpush1.msra.mxu0 %v1042
      %1091 = vmatprep.subr.mxu0 0.0
      %1092 = vmatpush1.msra.mxu0 %v1044
      %1093 = vmatprep.subr.mxu0 0.0
      %1094 = vmatpush1.msra.mxu0 %v1046
      %1095 = vmatprep.subr.mxu0 0.0
      %1096 = vmatpush1.msra.mxu0 0.0
      %1097 = vmatprep.subr.mxu0 0.0
      %1098 = vmatpush1.msra.mxu0 0.0
      %1099 = vmatprep.subr.mxu0 0.0
      %1100 = vmatpush1.msra.mxu0 0.0
      %1101 = vmatprep.subr.mxu0 0.0
      %1102 = vmatpush1.msra.mxu0 0.0
      %1103 = vmatprep.subr.mxu0 0.0
      %1104 = vmatpush1.msra.mxu0 0.0
      %1105 = vmatprep.subr.mxu0 0.0
      %1106 = vmatpush1.msra.mxu0 0.0
      %1107 = vmatprep.subr.mxu0 0.0
      %1108 = vmatpush1.msra.mxu0 0.0
      %1109 = vmatprep.subr.mxu0 0.0
      %1110 = vmatpush1.msra.mxu0 0.0
      %1111 = vmatprep.subr.mxu0 0.0
      %1112 = vmatpush1.msra.mxu0 0.0
      %1113 = vmatprep.subr.mxu0 0.0
      %1114 = vmatpush1.msra.mxu0 0.0
      %1115 = vmatprep.subr.mxu0 0.0
      %1116 = vmatpush1.msra.mxu0 0.0
      %1117 = vmatprep.subr.mxu0 0.0
      %1118 = vmatpush1.msra.mxu0 0.0
      %1119 = vmatprep.subr.mxu0 0.0
      %1120 = vmatpush1.msra.mxu0 0.0
      %1121 = vmatprep.subr.mxu0 0.0
      %1122 = vmatpush1.msra.mxu0 0.0
      %1123 = vmatprep.subr.mxu0 0.0
      %1124 = vmatpush1.msra.mxu0 0.0
      %1125 = vmatprep.subr.mxu0 0.0
      %1126 = vmatpush1.msra.mxu0 0.0
      %1127 = vmatprep.subr.mxu0 0.0
      %1128 = vmatpush1.msra.mxu0 0.0
      %1129 = vmatprep.subr.mxu0 0.0
      %1130 = vmatpush1.msra.mxu0 0.0
      %1131 = vmatprep.subr.mxu0 0.0
      %1132 = vmatpush1.msra.mxu0 0.0
      %1133 = vmatprep.subr.mxu0 0.0
      %1134 = vmatpush1.msra.mxu0 0.0
      %1135 = vmatprep.subr.mxu0 0.0
      %1136 = vmatpush1.msra.mxu0 0.0
      %1137 = vmatprep.subr.mxu0 0.0
      %1138 = vmatpush1.msra.mxu0 0.0
      %1139 = vmatprep.subr.mxu0 0.0
      %1140 = vmatpush1.msra.mxu0 0.0
      %1141 = vmatprep.subr.mxu0 0.0
      %1142 = vmatpush1.msra.mxu0 0.0
      %1143 = vmatprep.mubr.f32.mxu0 0.0
      %1144 = vmatmul.mubr.f32.gmra.mrb[0].mxu0 %v1056
      %v1145 = vpop.f32.mrb[0].mxu0
      %v1146 = vadd.f32 0.0, %v1145
      %v1147 = vpop.f32.mrb[0].mxu0
      %1148 = vmatprep.mubr.f32.mxu0 0.0
      %1149 = vmatmul.mubr.f32.gmra.mrb[0].mxu0 %v1059
      %v1150 = vpop.f32.mrb[0].mxu0
      %v1151 = vadd.f32 0.0, %v1150
      %v1152 = vpop.f32.mrb[0].mxu0
      %1153 = vmatprep.mubr.f32.mxu0 0.0
      %1154 = vmatmul.mubr.f32.gmra.mrb[0].mxu0 %v1062
      %v1155 = vpop.f32.mrb[0].mxu0
      %v1156 = vadd.f32 0.0, %v1155
      %v1157 = vpop.f32.mrb[0].mxu0
      %1158 = vmatprep.mubr.f32.mxu0 0.0
      %1159 = vmatmul.mubr.f32.gmra.mrb[0].mxu0 %v1065
      %v1160 = vpop.f32.mrb[0].mxu0
      %v1161 = vadd.f32 0.0, %v1160
      %v1162 = vpop.f32.mrb[0].mxu0
      %1163 = vmatprep.mubr.f32.mxu0 0.0
      %1164 = vmatmul.mubr.f32.gmra.mrb[0].mxu0 %v1068
      %v1165 = vpop.f32.mrb[0].mxu0
      %v1166 = vadd.f32 0.0, %v1165
      %v1167 = vpop.f32.mrb[0].mxu0
      %1168 = vmatprep.mubr.f32.mxu0 0.0
      %1169 = vmatmul.mubr.f32.gmra.mrb[0].mxu0 %v1071
      %v1170 = vpop.f32.mrb[0].mxu0
      %v1171 = vadd.f32 0.0, %v1170
      %v1172 = vpop.f32.mrb[0].mxu0
      %1173 = vmatprep.mubr.f32.mxu0 0.0
      %1174 = vmatmul.mubr.f32.gmra.mrb[0].mxu0 %v1074
      %v1175 = vpop.f32.mrb[0].mxu0
      %v1176 = vadd.f32 0.0, %v1175
      %v1177 = vpop.f32.mrb[0].mxu0
      %1178 = vmatprep.mubr.f32.mxu0 0.0
      %1179 = vmatmul.mubr.f32.gmra.mrb[0].mxu0 %v1077
      %v1180 = vpop.f32.mrb[0].mxu0
      %v1181 = vadd.f32 0.0, %v1180
      %v1182 = vpop.f32.mrb[0].mxu0
      %1183 = vdwg.mxu0
      %1184 = vrot.lane.b32.xlu0 %v702, 120
      %v1185 = vpop.permute.xlu0 %1184
      %1186 = vrot.lane.b32.xlu0 %v707, 120
      %v1187 = vpop.permute.xlu0 %1186
      %1188 = vrot.lane.b32.xlu0 %v712, 120
      %v1189 = vpop.permute.xlu0 %1188
      %1190 = vrot.lane.b32.xlu0 %v717, 120
      %v1191 = vpop.permute.xlu0 %1190
      %1192 = vrot.lane.b32.xlu0 %v722, 120
      %v1193 = vpop.permute.xlu0 %1192
      %1194 = vrot.lane.b32.xlu0 %v727, 120
      %v1195 = vpop.permute.xlu0 %1194
      %1196 = vrot.lane.b32.xlu0 %v732, 120
      %v1197 = vpop.permute.xlu0 %1196
      %1198 = vrot.lane.b32.xlu0 %v737, 120
      %v1199 = vpop.permute.xlu0 %1198
      %1200 = vrot.lane.b32.xlu0 %v702, 88
      %v1201 = vpop.permute.xlu0 %1200
      %1202 = vrot.lane.b32.xlu0 %v707, 88
      %v1203 = vpop.permute.xlu0 %1202
      %1204 = vrot.lane.b32.xlu0 %v712, 88
      %v1205 = vpop.permute.xlu0 %1204
      %1206 = vrot.lane.b32.xlu0 %v717, 88
      %v1207 = vpop.permute.xlu0 %1206
      %1208 = vrot.lane.b32.xlu0 %v722, 88
      %v1209 = vpop.permute.xlu0 %1208
      %1210 = vrot.lane.b32.xlu0 %v727, 88
      %v1211 = vpop.permute.xlu0 %1210
      %1212 = vrot.lane.b32.xlu0 %v732, 88
      %v1213 = vpop.permute.xlu0 %1212
      %1214 = vrot.lane.b32.xlu0 %v737, 88
      %v1215 = vpop.permute.xlu0 %1214
      %v1216 = vsel %vm804, %v1185, 0
      %v1218 = vsel %vm804, %v1187, 0
      %v1220 = vsel %vm804, %v1189, 0
      %v1222 = vsel %vm804, %v1191, 0
      %v1224 = vsel %vm804, %v1193, 0
      %v1226 = vsel %vm804, %v1195, 0
      %v1228 = vsel %vm804, %v1197, 0
      %v1230 = vsel %vm804, %v1199, 0
      %v1232 = vsel %vm804, %v1201, 0
      %v1234 = vsel %vm804, %v1203, 0
      %v1236 = vsel %vm804, %v1205, 0
      %v1238 = vsel %vm804, %v1207, 0
      %v1240 = vsel %vm804, %v1209, 0
      %v1242 = vsel %vm804, %v1211, 0
      %v1244 = vsel %vm804, %v1213, 0
      %v1246 = vsel %vm804, %v1215, 0
      %1248 = vmatprep.subr.mxu0 0.0
      %1249 = vmatpush1.xpose.msra.mxu0 %v1232
      %1250 = vmatprep.subr.mxu0 0.0
      %1251 = vmatpush1.xpose.msra.mxu0 %v1234
      %1252 = vmatprep.subr.mxu0 0.0
      %1253 = vmatpush1.xpose.msra.mxu0 %v1236
      %1254 = vmatprep.subr.mxu0 0.0
      %1255 = vmatpush1.xpose.msra.mxu0 %v1238
      %1256 = vmatprep.subr.mxu0 0.0
      %1257 = vmatpush1.xpose.msra.mxu0 %v1240
      %1258 = vmatprep.subr.mxu0 0.0
      %1259 = vmatpush1.xpose.msra.mxu0 %v1242
      %1260 = vmatprep.subr.mxu0 0.0
      %1261 = vmatpush1.xpose.msra.mxu0 %v1244
      %1262 = vmatprep.subr.mxu0 0.0
      %1263 = vmatpush1.xpose.msra.mxu0 %v1246
      %1264 = vmatprep.subr.mxu0 0.0
      %1265 = vmatpush1.xpose.msra.mxu0 0.0
      %1266 = vmatprep.subr.mxu0 0.0
      %1267 = vmatpush1.xpose.msra.mxu0 0.0
      %1268 = vmatprep.subr.mxu0 0.0
      %1269 = vmatpush1.xpose.msra.mxu0 0.0
      %1270 = vmatprep.subr.mxu0 0.0
      %1271 = vmatpush1.xpose.msra.mxu0 0.0
      %1272 = vmatprep.subr.mxu0 0.0
      %1273 = vmatpush1.xpose.msra.mxu0 0.0
      %1274 = vmatprep.subr.mxu0 0.0
      %1275 = vmatpush1.xpose.msra.mxu0 0.0
      %1276 = vmatprep.subr.mxu0 0.0
      %1277 = vmatpush1.xpose.msra.mxu0 0.0
      %1278 = vmatprep.subr.mxu0 0.0
      %1279 = vmatpush1.xpose.msra.mxu0 0.0
      %1280 = vmatprep.subr.mxu0 0.0
      %1281 = vmatpush1.xpose.msra.mxu0 0.0
      %1282 = vmatprep.subr.mxu0 0.0
      %1283 = vmatpush1.xpose.msra.mxu0 0.0
      %1284 = vmatprep.subr.mxu0 0.0
      %1285 = vmatpush1.xpose.msra.mxu0 0.0
      %1286 = vmatprep.subr.mxu0 0.0
      %1287 = vmatpush1.xpose.msra.mxu0 0.0
      %1288 = vmatprep.subr.mxu0 0.0
      %1289 = vmatpush1.xpose.msra.mxu0 0.0
      %1290 = vmatprep.subr.mxu0 0.0
      %1291 = vmatpush1.xpose.msra.mxu0 0.0
      %1292 = vmatprep.subr.mxu0 0.0
      %1293 = vmatpush1.xpose.msra.mxu0 0.0
      %1294 = vmatprep.subr.mxu0 0.0
      %1295 = vmatpush1.xpose.msra.mxu0 0.0
      %1296 = vmatprep.subr.mxu0 0.0
      %1297 = vmatpush1.xpose.msra.mxu0 0.0
      %1298 = vmatprep.subr.mxu0 0.0
      %1299 = vmatpush1.xpose.msra.mxu0 0.0
      %1300 = vmatprep.subr.mxu0 0.0
      %1301 = vmatpush1.xpose.msra.mxu0 0.0
      %1302 = vmatprep.subr.mxu0 0.0
      %1303 = vmatpush1.xpose.msra.mxu0 0.0
      %1304 = vmatprep.subr.mxu0 0.0
      %1305 = vmatpush1.xpose.msra.mxu0 0.0
      %1306 = vmatprep.subr.mxu0 0.0
      %1307 = vmatpush1.xpose.msra.mxu0 0.0
      %1308 = vmatprep.subr.mxu0 0.0
      %1309 = vmatpush1.xpose.msra.mxu0 0.0
      %1310 = vmatprep.subr.mxu0 0.0
      %1311 = vmatpush1.xpose.msra.mxu0 0.0
      %1312 = vmatprep.mubr.f32.mxu0 0.0
      %1313 = vmatmul.mubr.f32.gmra.mrb[0].mxu0 %v1216
      %v1314 = vpop.f32.mrb[0].mxu0
      %v1315 = vadd.f32 0.0, %v1314
      %v1316 = vpop.f32.mrb[0].mxu0
      %1317 = vmatprep.mubr.f32.mxu0 0.0
      %1318 = vmatmul.mubr.f32.gmra.mrb[0].mxu0 %v1218
      %v1319 = vpop.f32.mrb[0].mxu0
      %v1320 = vadd.f32 0.0, %v1319
      %v1321 = vpop.f32.mrb[0].mxu0
      %1322 = vmatprep.mubr.f32.mxu0 0.0
      %1323 = vmatmul.mubr.f32.gmra.mrb[0].mxu0 %v1220
      %v1324 = vpop.f32.mrb[0].mxu0
      %v1325 = vadd.f32 0.0, %v1324
      %v1326 = vpop.f32.mrb[0].mxu0
      %1327 = vmatprep.mubr.f32.mxu0 0.0
      %1328 = vmatmul.mubr.f32.gmra.mrb[0].mxu0 %v1222
      %v1329 = vpop.f32.mrb[0].mxu0
      %v1330 = vadd.f32 0.0, %v1329
      %v1331 = vpop.f32.mrb[0].mxu0
      %1332 = vmatprep.mubr.f32.mxu0 0.0
      %1333 = vmatmul.mubr.f32.gmra.mrb[0].mxu0 %v1224
      %v1334 = vpop.f32.mrb[0].mxu0
      %v1335 = vadd.f32 0.0, %v1334
      %v1336 = vpop.f32.mrb[0].mxu0
      %1337 = vmatprep.mubr.f32.mxu0 0.0
      %1338 = vmatmul.mubr.f32.gmra.mrb[0].mxu0 %v1226
      %v1339 = vpop.f32.mrb[0].mxu0
      %v1340 = vadd.f32 0.0, %v1339
      %v1341 = vpop.f32.mrb[0].mxu0
      %1342 = vmatprep.mubr.f32.mxu0 0.0
      %1343 = vmatmul.mubr.f32.gmra.mrb[0].mxu0 %v1228
      %v1344 = vpop.f32.mrb[0].mxu0
      %v1345 = vadd.f32 0.0, %v1344
      %v1346 = vpop.f32.mrb[0].mxu0
      %1347 = vmatprep.mubr.f32.mxu0 0.0
      %1348 = vmatmul.mubr.f32.gmra.mrb[0].mxu0 %v1230
      %v1349 = vpop.f32.mrb[0].mxu0
      %v1350 = vadd.f32 0.0, %v1349
      %v1351 = vpop.f32.mrb[0].mxu0
      %1352 = vdwg.mxu0
      %v1353 = vsel %vm942, %v1315, -inf
      %1354 = vmax.xlane.f32.xlu0 %v1353
      %v1355 = vpop.xlane.xlu0 %1354
      %v1356 = vsel %vm942, %v1320, -inf
      %1357 = vmax.xlane.f32.xlu0 %v1356
      %v1358 = vpop.xlane.xlu0 %1357
      %v1359 = vsel %vm942, %v1325, -inf
      %1360 = vmax.xlane.f32.xlu0 %v1359
      %v1361 = vpop.xlane.xlu0 %1360
      %v1362 = vsel %vm942, %v1330, -inf
      %1363 = vmax.xlane.f32.xlu0 %v1362
      %v1364 = vpop.xlane.xlu0 %1363
      %v1365 = vsel %vm942, %v1335, -inf
      %1366 = vmax.xlane.f32.xlu0 %v1365
      %v1367 = vpop.xlane.xlu0 %1366
      %v1368 = vsel %vm942, %v1340, -inf
      %1369 = vmax.xlane.f32.xlu0 %v1368
      %v1370 = vpop.xlane.xlu0 %1369
      %v1371 = vsel %vm942, %v1345, -inf
      %1372 = vmax.xlane.f32.xlu0 %v1371
      %v1373 = vpop.xlane.xlu0 %1372
      %v1374 = vsel %vm942, %v1350, -inf
      %1375 = vmax.xlane.f32.xlu0 %v1374
      %v1376 = vpop.xlane.xlu0 %1375
      %v1377 = vsub.f32 %v1315, %v1355
      %v1378 = vsub.f32 %v1320, %v1358
      %v1379 = vsub.f32 %v1325, %v1361
      %v1380 = vsub.f32 %v1330, %v1364
      %v1381 = vsub.f32 %v1335, %v1367
      %v1382 = vsub.f32 %v1340, %v1370
      %v1383 = vsub.f32 %v1345, %v1373
      %v1384 = vsub.f32 %v1350, %v1376
      %v1385 = vmul.f32 %v1377, 1.442695
      %v1386 = vpow.pop %v1385
      %v1387 = vmul.f32 %v1378, 1.442695
      %v1388 = vpow.pop %v1387
      %v1389 = vmul.f32 %v1379, 1.442695
      %v1390 = vpow.pop %v1389
      %v1391 = vmul.f32 %v1380, 1.442695
      %v1392 = vpow.pop %v1391
      %v1393 = vmul.f32 %v1381, 1.442695
      %v1394 = vpow.pop %v1393
      %v1395 = vmul.f32 %v1382, 1.442695
      %v1396 = vpow.pop %v1395
      %v1397 = vmul.f32 %v1383, 1.442695
      %v1398 = vpow.pop %v1397
      %v1399 = vmul.f32 %v1384, 1.442695
      %v1400 = vpow.pop %v1399
      %v1401 = vsel %vm942, %v1386, 0.0
      %1402 = vadd.xlane.f32.xlu0 %v1401
      %v1403 = vpop.xlane.xlu0 %1402
      %v1404 = vsel %vm942, %v1388, 0.0
      %1405 = vadd.xlane.f32.xlu0 %v1404
      %v1406 = vpop.xlane.xlu0 %1405
      %v1407 = vsel %vm942, %v1390, 0.0
      %1408 = vadd.xlane.f32.xlu0 %v1407
      %v1409 = vpop.xlane.xlu0 %1408
      %v1410 = vsel %vm942, %v1392, 0.0
      %1411 = vadd.xlane.f32.xlu0 %v1410
      %v1412 = vpop.xlane.xlu0 %1411
      %v1413 = vsel %vm942, %v1394, 0.0
      %1414 = vadd.xlane.f32.xlu0 %v1413
      %v1415 = vpop.xlane.xlu0 %1414
      %v1416 = vsel %vm942, %v1396, 0.0
      %1417 = vadd.xlane.f32.xlu0 %v1416
      %v1418 = vpop.xlane.xlu0 %1417
      %v1419 = vsel %vm942, %v1398, 0.0
      %1420 = vadd.xlane.f32.xlu0 %v1419
      %v1421 = vpop.xlane.xlu0 %1420
      %v1422 = vsel %vm942, %v1400, 0.0
      %1423 = vadd.xlane.f32.xlu0 %v1422
      %v1424 = vpop.xlane.xlu0 %1423
      %v1425 = vrcp.pop %v1403
      %v1426 = vrcp.pop %v1406
      %v1427 = vrcp.pop %v1409
      %v1428 = vrcp.pop %v1412
      %v1429 = vrcp.pop %v1415
      %v1430 = vrcp.pop %v1418
      %v1431 = vrcp.pop %v1421
      %v1432 = vrcp.pop %v1424
      %v1433 = vmul.f32 %v1386, %v1425
      %v1434 = vmul.f32 %v1388, %v1426
      %v1435 = vmul.f32 %v1390, %v1427
      %v1436 = vmul.f32 %v1392, %v1428
      %v1437 = vmul.f32 %v1394, %v1429
      %v1438 = vmul.f32 %v1396, %v1430
      %v1439 = vmul.f32 %v1398, %v1431
      %v1440 = vmul.f32 %v1400, %v1432
      %1441 = vrot.lane.b32.xlu0 %v702, 56
      %v1442 = vpop.permute.xlu0 %1441
      %1443 = vrot.lane.b32.xlu0 %v707, 56
      %v1444 = vpop.permute.xlu0 %1443
      %1445 = vrot.lane.b32.xlu0 %v712, 56
      %v1446 = vpop.permute.xlu0 %1445
      %1447 = vrot.lane.b32.xlu0 %v717, 56
      %v1448 = vpop.permute.xlu0 %1447
      %1449 = vrot.lane.b32.xlu0 %v722, 56
      %v1450 = vpop.permute.xlu0 %1449
      %1451 = vrot.lane.b32.xlu0 %v727, 56
      %v1452 = vpop.permute.xlu0 %1451
      %1453 = vrot.lane.b32.xlu0 %v732, 56
      %v1454 = vpop.permute.xlu0 %1453
      %1455 = vrot.lane.b32.xlu0 %v737, 56
      %v1456 = vpop.permute.xlu0 %1455
      %v1466 = vsel %vm942, %v1433, 0
      %v1469 = vsel %vm942, %v1434, 0
      %v1472 = vsel %vm942, %v1435, 0
      %v1475 = vsel %vm942, %v1436, 0
      %v1478 = vsel %vm942, %v1437, 0
      %v1481 = vsel %vm942, %v1438, 0
      %v1484 = vsel %vm942, %v1439, 0
      %v1487 = vsel %vm942, %v1440, 0
      %1489 = vmatprep.subr.mxu0 0.0
      %1490 = vmatpush1.msra.mxu0 %v1442
      %1491 = vmatprep.subr.mxu0 0.0
      %1492 = vmatpush1.msra.mxu0 %v1444
      %1493 = vmatprep.subr.mxu0 0.0
      %1494 = vmatpush1.msra.mxu0 %v1446
      %1495 = vmatprep.subr.mxu0 0.0
      %1496 = vmatpush1.msra.mxu0 %v1448
      %1497 = vmatprep.subr.mxu0 0.0
      %1498 = vmatpush1.msra.mxu0 %v1450
      %1499 = vmatprep.subr.mxu0 0.0
      %1500 = vmatpush1.msra.mxu0 %v1452
      %1501 = vmatprep.subr.mxu0 0.0
      %1502 = vmatpush1.msra.mxu0 %v1454
      %1503 = vmatprep.subr.mxu0 0.0
      %1504 = vmatpush1.msra.mxu0 %v1456
      %1505 = vmatprep.subr.mxu0 0.0
      %1506 = vmatpush1.msra.mxu0 0.0
      %1507 = vmatprep.subr.mxu0 0.0
      %1508 = vmatpush1.msra.mxu0 0.0
      %1509 = vmatprep.subr.mxu0 0.0
      %1510 = vmatpush1.msra.mxu0 0.0
      %1511 = vmatprep.subr.mxu0 0.0
      %1512 = vmatpush1.msra.mxu0 0.0
      %1513 = vmatprep.subr.mxu0 0.0
      %1514 = vmatpush1.msra.mxu0 0.0
      %1515 = vmatprep.subr.mxu0 0.0
      %1516 = vmatpush1.msra.mxu0 0.0
      %1517 = vmatprep.subr.mxu0 0.0
      %1518 = vmatpush1.msra.mxu0 0.0
      %1519 = vmatprep.subr.mxu0 0.0
      %1520 = vmatpush1.msra.mxu0 0.0
      %1521 = vmatprep.subr.mxu0 0.0
      %1522 = vmatpush1.msra.mxu0 0.0
      %1523 = vmatprep.subr.mxu0 0.0
      %1524 = vmatpush1.msra.mxu0 0.0
      %1525 = vmatprep.subr.mxu0 0.0
      %1526 = vmatpush1.msra.mxu0 0.0
      %1527 = vmatprep.subr.mxu0 0.0
      %1528 = vmatpush1.msra.mxu0 0.0
      %1529 = vmatprep.subr.mxu0 0.0
      %1530 = vmatpush1.msra.mxu0 0.0
      %1531 = vmatprep.subr.mxu0 0.0
      %1532 = vmatpush1.msra.mxu0 0.0
      %1533 = vmatprep.subr.mxu0 0.0
      %1534 = vmatpush1.msra.mxu0 0.0
      %1535 = vmatprep.subr.mxu0 0.0
      %1536 = vmatpush1.msra.mxu0 0.0
      %1537 = vmatprep.subr.mxu0 0.0
      %1538 = vmatpush1.msra.mxu0 0.0
      %1539 = vmatprep.subr.mxu0 0.0
      %1540 = vmatpush1.msra.mxu0 0.0
      %1541 = vmatprep.subr.mxu0 0.0
      %1542 = vmatpush1.msra.mxu0 0.0
      %1543 = vmatprep.subr.mxu0 0.0
      %1544 = vmatpush1.msra.mxu0 0.0
      %1545 = vmatprep.subr.mxu0 0.0
      %1546 = vmatpush1.msra.mxu0 0.0
      %1547 = vmatprep.subr.mxu0 0.0
      %1548 = vmatpush1.msra.mxu0 0.0
      %1549 = vmatprep.subr.mxu0 0.0
      %1550 = vmatpush1.msra.mxu0 0.0
      %1551 = vmatprep.subr.mxu0 0.0
      %1552 = vmatpush1.msra.mxu0 0.0
      %1553 = vmatprep.mubr.f32.mxu0 0.0
      %1554 = vmatmul.mubr.f32.gmra.mrb[0].mxu0 %v1466
      %v1555 = vpop.f32.mrb[0].mxu0
      %v1556 = vadd.f32 0.0, %v1555
      %v1557 = vpop.f32.mrb[0].mxu0
      %1558 = vmatprep.mubr.f32.mxu0 0.0
      %1559 = vmatmul.mubr.f32.gmra.mrb[0].mxu0 %v1469
      %v1560 = vpop.f32.mrb[0].mxu0
      %v1561 = vadd.f32 0.0, %v1560
      %v1562 = vpop.f32.mrb[0].mxu0
      %1563 = vmatprep.mubr.f32.mxu0 0.0
      %1564 = vmatmul.mubr.f32.gmra.mrb[0].mxu0 %v1472
      %v1565 = vpop.f32.mrb[0].mxu0
      %v1566 = vadd.f32 0.0, %v1565
      %v1567 = vpop.f32.mrb[0].mxu0
      %1568 = vmatprep.mubr.f32.mxu0 0.0
      %1569 = vmatmul.mubr.f32.gmra.mrb[0].mxu0 %v1475
      %v1570 = vpop.f32.mrb[0].mxu0
      %v1571 = vadd.f32 0.0, %v1570
      %v1572 = vpop.f32.mrb[0].mxu0
      %1573 = vmatprep.mubr.f32.mxu0 0.0
      %1574 = vmatmul.mubr.f32.gmra.mrb[0].mxu0 %v1478
      %v1575 = vpop.f32.mrb[0].mxu0
      %v1576 = vadd.f32 0.0, %v1575
      %v1577 = vpop.f32.mrb[0].mxu0
      %1578 = vmatprep.mubr.f32.mxu0 0.0
      %1579 = vmatmul.mubr.f32.gmra.mrb[0].mxu0 %v1481
      %v1580 = vpop.f32.mrb[0].mxu0
      %v1581 = vadd.f32 0.0, %v1580
      %v1582 = vpop.f32.mrb[0].mxu0
      %1583 = vmatprep.mubr.f32.mxu0 0.0
      %1584 = vmatmul.mubr.f32.gmra.mrb[0].mxu0 %v1484
      %v1585 = vpop.f32.mrb[0].mxu0
      %v1586 = vadd.f32 0.0, %v1585
      %v1587 = vpop.f32.mrb[0].mxu0
      %1588 = vmatprep.mubr.f32.mxu0 0.0
      %1589 = vmatmul.mubr.f32.gmra.mrb[0].mxu0 %v1487
      %v1590 = vpop.f32.mrb[0].mxu0
      %v1591 = vadd.f32 0.0, %v1590
      %v1592 = vpop.f32.mrb[0].mxu0
      %1593 = vdwg.mxu0
      %1594 = vrot.lane.b32.xlu0 %v702, 112
      %v1595 = vpop.permute.xlu0 %1594
      %1596 = vrot.lane.b32.xlu0 %v707, 112
      %v1597 = vpop.permute.xlu0 %1596
      %1598 = vrot.lane.b32.xlu0 %v712, 112
      %v1599 = vpop.permute.xlu0 %1598
      %1600 = vrot.lane.b32.xlu0 %v717, 112
      %v1601 = vpop.permute.xlu0 %1600
      %1602 = vrot.lane.b32.xlu0 %v722, 112
      %v1603 = vpop.permute.xlu0 %1602
      %1604 = vrot.lane.b32.xlu0 %v727, 112
      %v1605 = vpop.permute.xlu0 %1604
      %1606 = vrot.lane.b32.xlu0 %v732, 112
      %v1607 = vpop.permute.xlu0 %1606
      %1608 = vrot.lane.b32.xlu0 %v737, 112
      %v1609 = vpop.permute.xlu0 %1608
      %1610 = vrot.lane.b32.xlu0 %v702, 80
      %v1611 = vpop.permute.xlu0 %1610
      %1612 = vrot.lane.b32.xlu0 %v707, 80
      %v1613 = vpop.permute.xlu0 %1612
      %1614 = vrot.lane.b32.xlu0 %v712, 80
      %v1615 = vpop.permute.xlu0 %1614
      %1616 = vrot.lane.b32.xlu0 %v717, 80
      %v1617 = vpop.permute.xlu0 %1616
      %1618 = vrot.lane.b32.xlu0 %v722, 80
      %v1619 = vpop.permute.xlu0 %1618
      %1620 = vrot.lane.b32.xlu0 %v727, 80
      %v1621 = vpop.permute.xlu0 %1620
      %1622 = vrot.lane.b32.xlu0 %v732, 80
      %v1623 = vpop.permute.xlu0 %1622
      %1624 = vrot.lane.b32.xlu0 %v737, 80
      %v1625 = vpop.permute.xlu0 %1624
      %v1626 = vsel %vm804, %v1595, 0
      %v1628 = vsel %vm804, %v1597, 0
      %v1630 = vsel %vm804, %v1599, 0
      %v1632 = vsel %vm804, %v1601, 0
      %v1634 = vsel %vm804, %v1603, 0
      %v1636 = vsel %vm804, %v1605, 0
      %v1638 = vsel %vm804, %v1607, 0
      %v1640 = vsel %vm804, %v1609, 0
      %v1642 = vsel %vm804, %v1611, 0
      %v1644 = vsel %vm804, %v1613, 0
      %v1646 = vsel %vm804, %v1615, 0
      %v1648 = vsel %vm804, %v1617, 0
      %v1650 = vsel %vm804, %v1619, 0
      %v1652 = vsel %vm804, %v1621, 0
      %v1654 = vsel %vm804, %v1623, 0
      %v1656 = vsel %vm804, %v1625, 0
      %1658 = vmatprep.subr.mxu0 0.0
      %1659 = vmatpush1.xpose.msra.mxu0 %v1642
      %1660 = vmatprep.subr.mxu0 0.0
      %1661 = vmatpush1.xpose.msra.mxu0 %v1644
      %1662 = vmatprep.subr.mxu0 0.0
      %1663 = vmatpush1.xpose.msra.mxu0 %v1646
      %1664 = vmatprep.subr.mxu0 0.0
      %1665 = vmatpush1.xpose.msra.mxu0 %v1648
      %1666 = vmatprep.subr.mxu0 0.0
      %1667 = vmatpush1.xpose.msra.mxu0 %v1650
      %1668 = vmatprep.subr.mxu0 0.0
      %1669 = vmatpush1.xpose.msra.mxu0 %v1652
      %1670 = vmatprep.subr.mxu0 0.0
      %1671 = vmatpush1.xpose.msra.mxu0 %v1654
      %1672 = vmatprep.subr.mxu0 0.0
      %1673 = vmatpush1.xpose.msra.mxu0 %v1656
      %1674 = vmatprep.subr.mxu0 0.0
      %1675 = vmatpush1.xpose.msra.mxu0 0.0
      %1676 = vmatprep.subr.mxu0 0.0
      %1677 = vmatpush1.xpose.msra.mxu0 0.0
      %1678 = vmatprep.subr.mxu0 0.0
      %1679 = vmatpush1.xpose.msra.mxu0 0.0
      %1680 = vmatprep.subr.mxu0 0.0
      %1681 = vmatpush1.xpose.msra.mxu0 0.0
      %1682 = vmatprep.subr.mxu0 0.0
      %1683 = vmatpush1.xpose.msra.mxu0 0.0
      %1684 = vmatprep.subr.mxu0 0.0
      %1685 = vmatpush1.xpose.msra.mxu0 0.0
      %1686 = vmatprep.subr.mxu0 0.0
      %1687 = vmatpush1.xpose.msra.mxu0 0.0
      %1688 = vmatprep.subr.mxu0 0.0
      %1689 = vmatpush1.xpose.msra.mxu0 0.0
      %1690 = vmatprep.subr.mxu0 0.0
      %1691 = vmatpush1.xpose.msra.mxu0 0.0
      %1692 = vmatprep.subr.mxu0 0.0
      %1693 = vmatpush1.xpose.msra.mxu0 0.0
      %1694 = vmatprep.subr.mxu0 0.0
      %1695 = vmatpush1.xpose.msra.mxu0 0.0
      %1696 = vmatprep.subr.mxu0 0.0
      %1697 = vmatpush1.xpose.msra.mxu0 0.0
      %1698 = vmatprep.subr.mxu0 0.0
      %1699 = vmatpush1.xpose.msra.mxu0 0.0
      %1700 = vmatprep.subr.mxu0 0.0
      %1701 = vmatpush1.xpose.msra.mxu0 0.0
      %1702 = vmatprep.subr.mxu0 0.0
      %1703 = vmatpush1.xpose.msra.mxu0 0.0
      %1704 = vmatprep.subr.mxu0 0.0
      %1705 = vmatpush1.xpose.msra.mxu0 0.0
      %1706 = vmatprep.subr.mxu0 0.0
      %1707 = vmatpush1.xpose.msra.mxu0 0.0
      %1708 = vmatprep.subr.mxu0 0.0
      %1709 = vmatpush1.xpose.msra.mxu0 0.0
      %1710 = vmatprep.subr.mxu0 0.0
      %1711 = vmatpush1.xpose.msra.mxu0 0.0
      %1712 = vmatprep.subr.mxu0 0.0
      %1713 = vmatpush1.xpose.msra.mxu0 0.0
      %1714 = vmatprep.subr.mxu0 0.0
      %1715 = vmatpush1.xpose.msra.mxu0 0.0
      %1716 = vmatprep.subr.mxu0 0.0
      %1717 = vmatpush1.xpose.msra.mxu0 0.0
      %1718 = vmatprep.subr.mxu0 0.0
      %1719 = vmatpush1.xpose.msra.mxu0 0.0
      %1720 = vmatprep.subr.mxu0 0.0
      %1721 = vmatpush1.xpose.msra.mxu0 0.0
      %1722 = vmatprep.mubr.f32.mxu0 0.0
      %1723 = vmatmul.mubr.f32.gmra.mrb[0].mxu0 %v1626
      %v1724 = vpop.f32.mrb[0].mxu0
      %v1725 = vadd.f32 0.0, %v1724
      %v1726 = vpop.f32.mrb[0].mxu0
      %1727 = vmatprep.mubr.f32.mxu0 0.0
      %1728 = vmatmul.mubr.f32.gmra.mrb[0].mxu0 %v1628
      %v1729 = vpop.f32.mrb[0].mxu0
      %v1730 = vadd.f32 0.0, %v1729
      %v1731 = vpop.f32.mrb[0].mxu0
      %1732 = vmatprep.mubr.f32.mxu0 0.0
      %1733 = vmatmul.mubr.f32.gmra.mrb[0].mxu0 %v1630
      %v1734 = vpop.f32.mrb[0].mxu0
      %v1735 = vadd.f32 0.0, %v1734
      %v1736 = vpop.f32.mrb[0].mxu0
      %1737 = vmatprep.mubr.f32.mxu0 0.0
      %1738 = vmatmul.mubr.f32.gmra.mrb[0].mxu0 %v1632
      %v1739 = vpop.f32.mrb[0].mxu0
      %v1740 = vadd.f32 0.0, %v1739
      %v1741 = vpop.f32.mrb[0].mxu0
      %1742 = vmatprep.mubr.f32.mxu0 0.0
      %1743 = vmatmul.mubr.f32.gmra.mrb[0].mxu0 %v1634
      %v1744 = vpop.f32.mrb[0].mxu0
      %v1745 = vadd.f32 0.0, %v1744
      %v1746 = vpop.f32.mrb[0].mxu0
      %1747 = vmatprep.mubr.f32.mxu0 0.0
      %1748 = vmatmul.mubr.f32.gmra.mrb[0].mxu0 %v1636
      %v1749 = vpop.f32.mrb[0].mxu0
      %v1750 = vadd.f32 0.0, %v1749
      %v1751 = vpop.f32.mrb[0].mxu0
      %1752 = vmatprep.mubr.f32.mxu0 0.0
      %1753 = vmatmul.mubr.f32.gmra.mrb[0].mxu0 %v1638
      %v1754 = vpop.f32.mrb[0].mxu0
      %v1755 = vadd.f32 0.0, %v1754
      %v1756 = vpop.f32.mrb[0].mxu0
      %1757 = vmatprep.mubr.f32.mxu0 0.0
      %1758 = vmatmul.mubr.f32.gmra.mrb[0].mxu0 %v1640
      %v1759 = vpop.f32.mrb[0].mxu0
      %v1760 = vadd.f32 0.0, %v1759
      %v1761 = vpop.f32.mrb[0].mxu0
      %1762 = vdwg.mxu0
      %v1763 = vsel %vm942, %v1725, -inf
      %1764 = vmax.xlane.f32.xlu0 %v1763
      %v1765 = vpop.xlane.xlu0 %1764
      %v1766 = vsel %vm942, %v1730, -inf
      %1767 = vmax.xlane.f32.xlu0 %v1766
      %v1768 = vpop.xlane.xlu0 %1767
      %v1769 = vsel %vm942, %v1735, -inf
      %1770 = vmax.xlane.f32.xlu0 %v1769
      %v1771 = vpop.xlane.xlu0 %1770
      %v1772 = vsel %vm942, %v1740, -inf
      %1773 = vmax.xlane.f32.xlu0 %v1772
      %v1774 = vpop.xlane.xlu0 %1773
      %v1775 = vsel %vm942, %v1745, -inf
      %1776 = vmax.xlane.f32.xlu0 %v1775
      %v1777 = vpop.xlane.xlu0 %1776
      %v1778 = vsel %vm942, %v1750, -inf
      %1779 = vmax.xlane.f32.xlu0 %v1778
      %v1780 = vpop.xlane.xlu0 %1779
      %v1781 = vsel %vm942, %v1755, -inf
      %1782 = vmax.xlane.f32.xlu0 %v1781
      %v1783 = vpop.xlane.xlu0 %1782
      %v1784 = vsel %vm942, %v1760, -inf
      %1785 = vmax.xlane.f32.xlu0 %v1784
      %v1786 = vpop.xlane.xlu0 %1785
      %v1787 = vsub.f32 %v1725, %v1765
      %v1788 = vsub.f32 %v1730, %v1768
      %v1789 = vsub.f32 %v1735, %v1771
      %v1790 = vsub.f32 %v1740, %v1774
      %v1791 = vsub.f32 %v1745, %v1777
      %v1792 = vsub.f32 %v1750, %v1780
      %v1793 = vsub.f32 %v1755, %v1783
      %v1794 = vsub.f32 %v1760, %v1786
      %v1795 = vmul.f32 %v1787, 1.442695
      %v1796 = vpow.pop %v1795
      %v1797 = vmul.f32 %v1788, 1.442695
      %v1798 = vpow.pop %v1797
      %v1799 = vmul.f32 %v1789, 1.442695
      %v1800 = vpow.pop %v1799
      %v1801 = vmul.f32 %v1790, 1.442695
      %v1802 = vpow.pop %v1801
      %v1803 = vmul.f32 %v1791, 1.442695
      %v1804 = vpow.pop %v1803
      %v1805 = vmul.f32 %v1792, 1.442695
      %v1806 = vpow.pop %v1805
      %v1807 = vmul.f32 %v1793, 1.442695
      %v1808 = vpow.pop %v1807
      %v1809 = vmul.f32 %v1794, 1.442695
      %v1810 = vpow.pop %v1809
      %v1811 = vsel %vm942, %v1796, 0.0
      %1812 = vadd.xlane.f32.xlu0 %v1811
      %v1813 = vpop.xlane.xlu0 %1812
      %v1814 = vsel %vm942, %v1798, 0.0
      %1815 = vadd.xlane.f32.xlu0 %v1814
      %v1816 = vpop.xlane.xlu0 %1815
      %v1817 = vsel %vm942, %v1800, 0.0
      %1818 = vadd.xlane.f32.xlu0 %v1817
      %v1819 = vpop.xlane.xlu0 %1818
      %v1820 = vsel %vm942, %v1802, 0.0
      %1821 = vadd.xlane.f32.xlu0 %v1820
      %v1822 = vpop.xlane.xlu0 %1821
      %v1823 = vsel %vm942, %v1804, 0.0
      %1824 = vadd.xlane.f32.xlu0 %v1823
      %v1825 = vpop.xlane.xlu0 %1824
      %v1826 = vsel %vm942, %v1806, 0.0
      %1827 = vadd.xlane.f32.xlu0 %v1826
      %v1828 = vpop.xlane.xlu0 %1827
      %v1829 = vsel %vm942, %v1808, 0.0
      %1830 = vadd.xlane.f32.xlu0 %v1829
      %v1831 = vpop.xlane.xlu0 %1830
      %v1832 = vsel %vm942, %v1810, 0.0
      %1833 = vadd.xlane.f32.xlu0 %v1832
      %v1834 = vpop.xlane.xlu0 %1833
      %v1835 = vrcp.pop %v1813
      %v1836 = vrcp.pop %v1816
      %v1837 = vrcp.pop %v1819
      %v1838 = vrcp.pop %v1822
      %v1839 = vrcp.pop %v1825
      %v1840 = vrcp.pop %v1828
      %v1841 = vrcp.pop %v1831
      %v1842 = vrcp.pop %v1834
      %v1843 = vmul.f32 %v1796, %v1835
      %v1844 = vmul.f32 %v1798, %v1836
      %v1845 = vmul.f32 %v1800, %v1837
      %v1846 = vmul.f32 %v1802, %v1838
      %v1847 = vmul.f32 %v1804, %v1839
      %v1848 = vmul.f32 %v1806, %v1840
      %v1849 = vmul.f32 %v1808, %v1841
      %v1850 = vmul.f32 %v1810, %v1842
      %1851 = vrot.lane.b32.xlu0 %v702, 48
      %v1852 = vpop.permute.xlu0 %1851
      %1853 = vrot.lane.b32.xlu0 %v707, 48
      %v1854 = vpop.permute.xlu0 %1853
      %1855 = vrot.lane.b32.xlu0 %v712, 48
      %v1856 = vpop.permute.xlu0 %1855
      %1857 = vrot.lane.b32.xlu0 %v717, 48
      %v1858 = vpop.permute.xlu0 %1857
      %1859 = vrot.lane.b32.xlu0 %v722, 48
      %v1860 = vpop.permute.xlu0 %1859
      %1861 = vrot.lane.b32.xlu0 %v727, 48
      %v1862 = vpop.permute.xlu0 %1861
      %1863 = vrot.lane.b32.xlu0 %v732, 48
      %v1864 = vpop.permute.xlu0 %1863
      %1865 = vrot.lane.b32.xlu0 %v737, 48
      %v1866 = vpop.permute.xlu0 %1865
      %v1876 = vsel %vm942, %v1843, 0
      %v1879 = vsel %vm942, %v1844, 0
      %v1882 = vsel %vm942, %v1845, 0
      %v1885 = vsel %vm942, %v1846, 0
      %v1888 = vsel %vm942, %v1847, 0
      %v1891 = vsel %vm942, %v1848, 0
      %v1894 = vsel %vm942, %v1849, 0
      %v1897 = vsel %vm942, %v1850, 0
      %1899 = vmatprep.subr.mxu0 0.0
      %1900 = vmatpush1.msra.mxu0 %v1852
      %1901 = vmatprep.subr.mxu0 0.0
      %1902 = vmatpush1.msra.mxu0 %v1854
      %1903 = vmatprep.subr.mxu0 0.0
      %1904 = vmatpush1.msra.mxu0 %v1856
      %1905 = vmatprep.subr.mxu0 0.0
      %1906 = vmatpush1.msra.mxu0 %v1858
      %1907 = vmatprep.subr.mxu0 0.0
      %1908 = vmatpush1.msra.mxu0 %v1860
      %1909 = vmatprep.subr.mxu0 0.0
      %1910 = vmatpush1.msra.mxu0 %v1862
      %1911 = vmatprep.subr.mxu0 0.0
      %1912 = vmatpush1.msra.mxu0 %v1864
      %1913 = vmatprep.subr.mxu0 0.0
      %1914 = vmatpush1.msra.mxu0 %v1866
      %1915 = vmatprep.subr.mxu0 0.0
      %1916 = vmatpush1.msra.mxu0 0.0
      %1917 = vmatprep.subr.mxu0 0.0
      %1918 = vmatpush1.msra.mxu0 0.0
      %1919 = vmatprep.subr.mxu0 0.0
      %1920 = vmatpush1.msra.mxu0 0.0
      %1921 = vmatprep.subr.mxu0 0.0
      %1922 = vmatpush1.msra.mxu0 0.0
      %1923 = vmatprep.subr.mxu0 0.0
      %1924 = vmatpush1.msra.mxu0 0.0
      %1925 = vmatprep.subr.mxu0 0.0
      %1926 = vmatpush1.msra.mxu0 0.0
      %1927 = vmatprep.subr.mxu0 0.0
      %1928 = vmatpush1.msra.mxu0 0.0
      %1929 = vmatprep.subr.mxu0 0.0
      %1930 = vmatpush1.msra.mxu0 0.0
      %1931 = vmatprep.subr.mxu0 0.0
      %1932 = vmatpush1.msra.mxu0 0.0
      %1933 = vmatprep.subr.mxu0 0.0
      %1934 = vmatpush1.msra.mxu0 0.0
      %1935 = vmatprep.subr.mxu0 0.0
      %1936 = vmatpush1.msra.mxu0 0.0
      %1937 = vmatprep.subr.mxu0 0.0
      %1938 = vmatpush1.msra.mxu0 0.0
      %1939 = vmatprep.subr.mxu0 0.0
      %1940 = vmatpush1.msra.mxu0 0.0
      %1941 = vmatprep.subr.mxu0 0.0
      %1942 = vmatpush1.msra.mxu0 0.0
      %1943 = vmatprep.subr.mxu0 0.0
      %1944 = vmatpush1.msra.mxu0 0.0
      %1945 = vmatprep.subr.mxu0 0.0
      %1946 = vmatpush1.msra.mxu0 0.0
      %1947 = vmatprep.subr.mxu0 0.0
      %1948 = vmatpush1.msra.mxu0 0.0
      %1949 = vmatprep.subr.mxu0 0.0
      %1950 = vmatpush1.msra.mxu0 0.0
      %1951 = vmatprep.subr.mxu0 0.0
      %1952 = vmatpush1.msra.mxu0 0.0
      %1953 = vmatprep.subr.mxu0 0.0
      %1954 = vmatpush1.msra.mxu0 0.0
      %1955 = vmatprep.subr.mxu0 0.0
      %1956 = vmatpush1.msra.mxu0 0.0
      %1957 = vmatprep.subr.mxu0 0.0
      %1958 = vmatpush1.msra.mxu0 0.0
      %1959 = vmatprep.subr.mxu0 0.0
      %1960 = vmatpush1.msra.mxu0 0.0
      %1961 = vmatprep.subr.mxu0 0.0
      %1962 = vmatpush1.msra.mxu0 0.0
      %1963 = vmatprep.mubr.f32.mxu0 0.0
      %1964 = vmatmul.mubr.f32.gmra.mrb[0].mxu0 %v1876
      %v1965 = vpop.f32.mrb[0].mxu0
      %v1966 = vadd.f32 0.0, %v1965
      %v1967 = vpop.f32.mrb[0].mxu0
      %1968 = vmatprep.mubr.f32.mxu0 0.0
      %1969 = vmatmul.mubr.f32.gmra.mrb[0].mxu0 %v1879
      %v1970 = vpop.f32.mrb[0].mxu0
      %v1971 = vadd.f32 0.0, %v1970
      %v1972 = vpop.f32.mrb[0].mxu0
      %1973 = vmatprep.mubr.f32.mxu0 0.0
      %1974 = vmatmul.mubr.f32.gmra.mrb[0].mxu0 %v1882
      %v1975 = vpop.f32.mrb[0].mxu0
      %v1976 = vadd.f32 0.0, %v1975
      %v1977 = vpop.f32.mrb[0].mxu0
      %1978 = vmatprep.mubr.f32.mxu0 0.0
      %1979 = vmatmul.mubr.f32.gmra.mrb[0].mxu0 %v1885
      %v1980 = vpop.f32.mrb[0].mxu0
      %v1981 = vadd.f32 0.0, %v1980
      %v1982 = vpop.f32.mrb[0].mxu0
      %1983 = vmatprep.mubr.f32.mxu0 0.0
      %1984 = vmatmul.mubr.f32.gmra.mrb[0].mxu0 %v1888
      %v1985 = vpop.f32.mrb[0].mxu0
      %v1986 = vadd.f32 0.0, %v1985
      %v1987 = vpop.f32.mrb[0].mxu0
      %1988 = vmatprep.mubr.f32.mxu0 0.0
      %1989 = vmatmul.mubr.f32.gmra.mrb[0].mxu0 %v1891
      %v1990 = vpop.f32.mrb[0].mxu0
      %v1991 = vadd.f32 0.0, %v1990
      %v1992 = vpop.f32.mrb[0].mxu0
      %1993 = vmatprep.mubr.f32.mxu0 0.0
      %1994 = vmatmul.mubr.f32.gmra.mrb[0].mxu0 %v1894
      %v1995 = vpop.f32.mrb[0].mxu0
      %v1996 = vadd.f32 0.0, %v1995
      %v1997 = vpop.f32.mrb[0].mxu0
      %1998 = vmatprep.mubr.f32.mxu0 0.0
      %1999 = vmatmul.mubr.f32.gmra.mrb[0].mxu0 %v1897
      %v2000 = vpop.f32.mrb[0].mxu0
      %v2001 = vadd.f32 0.0, %v2000
      %v2002 = vpop.f32.mrb[0].mxu0
      %2003 = vdwg.mxu0
      %2004 = vrot.lane.b32.xlu0 %v702, 104
      %v2005 = vpop.permute.xlu0 %2004
      %2006 = vrot.lane.b32.xlu0 %v707, 104
      %v2007 = vpop.permute.xlu0 %2006
      %2008 = vrot.lane.b32.xlu0 %v712, 104
      %v2009 = vpop.permute.xlu0 %2008
      %2010 = vrot.lane.b32.xlu0 %v717, 104
      %v2011 = vpop.permute.xlu0 %2010
      %2012 = vrot.lane.b32.xlu0 %v722, 104
      %v2013 = vpop.permute.xlu0 %2012
      %2014 = vrot.lane.b32.xlu0 %v727, 104
      %v2015 = vpop.permute.xlu0 %2014
      %2016 = vrot.lane.b32.xlu0 %v732, 104
      %v2017 = vpop.permute.xlu0 %2016
      %2018 = vrot.lane.b32.xlu0 %v737, 104
      %v2019 = vpop.permute.xlu0 %2018
      %2020 = vrot.lane.b32.xlu0 %v702, 72
      %v2021 = vpop.permute.xlu0 %2020
      %2022 = vrot.lane.b32.xlu0 %v707, 72
      %v2023 = vpop.permute.xlu0 %2022
      %2024 = vrot.lane.b32.xlu0 %v712, 72
      %v2025 = vpop.permute.xlu0 %2024
      %2026 = vrot.lane.b32.xlu0 %v717, 72
      %v2027 = vpop.permute.xlu0 %2026
      %2028 = vrot.lane.b32.xlu0 %v722, 72
      %v2029 = vpop.permute.xlu0 %2028
      %2030 = vrot.lane.b32.xlu0 %v727, 72
      %v2031 = vpop.permute.xlu0 %2030
      %2032 = vrot.lane.b32.xlu0 %v732, 72
      %v2033 = vpop.permute.xlu0 %2032
      %2034 = vrot.lane.b32.xlu0 %v737, 72
      %v2035 = vpop.permute.xlu0 %2034
      %v2036 = vsel %vm804, %v2005, 0
      %v2038 = vsel %vm804, %v2007, 0
      %v2040 = vsel %vm804, %v2009, 0
      %v2042 = vsel %vm804, %v2011, 0
      %v2044 = vsel %vm804, %v2013, 0
      %v2046 = vsel %vm804, %v2015, 0
      %v2048 = vsel %vm804, %v2017, 0
      %v2050 = vsel %vm804, %v2019, 0
      %v2052 = vsel %vm804, %v2021, 0
      %v2054 = vsel %vm804, %v2023, 0
      %v2056 = vsel %vm804, %v2025, 0
      %v2058 = vsel %vm804, %v2027, 0
      %v2060 = vsel %vm804, %v2029, 0
      %v2062 = vsel %vm804, %v2031, 0
      %v2064 = vsel %vm804, %v2033, 0
      %v2066 = vsel %vm804, %v2035, 0
      %2068 = vmatprep.subr.mxu0 0.0
      %2069 = vmatpush1.xpose.msra.mxu0 %v2052
      %2070 = vmatprep.subr.mxu0 0.0
      %2071 = vmatpush1.xpose.msra.mxu0 %v2054
      %2072 = vmatprep.subr.mxu0 0.0
      %2073 = vmatpush1.xpose.msra.mxu0 %v2056
      %2074 = vmatprep.subr.mxu0 0.0
      %2075 = vmatpush1.xpose.msra.mxu0 %v2058
      %2076 = vmatprep.subr.mxu0 0.0
      %2077 = vmatpush1.xpose.msra.mxu0 %v2060
      %2078 = vmatprep.subr.mxu0 0.0
      %2079 = vmatpush1.xpose.msra.mxu0 %v2062
      %2080 = vmatprep.subr.mxu0 0.0
      %2081 = vmatpush1.xpose.msra.mxu0 %v2064
      %2082 = vmatprep.subr.mxu0 0.0
      %2083 = vmatpush1.xpose.msra.mxu0 %v2066
      %2084 = vmatprep.subr.mxu0 0.0
      %2085 = vmatpush1.xpose.msra.mxu0 0.0
      %2086 = vmatprep.subr.mxu0 0.0
      %2087 = vmatpush1.xpose.msra.mxu0 0.0
      %2088 = vmatprep.subr.mxu0 0.0
      %2089 = vmatpush1.xpose.msra.mxu0 0.0
      %2090 = vmatprep.subr.mxu0 0.0
      %2091 = vmatpush1.xpose.msra.mxu0 0.0
      %2092 = vmatprep.subr.mxu0 0.0
      %2093 = vmatpush1.xpose.msra.mxu0 0.0
      %2094 = vmatprep.subr.mxu0 0.0
      %2095 = vmatpush1.xpose.msra.mxu0 0.0
      %2096 = vmatprep.subr.mxu0 0.0
      %2097 = vmatpush1.xpose.msra.mxu0 0.0
      %2098 = vmatprep.subr.mxu0 0.0
      %2099 = vmatpush1.xpose.msra.mxu0 0.0
      %2100 = vmatprep.subr.mxu0 0.0
      %2101 = vmatpush1.xpose.msra.mxu0 0.0
      %2102 = vmatprep.subr.mxu0 0.0
      %2103 = vmatpush1.xpose.msra.mxu0 0.0
      %2104 = vmatprep.subr.mxu0 0.0
      %2105 = vmatpush1.xpose.msra.mxu0 0.0
      %2106 = vmatprep.subr.mxu0 0.0
      %2107 = vmatpush1.xpose.msra.mxu0 0.0
      %2108 = vmatprep.subr.mxu0 0.0
      %2109 = vmatpush1.xpose.msra.mxu0 0.0
      %2110 = vmatprep.subr.mxu0 0.0
      %2111 = vmatpush1.xpose.msra.mxu0 0.0
      %2112 = vmatprep.subr.mxu0 0.0
      %2113 = vmatpush1.xpose.msra.mxu0 0.0
      %2114 = vmatprep.subr.mxu0 0.0
      %2115 = vmatpush1.xpose.msra.mxu0 0.0
      %2116 = vmatprep.subr.mxu0 0.0
      %2117 = vmatpush1.xpose.msra.mxu0 0.0
      %2118 = vmatprep.subr.mxu0 0.0
      %2119 = vmatpush1.xpose.msra.mxu0 0.0
      %2120 = vmatprep.subr.mxu0 0.0
      %2121 = vmatpush1.xpose.msra.mxu0 0.0
      %2122 = vmatprep.subr.mxu0 0.0
      %2123 = vmatpush1.xpose.msra.mxu0 0.0
      %2124 = vmatprep.subr.mxu0 0.0
      %2125 = vmatpush1.xpose.msra.mxu0 0.0
      %2126 = vmatprep.subr.mxu0 0.0
      %2127 = vmatpush1.xpose.msra.mxu0 0.0
      %2128 = vmatprep.subr.mxu0 0.0
      %2129 = vmatpush1.xpose.msra.mxu0 0.0
      %2130 = vmatprep.subr.mxu0 0.0
      %2131 = vmatpush1.xpose.msra.mxu0 0.0
      %2132 = vmatprep.mubr.f32.mxu0 0.0
      %2133 = vmatmul.mubr.f32.gmra.mrb[0].mxu0 %v2036
      %v2134 = vpop.f32.mrb[0].mxu0
      %v2135 = vadd.f32 0.0, %v2134
      %v2136 = vpop.f32.mrb[0].mxu0
      %2137 = vmatprep.mubr.f32.mxu0 0.0
      %2138 = vmatmul.mubr.f32.gmra.mrb[0].mxu0 %v2038
      %v2139 = vpop.f32.mrb[0].mxu0
      %v2140 = vadd.f32 0.0, %v2139
      %v2141 = vpop.f32.mrb[0].mxu0
      %2142 = vmatprep.mubr.f32.mxu0 0.0
      %2143 = vmatmul.mubr.f32.gmra.mrb[0].mxu0 %v2040
      %v2144 = vpop.f32.mrb[0].mxu0
      %v2145 = vadd.f32 0.0, %v2144
      %v2146 = vpop.f32.mrb[0].mxu0
      %2147 = vmatprep.mubr.f32.mxu0 0.0
      %2148 = vmatmul.mubr.f32.gmra.mrb[0].mxu0 %v2042
      %v2149 = vpop.f32.mrb[0].mxu0
      %v2150 = vadd.f32 0.0, %v2149
      %v2151 = vpop.f32.mrb[0].mxu0
      %2152 = vmatprep.mubr.f32.mxu0 0.0
      %2153 = vmatmul.mubr.f32.gmra.mrb[0].mxu0 %v2044
      %v2154 = vpop.f32.mrb[0].mxu0
      %v2155 = vadd.f32 0.0, %v2154
      %v2156 = vpop.f32.mrb[0].mxu0
      %2157 = vmatprep.mubr.f32.mxu0 0.0
      %2158 = vmatmul.mubr.f32.gmra.mrb[0].mxu0 %v2046
      %v2159 = vpop.f32.mrb[0].mxu0
      %v2160 = vadd.f32 0.0, %v2159
      %v2161 = vpop.f32.mrb[0].mxu0
      %2162 = vmatprep.mubr.f32.mxu0 0.0
      %2163 = vmatmul.mubr.f32.gmra.mrb[0].mxu0 %v2048
      %v2164 = vpop.f32.mrb[0].mxu0
      %v2165 = vadd.f32 0.0, %v2164
      %v2166 = vpop.f32.mrb[0].mxu0
      %2167 = vmatprep.mubr.f32.mxu0 0.0
      %2168 = vmatmul.mubr.f32.gmra.mrb[0].mxu0 %v2050
      %v2169 = vpop.f32.mrb[0].mxu0
      %v2170 = vadd.f32 0.0, %v2169
      %v2171 = vpop.f32.mrb[0].mxu0
      %2172 = vdwg.mxu0
      %v2173 = vsel %vm942, %v2135, -inf
      %2174 = vmax.xlane.f32.xlu0 %v2173
      %v2175 = vpop.xlane.xlu0 %2174
      %v2176 = vsel %vm942, %v2140, -inf
      %2177 = vmax.xlane.f32.xlu0 %v2176
      %v2178 = vpop.xlane.xlu0 %2177
      %v2179 = vsel %vm942, %v2145, -inf
      %2180 = vmax.xlane.f32.xlu0 %v2179
      %v2181 = vpop.xlane.xlu0 %2180
      %v2182 = vsel %vm942, %v2150, -inf
      %2183 = vmax.xlane.f32.xlu0 %v2182
      %v2184 = vpop.xlane.xlu0 %2183
      %v2185 = vsel %vm942, %v2155, -inf
      %2186 = vmax.xlane.f32.xlu0 %v2185
      %v2187 = vpop.xlane.xlu0 %2186
      %v2188 = vsel %vm942, %v2160, -inf
      %2189 = vmax.xlane.f32.xlu0 %v2188
      %v2190 = vpop.xlane.xlu0 %2189
      %v2191 = vsel %vm942, %v2165, -inf
      %2192 = vmax.xlane.f32.xlu0 %v2191
      %v2193 = vpop.xlane.xlu0 %2192
      %v2194 = vsel %vm942, %v2170, -inf
      %2195 = vmax.xlane.f32.xlu0 %v2194
      %v2196 = vpop.xlane.xlu0 %2195
      %v2197 = vsub.f32 %v2135, %v2175
      %v2198 = vsub.f32 %v2140, %v2178
      %v2199 = vsub.f32 %v2145, %v2181
      %v2200 = vsub.f32 %v2150, %v2184
      %v2201 = vsub.f32 %v2155, %v2187
      %v2202 = vsub.f32 %v2160, %v2190
      %v2203 = vsub.f32 %v2165, %v2193
      %v2204 = vsub.f32 %v2170, %v2196
      %v2205 = vmul.f32 %v2197, 1.442695
      %v2206 = vpow.pop %v2205
      %v2207 = vmul.f32 %v2198, 1.442695
      %v2208 = vpow.pop %v2207
      %v2209 = vmul.f32 %v2199, 1.442695
      %v2210 = vpow.pop %v2209
      %v2211 = vmul.f32 %v2200, 1.442695
      %v2212 = vpow.pop %v2211
      %v2213 = vmul.f32 %v2201, 1.442695
      %v2214 = vpow.pop %v2213
      %v2215 = vmul.f32 %v2202, 1.442695
      %v2216 = vpow.pop %v2215
      %v2217 = vmul.f32 %v2203, 1.442695
      %v2218 = vpow.pop %v2217
      %v2219 = vmul.f32 %v2204, 1.442695
      %v2220 = vpow.pop %v2219
      %v2221 = vsel %vm942, %v2206, 0.0
      %2222 = vadd.xlane.f32.xlu0 %v2221
      %v2223 = vpop.xlane.xlu0 %2222
      %v2224 = vsel %vm942, %v2208, 0.0
      %2225 = vadd.xlane.f32.xlu0 %v2224
      %v2226 = vpop.xlane.xlu0 %2225
      %v2227 = vsel %vm942, %v2210, 0.0
      %2228 = vadd.xlane.f32.xlu0 %v2227
      %v2229 = vpop.xlane.xlu0 %2228
      %v2230 = vsel %vm942, %v2212, 0.0
      %2231 = vadd.xlane.f32.xlu0 %v2230
      %v2232 = vpop.xlane.xlu0 %2231
      %v2233 = vsel %vm942, %v2214, 0.0
      %2234 = vadd.xlane.f32.xlu0 %v2233
      %v2235 = vpop.xlane.xlu0 %2234
      %v2236 = vsel %vm942, %v2216, 0.0
      %2237 = vadd.xlane.f32.xlu0 %v2236
      %v2238 = vpop.xlane.xlu0 %2237
      %v2239 = vsel %vm942, %v2218, 0.0
      %2240 = vadd.xlane.f32.xlu0 %v2239
      %v2241 = vpop.xlane.xlu0 %2240
      %v2242 = vsel %vm942, %v2220, 0.0
      %2243 = vadd.xlane.f32.xlu0 %v2242
      %v2244 = vpop.xlane.xlu0 %2243
      %v2245 = vrcp.pop %v2223
      %v2246 = vrcp.pop %v2226
      %v2247 = vrcp.pop %v2229
      %v2248 = vrcp.pop %v2232
      %v2249 = vrcp.pop %v2235
      %v2250 = vrcp.pop %v2238
      %v2251 = vrcp.pop %v2241
      %v2252 = vrcp.pop %v2244
      %v2253 = vmul.f32 %v2206, %v2245
      %v2254 = vmul.f32 %v2208, %v2246
      %v2255 = vmul.f32 %v2210, %v2247
      %v2256 = vmul.f32 %v2212, %v2248
      %v2257 = vmul.f32 %v2214, %v2249
      %v2258 = vmul.f32 %v2216, %v2250
      %v2259 = vmul.f32 %v2218, %v2251
      %v2260 = vmul.f32 %v2220, %v2252
      %2261 = vrot.lane.b32.xlu0 %v702, 40
      %v2262 = vpop.permute.xlu0 %2261
      %2263 = vrot.lane.b32.xlu0 %v707, 40
      %v2264 = vpop.permute.xlu0 %2263
      %2265 = vrot.lane.b32.xlu0 %v712, 40
      %v2266 = vpop.permute.xlu0 %2265
      %2267 = vrot.lane.b32.xlu0 %v717, 40
      %v2268 = vpop.permute.xlu0 %2267
      %2269 = vrot.lane.b32.xlu0 %v722, 40
      %v2270 = vpop.permute.xlu0 %2269
      %2271 = vrot.lane.b32.xlu0 %v727, 40
      %v2272 = vpop.permute.xlu0 %2271
      %2273 = vrot.lane.b32.xlu0 %v732, 40
      %v2274 = vpop.permute.xlu0 %2273
      %2275 = vrot.lane.b32.xlu0 %v737, 40
      %v2276 = vpop.permute.xlu0 %2275
      %v2286 = vsel %vm942, %v2253, 0
      %v2289 = vsel %vm942, %v2254, 0
      %v2292 = vsel %vm942, %v2255, 0
      %v2295 = vsel %vm942, %v2256, 0
      %v2298 = vsel %vm942, %v2257, 0
      %v2301 = vsel %vm942, %v2258, 0
      %v2304 = vsel %vm942, %v2259, 0
      %v2307 = vsel %vm942, %v2260, 0
      %2309 = vmatprep.subr.mxu0 0.0
      %2310 = vmatpush1.msra.mxu0 %v2262
      %2311 = vmatprep.subr.mxu0 0.0
      %2312 = vmatpush1.msra.mxu0 %v2264
      %2313 = vmatprep.subr.mxu0 0.0
      %2314 = vmatpush1.msra.mxu0 %v2266
      %2315 = vmatprep.subr.mxu0 0.0
      %2316 = vmatpush1.msra.mxu0 %v2268
      %2317 = vmatprep.subr.mxu0 0.0
      %2318 = vmatpush1.msra.mxu0 %v2270
      %2319 = vmatprep.subr.mxu0 0.0
      %2320 = vmatpush1.msra.mxu0 %v2272
      %2321 = vmatprep.subr.mxu0 0.0
      %2322 = vmatpush1.msra.mxu0 %v2274
      %2323 = vmatprep.subr.mxu0 0.0
      %2324 = vmatpush1.msra.mxu0 %v2276
      %2325 = vmatprep.subr.mxu0 0.0
      %2326 = vmatpush1.msra.mxu0 0.0
      %2327 = vmatprep.subr.mxu0 0.0
      %2328 = vmatpush1.msra.mxu0 0.0
      %2329 = vmatprep.subr.mxu0 0.0
      %2330 = vmatpush1.msra.mxu0 0.0
      %2331 = vmatprep.subr.mxu0 0.0
      %2332 = vmatpush1.msra.mxu0 0.0
      %2333 = vmatprep.subr.mxu0 0.0
      %2334 = vmatpush1.msra.mxu0 0.0
      %2335 = vmatprep.subr.mxu0 0.0
      %2336 = vmatpush1.msra.mxu0 0.0
      %2337 = vmatprep.subr.mxu0 0.0
      %2338 = vmatpush1.msra.mxu0 0.0
      %2339 = vmatprep.subr.mxu0 0.0
      %2340 = vmatpush1.msra.mxu0 0.0
      %2341 = vmatprep.subr.mxu0 0.0
      %2342 = vmatpush1.msra.mxu0 0.0
      %2343 = vmatprep.subr.mxu0 0.0
      %2344 = vmatpush1.msra.mxu0 0.0
      %2345 = vmatprep.subr.mxu0 0.0
      %2346 = vmatpush1.msra.mxu0 0.0
      %2347 = vmatprep.subr.mxu0 0.0
      %2348 = vmatpush1.msra.mxu0 0.0
      %2349 = vmatprep.subr.mxu0 0.0
      %2350 = vmatpush1.msra.mxu0 0.0
      %2351 = vmatprep.subr.mxu0 0.0
      %2352 = vmatpush1.msra.mxu0 0.0
      %2353 = vmatprep.subr.mxu0 0.0
      %2354 = vmatpush1.msra.mxu0 0.0
      %2355 = vmatprep.subr.mxu0 0.0
      %2356 = vmatpush1.msra.mxu0 0.0
      %2357 = vmatprep.subr.mxu0 0.0
      %2358 = vmatpush1.msra.mxu0 0.0
      %2359 = vmatprep.subr.mxu0 0.0
      %2360 = vmatpush1.msra.mxu0 0.0
      %2361 = vmatprep.subr.mxu0 0.0
      %2362 = vmatpush1.msra.mxu0 0.0
      %2363 = vmatprep.subr.mxu0 0.0
      %2364 = vmatpush1.msra.mxu0 0.0
      %2365 = vmatprep.subr.mxu0 0.0
      %2366 = vmatpush1.msra.mxu0 0.0
      %2367 = vmatprep.subr.mxu0 0.0
      %2368 = vmatpush1.msra.mxu0 0.0
      %2369 = vmatprep.subr.mxu0 0.0
      %2370 = vmatpush1.msra.mxu0 0.0
      %2371 = vmatprep.subr.mxu0 0.0
      %2372 = vmatpush1.msra.mxu0 0.0
      %2373 = vmatprep.mubr.f32.mxu0 0.0
      %2374 = vmatmul.mubr.f32.gmra.mrb[0].mxu0 %v2286
      %v2375 = vpop.f32.mrb[0].mxu0
      %v2376 = vadd.f32 0.0, %v2375
      %v2377 = vpop.f32.mrb[0].mxu0
      %2378 = vmatprep.mubr.f32.mxu0 0.0
      %2379 = vmatmul.mubr.f32.gmra.mrb[0].mxu0 %v2289
      %v2380 = vpop.f32.mrb[0].mxu0
      %v2381 = vadd.f32 0.0, %v2380
      %v2382 = vpop.f32.mrb[0].mxu0
      %2383 = vmatprep.mubr.f32.mxu0 0.0
      %2384 = vmatmul.mubr.f32.gmra.mrb[0].mxu0 %v2292
      %v2385 = vpop.f32.mrb[0].mxu0
      %v2386 = vadd.f32 0.0, %v2385
      %v2387 = vpop.f32.mrb[0].mxu0
      %2388 = vmatprep.mubr.f32.mxu0 0.0
      %2389 = vmatmul.mubr.f32.gmra.mrb[0].mxu0 %v2295
      %v2390 = vpop.f32.mrb[0].mxu0
      %v2391 = vadd.f32 0.0, %v2390
      %v2392 = vpop.f32.mrb[0].mxu0
      %2393 = vmatprep.mubr.f32.mxu0 0.0
      %2394 = vmatmul.mubr.f32.gmra.mrb[0].mxu0 %v2298
      %v2395 = vpop.f32.mrb[0].mxu0
      %v2396 = vadd.f32 0.0, %v2395
      %v2397 = vpop.f32.mrb[0].mxu0
      %2398 = vmatprep.mubr.f32.mxu0 0.0
      %2399 = vmatmul.mubr.f32.gmra.mrb[0].mxu0 %v2301
      %v2400 = vpop.f32.mrb[0].mxu0
      %v2401 = vadd.f32 0.0, %v2400
      %v2402 = vpop.f32.mrb[0].mxu0
      %2403 = vmatprep.mubr.f32.mxu0 0.0
      %2404 = vmatmul.mubr.f32.gmra.mrb[0].mxu0 %v2304
      %v2405 = vpop.f32.mrb[0].mxu0
      %v2406 = vadd.f32 0.0, %v2405
      %v2407 = vpop.f32.mrb[0].mxu0
      %2408 = vmatprep.mubr.f32.mxu0 0.0
      %2409 = vmatmul.mubr.f32.gmra.mrb[0].mxu0 %v2307
      %v2410 = vpop.f32.mrb[0].mxu0
      %v2411 = vadd.f32 0.0, %v2410
      %v2412 = vpop.f32.mrb[0].mxu0
      %2413 = vdwg.mxu0
      %2422 = vrot.lane.b32.xlu0 %v1556, 8
      %v2423 = vpop.permute.xlu0 %2422
      %2424 = vrot.lane.b32.xlu0 %v1561, 8
      %v2425 = vpop.permute.xlu0 %2424
      %2426 = vrot.lane.b32.xlu0 %v1566, 8
      %v2427 = vpop.permute.xlu0 %2426
      %2428 = vrot.lane.b32.xlu0 %v1571, 8
      %v2429 = vpop.permute.xlu0 %2428
      %2430 = vrot.lane.b32.xlu0 %v1576, 8
      %v2431 = vpop.permute.xlu0 %2430
      %2432 = vrot.lane.b32.xlu0 %v1581, 8
      %v2433 = vpop.permute.xlu0 %2432
      %2434 = vrot.lane.b32.xlu0 %v1586, 8
      %v2435 = vpop.permute.xlu0 %2434
      %2436 = vrot.lane.b32.xlu0 %v1591, 8
      %v2437 = vpop.permute.xlu0 %2436
      %2454 = vrot.lane.b32.xlu0 %v1966, 16
      %v2455 = vpop.permute.xlu0 %2454
      %2456 = vrot.lane.b32.xlu0 %v1971, 16
      %v2457 = vpop.permute.xlu0 %2456
      %2458 = vrot.lane.b32.xlu0 %v1976, 16
      %v2459 = vpop.permute.xlu0 %2458
      %2460 = vrot.lane.b32.xlu0 %v1981, 16
      %v2461 = vpop.permute.xlu0 %2460
      %2462 = vrot.lane.b32.xlu0 %v1986, 16
      %v2463 = vpop.permute.xlu0 %2462
      %2464 = vrot.lane.b32.xlu0 %v1991, 16
      %v2465 = vpop.permute.xlu0 %2464
      %2466 = vrot.lane.b32.xlu0 %v1996, 16
      %v2467 = vpop.permute.xlu0 %2466
      %2468 = vrot.lane.b32.xlu0 %v2001, 16
      %v2469 = vpop.permute.xlu0 %2468
      %2486 = vrot.lane.b32.xlu0 %v2376, 24
      %v2487 = vpop.permute.xlu0 %2486
      %2488 = vrot.lane.b32.xlu0 %v2381, 24
      %v2489 = vpop.permute.xlu0 %2488
      %2490 = vrot.lane.b32.xlu0 %v2386, 24
      %v2491 = vpop.permute.xlu0 %2490
      %2492 = vrot.lane.b32.xlu0 %v2391, 24
      %v2493 = vpop.permute.xlu0 %2492
      %2494 = vrot.lane.b32.xlu0 %v2396, 24
      %v2495 = vpop.permute.xlu0 %2494
      %2496 = vrot.lane.b32.xlu0 %v2401, 24
      %v2497 = vpop.permute.xlu0 %2496
      %2498 = vrot.lane.b32.xlu0 %v2406, 24
      %v2499 = vpop.permute.xlu0 %2498
      %2500 = vrot.lane.b32.xlu0 %v2411, 24
      %v2501 = vpop.permute.xlu0 %2500
      %v2510 = vsel %vm804, %v1146, %v2423
      %v2511 = vsel %vm804, %v1151, %v2425
      %v2512 = vsel %vm804, %v1156, %v2427
      %v2513 = vsel %vm804, %v1161, %v2429
      %v2514 = vsel %vm804, %v1166, %v2431
      %v2515 = vsel %vm804, %v1171, %v2433
      %v2516 = vsel %vm804, %v1176, %v2435
      %v2517 = vsel %vm804, %v1181, %v2437
      %vm2518 = vcmask 130048
      %v2519 = vsel %vm2518, %v2510, %v2455
      %v2520 = vsel %vm2518, %v2511, %v2457
      %v2521 = vsel %vm2518, %v2512, %v2459
      %v2522 = vsel %vm2518, %v2513, %v2461
      %v2523 = vsel %vm2518, %v2514, %v2463
      %v2524 = vsel %vm2518, %v2515, %v2465
      %v2525 = vsel %vm2518, %v2516, %v2467
      %v2526 = vsel %vm2518, %v2517, %v2469
      %vm2527 = vcmask 195584
      %v2528 = vsel %vm2527, %v2519, %v2487
      %v2529 = vsel %vm2527, %v2520, %v2489
      %v2530 = vsel %vm2527, %v2521, %v2491
      %v2531 = vsel %vm2527, %v2522, %v2493
      %v2532 = vsel %vm2527, %v2523, %v2495
      %v2533 = vsel %vm2527, %v2524, %v2497
      %v2534 = vsel %vm2527, %v2525, %v2499
      %v2535 = vsel %vm2527, %v2526, %v2501
      %2544 = vrot.lane.b32.xlu0 %v742, 96
      %v2545 = vpop.permute.xlu0 %2544
      %2546 = vrot.lane.b32.xlu0 %v747, 96
      %v2547 = vpop.permute.xlu0 %2546
      %2548 = vrot.lane.b32.xlu0 %v752, 96
      %v2549 = vpop.permute.xlu0 %2548
      %2550 = vrot.lane.b32.xlu0 %v757, 96
      %v2551 = vpop.permute.xlu0 %2550
      %2552 = vrot.lane.b32.xlu0 %v762, 96
      %v2553 = vpop.permute.xlu0 %2552
      %2554 = vrot.lane.b32.xlu0 %v767, 96
      %v2555 = vpop.permute.xlu0 %2554
      %2556 = vrot.lane.b32.xlu0 %v772, 96
      %v2557 = vpop.permute.xlu0 %2556
      %2558 = vrot.lane.b32.xlu0 %v777, 96
      %v2559 = vpop.permute.xlu0 %2558
      %v2560 = vsel %vm804, %v742, 0
      %v2562 = vsel %vm804, %v747, 0
      %v2564 = vsel %vm804, %v752, 0
      %v2566 = vsel %vm804, %v757, 0
      %v2568 = vsel %vm804, %v762, 0
      %v2570 = vsel %vm804, %v767, 0
      %v2572 = vsel %vm804, %v772, 0
      %v2574 = vsel %vm804, %v777, 0
      %v2576 = vsel %vm804, %v2545, 0
      %v2578 = vsel %vm804, %v2547, 0
      %v2580 = vsel %vm804, %v2549, 0
      %v2582 = vsel %vm804, %v2551, 0
      %v2584 = vsel %vm804, %v2553, 0
      %v2586 = vsel %vm804, %v2555, 0
      %v2588 = vsel %vm804, %v2557, 0
      %v2590 = vsel %vm804, %v2559, 0
      %2592 = vmatprep.subr.mxu0 0.0
      %2593 = vmatpush1.xpose.msra.mxu0 %v2576
      %2594 = vmatprep.subr.mxu0 0.0
      %2595 = vmatpush1.xpose.msra.mxu0 %v2578
      %2596 = vmatprep.subr.mxu0 0.0
      %2597 = vmatpush1.xpose.msra.mxu0 %v2580
      %2598 = vmatprep.subr.mxu0 0.0
      %2599 = vmatpush1.xpose.msra.mxu0 %v2582
      %2600 = vmatprep.subr.mxu0 0.0
      %2601 = vmatpush1.xpose.msra.mxu0 %v2584
      %2602 = vmatprep.subr.mxu0 0.0
      %2603 = vmatpush1.xpose.msra.mxu0 %v2586
      %2604 = vmatprep.subr.mxu0 0.0
      %2605 = vmatpush1.xpose.msra.mxu0 %v2588
      %2606 = vmatprep.subr.mxu0 0.0
      %2607 = vmatpush1.xpose.msra.mxu0 %v2590
      %2608 = vmatprep.subr.mxu0 0.0
      %2609 = vmatpush1.xpose.msra.mxu0 0.0
      %2610 = vmatprep.subr.mxu0 0.0
      %2611 = vmatpush1.xpose.msra.mxu0 0.0
      %2612 = vmatprep.subr.mxu0 0.0
      %2613 = vmatpush1.xpose.msra.mxu0 0.0
      %2614 = vmatprep.subr.mxu0 0.0
      %2615 = vmatpush1.xpose.msra.mxu0 0.0
      %2616 = vmatprep.subr.mxu0 0.0
      %2617 = vmatpush1.xpose.msra.mxu0 0.0
      %2618 = vmatprep.subr.mxu0 0.0
      %2619 = vmatpush1.xpose.msra.mxu0 0.0
      %2620 = vmatprep.subr.mxu0 0.0
      %2621 = vmatpush1.xpose.msra.mxu0 0.0
      %2622 = vmatprep.subr.mxu0 0.0
      %2623 = vmatpush1.xpose.msra.mxu0 0.0
      %2624 = vmatprep.subr.mxu0 0.0
      %2625 = vmatpush1.xpose.msra.mxu0 0.0
      %2626 = vmatprep.subr.mxu0 0.0
      %2627 = vmatpush1.xpose.msra.mxu0 0.0
      %2628 = vmatprep.subr.mxu0 0.0
      %2629 = vmatpush1.xpose.msra.mxu0 0.0
      %2630 = vmatprep.subr.mxu0 0.0
      %2631 = vmatpush1.xpose.msra.mxu0 0.0
      %2632 = vmatprep.subr.mxu0 0.0
      %2633 = vmatpush1.xpose.msra.mxu0 0.0
      %2634 = vmatprep.subr.mxu0 0.0
      %2635 = vmatpush1.xpose.msra.mxu0 0.0
      %2636 = vmatprep.subr.mxu0 0.0
      %2637 = vmatpush1.xpose.msra.mxu0 0.0
      %2638 = vmatprep.subr.mxu0 0.0
      %2639 = vmatpush1.xpose.msra.mxu0 0.0
      %2640 = vmatprep.subr.mxu0 0.0
      %2641 = vmatpush1.xpose.msra.mxu0 0.0
      %2642 = vmatprep.subr.mxu0 0.0
      %2643 = vmatpush1.xpose.msra.mxu0 0.0
      %2644 = vmatprep.subr.mxu0 0.0
      %2645 = vmatpush1.xpose.msra.mxu0 0.0
      %2646 = vmatprep.subr.mxu0 0.0
      %2647 = vmatpush1.xpose.msra.mxu0 0.0
      %2648 = vmatprep.subr.mxu0 0.0
      %2649 = vmatpush1.xpose.msra.mxu0 0.0
      %2650 = vmatprep.subr.mxu0 0.0
      %2651 = vmatpush1.xpose.msra.mxu0 0.0
      %2652 = vmatprep.subr.mxu0 0.0
      %2653 = vmatpush1.xpose.msra.mxu0 0.0
      %2654 = vmatprep.subr.mxu0 0.0
      %2655 = vmatpush1.xpose.msra.mxu0 0.0
      %2656 = vmatprep.mubr.f32.mxu0 0.0
      %2657 = vmatmul.mubr.f32.gmra.mrb[0].mxu0 %v2560
      %v2658 = vpop.f32.mrb[0].mxu0
      %v2659 = vadd.f32 0.0, %v2658
      %v2660 = vpop.f32.mrb[0].mxu0
      %2661 = vmatprep.mubr.f32.mxu0 0.0
      %2662 = vmatmul.mubr.f32.gmra.mrb[0].mxu0 %v2562
      %v2663 = vpop.f32.mrb[0].mxu0
      %v2664 = vadd.f32 0.0, %v2663
      %v2665 = vpop.f32.mrb[0].mxu0
      %2666 = vmatprep.mubr.f32.mxu0 0.0
      %2667 = vmatmul.mubr.f32.gmra.mrb[0].mxu0 %v2564
      %v2668 = vpop.f32.mrb[0].mxu0
      %v2669 = vadd.f32 0.0, %v2668
      %v2670 = vpop.f32.mrb[0].mxu0
      %2671 = vmatprep.mubr.f32.mxu0 0.0
      %2672 = vmatmul.mubr.f32.gmra.mrb[0].mxu0 %v2566
      %v2673 = vpop.f32.mrb[0].mxu0
      %v2674 = vadd.f32 0.0, %v2673
      %v2675 = vpop.f32.mrb[0].mxu0
      %2676 = vmatprep.mubr.f32.mxu0 0.0
      %2677 = vmatmul.mubr.f32.gmra.mrb[0].mxu0 %v2568
      %v2678 = vpop.f32.mrb[0].mxu0
      %v2679 = vadd.f32 0.0, %v2678
      %v2680 = vpop.f32.mrb[0].mxu0
      %2681 = vmatprep.mubr.f32.mxu0 0.0
      %2682 = vmatmul.mubr.f32.gmra.mrb[0].mxu0 %v2570
      %v2683 = vpop.f32.mrb[0].mxu0
      %v2684 = vadd.f32 0.0, %v2683
      %v2685 = vpop.f32.mrb[0].mxu0
      %2686 = vmatprep.mubr.f32.mxu0 0.0
      %2687 = vmatmul.mubr.f32.gmra.mrb[0].mxu0 %v2572
      %v2688 = vpop.f32.mrb[0].mxu0
      %v2689 = vadd.f32 0.0, %v2688
      %v2690 = vpop.f32.mrb[0].mxu0
      %2691 = vmatprep.mubr.f32.mxu0 0.0
      %2692 = vmatmul.mubr.f32.gmra.mrb[0].mxu0 %v2574
      %v2693 = vpop.f32.mrb[0].mxu0
      %v2694 = vadd.f32 0.0, %v2693
      %v2695 = vpop.f32.mrb[0].mxu0
      %2696 = vdwg.mxu0
      %v2697 = vsel %vm942, %v2659, -inf
      %2698 = vmax.xlane.f32.xlu0 %v2697
      %v2699 = vpop.xlane.xlu0 %2698
      %v2700 = vsel %vm942, %v2664, -inf
      %2701 = vmax.xlane.f32.xlu0 %v2700
      %v2702 = vpop.xlane.xlu0 %2701
      %v2703 = vsel %vm942, %v2669, -inf
      %2704 = vmax.xlane.f32.xlu0 %v2703
      %v2705 = vpop.xlane.xlu0 %2704
      %v2706 = vsel %vm942, %v2674, -inf
      %2707 = vmax.xlane.f32.xlu0 %v2706
      %v2708 = vpop.xlane.xlu0 %2707
      %v2709 = vsel %vm942, %v2679, -inf
      %2710 = vmax.xlane.f32.xlu0 %v2709
      %v2711 = vpop.xlane.xlu0 %2710
      %v2712 = vsel %vm942, %v2684, -inf
      %2713 = vmax.xlane.f32.xlu0 %v2712
      %v2714 = vpop.xlane.xlu0 %2713
      %v2715 = vsel %vm942, %v2689, -inf
      %2716 = vmax.xlane.f32.xlu0 %v2715
      %v2717 = vpop.xlane.xlu0 %2716
      %v2718 = vsel %vm942, %v2694, -inf
      %2719 = vmax.xlane.f32.xlu0 %v2718
      %v2720 = vpop.xlane.xlu0 %2719
      %v2721 = vsub.f32 %v2659, %v2699
      %v2722 = vsub.f32 %v2664, %v2702
      %v2723 = vsub.f32 %v2669, %v2705
      %v2724 = vsub.f32 %v2674, %v2708
      %v2725 = vsub.f32 %v2679, %v2711
      %v2726 = vsub.f32 %v2684, %v2714
      %v2727 = vsub.f32 %v2689, %v2717
      %v2728 = vsub.f32 %v2694, %v2720
      %v2729 = vmul.f32 %v2721, 1.442695
      %v2730 = vpow.pop %v2729
      %v2731 = vmul.f32 %v2722, 1.442695
      %v2732 = vpow.pop %v2731
      %v2733 = vmul.f32 %v2723, 1.442695
      %v2734 = vpow.pop %v2733
      %v2735 = vmul.f32 %v2724, 1.442695
      %v2736 = vpow.pop %v2735
      %v2737 = vmul.f32 %v2725, 1.442695
      %v2738 = vpow.pop %v2737
      %v2739 = vmul.f32 %v2726, 1.442695
      %v2740 = vpow.pop %v2739
      %v2741 = vmul.f32 %v2727, 1.442695
      %v2742 = vpow.pop %v2741
      %v2743 = vmul.f32 %v2728, 1.442695
      %v2744 = vpow.pop %v2743
      %v2745 = vsel %vm942, %v2730, 0.0
      %2746 = vadd.xlane.f32.xlu0 %v2745
      %v2747 = vpop.xlane.xlu0 %2746
      %v2748 = vsel %vm942, %v2732, 0.0
      %2749 = vadd.xlane.f32.xlu0 %v2748
      %v2750 = vpop.xlane.xlu0 %2749
      %v2751 = vsel %vm942, %v2734, 0.0
      %2752 = vadd.xlane.f32.xlu0 %v2751
      %v2753 = vpop.xlane.xlu0 %2752
      %v2754 = vsel %vm942, %v2736, 0.0
      %2755 = vadd.xlane.f32.xlu0 %v2754
      %v2756 = vpop.xlane.xlu0 %2755
      %v2757 = vsel %vm942, %v2738, 0.0
      %2758 = vadd.xlane.f32.xlu0 %v2757
      %v2759 = vpop.xlane.xlu0 %2758
      %v2760 = vsel %vm942, %v2740, 0.0
      %2761 = vadd.xlane.f32.xlu0 %v2760
      %v2762 = vpop.xlane.xlu0 %2761
      %v2763 = vsel %vm942, %v2742, 0.0
      %2764 = vadd.xlane.f32.xlu0 %v2763
      %v2765 = vpop.xlane.xlu0 %2764
      %v2766 = vsel %vm942, %v2744, 0.0
      %2767 = vadd.xlane.f32.xlu0 %v2766
      %v2768 = vpop.xlane.xlu0 %2767
      %v2769 = vrcp.pop %v2747
      %v2770 = vrcp.pop %v2750
      %v2771 = vrcp.pop %v2753
      %v2772 = vrcp.pop %v2756
      %v2773 = vrcp.pop %v2759
      %v2774 = vrcp.pop %v2762
      %v2775 = vrcp.pop %v2765
      %v2776 = vrcp.pop %v2768
      %v2777 = vmul.f32 %v2730, %v2769
      %v2778 = vmul.f32 %v2732, %v2770
      %v2779 = vmul.f32 %v2734, %v2771
      %v2780 = vmul.f32 %v2736, %v2772
      %v2781 = vmul.f32 %v2738, %v2773
      %v2782 = vmul.f32 %v2740, %v2774
      %v2783 = vmul.f32 %v2742, %v2775
      %v2784 = vmul.f32 %v2744, %v2776
      %2785 = vrot.lane.b32.xlu0 %v742, 64
      %v2786 = vpop.permute.xlu0 %2785
      %2787 = vrot.lane.b32.xlu0 %v747, 64
      %v2788 = vpop.permute.xlu0 %2787
      %2789 = vrot.lane.b32.xlu0 %v752, 64
      %v2790 = vpop.permute.xlu0 %2789
      %2791 = vrot.lane.b32.xlu0 %v757, 64
      %v2792 = vpop.permute.xlu0 %2791
      %2793 = vrot.lane.b32.xlu0 %v762, 64
      %v2794 = vpop.permute.xlu0 %2793
      %2795 = vrot.lane.b32.xlu0 %v767, 64
      %v2796 = vpop.permute.xlu0 %2795
      %2797 = vrot.lane.b32.xlu0 %v772, 64
      %v2798 = vpop.permute.xlu0 %2797
      %2799 = vrot.lane.b32.xlu0 %v777, 64
      %v2800 = vpop.permute.xlu0 %2799
      %v2810 = vsel %vm942, %v2777, 0
      %v2813 = vsel %vm942, %v2778, 0
      %v2816 = vsel %vm942, %v2779, 0
      %v2819 = vsel %vm942, %v2780, 0
      %v2822 = vsel %vm942, %v2781, 0
      %v2825 = vsel %vm942, %v2782, 0
      %v2828 = vsel %vm942, %v2783, 0
      %v2831 = vsel %vm942, %v2784, 0
      %2833 = vmatprep.subr.mxu0 0.0
      %2834 = vmatpush1.msra.mxu0 %v2786
      %2835 = vmatprep.subr.mxu0 0.0
      %2836 = vmatpush1.msra.mxu0 %v2788
      %2837 = vmatprep.subr.mxu0 0.0
      %2838 = vmatpush1.msra.mxu0 %v2790
      %2839 = vmatprep.subr.mxu0 0.0
      %2840 = vmatpush1.msra.mxu0 %v2792
      %2841 = vmatprep.subr.mxu0 0.0
      %2842 = vmatpush1.msra.mxu0 %v2794
      %2843 = vmatprep.subr.mxu0 0.0
      %2844 = vmatpush1.msra.mxu0 %v2796
      %2845 = vmatprep.subr.mxu0 0.0
      %2846 = vmatpush1.msra.mxu0 %v2798
      %2847 = vmatprep.subr.mxu0 0.0
      %2848 = vmatpush1.msra.mxu0 %v2800
      %2849 = vmatprep.subr.mxu0 0.0
      %2850 = vmatpush1.msra.mxu0 0.0
      %2851 = vmatprep.subr.mxu0 0.0
      %2852 = vmatpush1.msra.mxu0 0.0
      %2853 = vmatprep.subr.mxu0 0.0
      %2854 = vmatpush1.msra.mxu0 0.0
      %2855 = vmatprep.subr.mxu0 0.0
      %2856 = vmatpush1.msra.mxu0 0.0
      %2857 = vmatprep.subr.mxu0 0.0
      %2858 = vmatpush1.msra.mxu0 0.0
      %2859 = vmatprep.subr.mxu0 0.0
      %2860 = vmatpush1.msra.mxu0 0.0
      %2861 = vmatprep.subr.mxu0 0.0
      %2862 = vmatpush1.msra.mxu0 0.0
      %2863 = vmatprep.subr.mxu0 0.0
      %2864 = vmatpush1.msra.mxu0 0.0
      %2865 = vmatprep.subr.mxu0 0.0
      %2866 = vmatpush1.msra.mxu0 0.0
      %2867 = vmatprep.subr.mxu0 0.0
      %2868 = vmatpush1.msra.mxu0 0.0
      %2869 = vmatprep.subr.mxu0 0.0
      %2870 = vmatpush1.msra.mxu0 0.0
      %2871 = vmatprep.subr.mxu0 0.0
      %2872 = vmatpush1.msra.mxu0 0.0
      %2873 = vmatprep.subr.mxu0 0.0
      %2874 = vmatpush1.msra.mxu0 0.0
      %2875 = vmatprep.subr.mxu0 0.0
      %2876 = vmatpush1.msra.mxu0 0.0
      %2877 = vmatprep.subr.mxu0 0.0
      %2878 = vmatpush1.msra.mxu0 0.0
      %2879 = vmatprep.subr.mxu0 0.0
      %2880 = vmatpush1.msra.mxu0 0.0
      %2881 = vmatprep.subr.mxu0 0.0
      %2882 = vmatpush1.msra.mxu0 0.0
      %2883 = vmatprep.subr.mxu0 0.0
      %2884 = vmatpush1.msra.mxu0 0.0
      %2885 = vmatprep.subr.mxu0 0.0
      %2886 = vmatpush1.msra.mxu0 0.0
      %2887 = vmatprep.subr.mxu0 0.0
      %2888 = vmatpush1.msra.mxu0 0.0
      %2889 = vmatprep.subr.mxu0 0.0
      %2890 = vmatpush1.msra.mxu0 0.0
      %2891 = vmatprep.subr.mxu0 0.0
      %2892 = vmatpush1.msra.mxu0 0.0
      %2893 = vmatprep.subr.mxu0 0.0
      %2894 = vmatpush1.msra.mxu0 0.0
      %2895 = vmatprep.subr.mxu0 0.0
      %2896 = vmatpush1.msra.mxu0 0.0
      %2897 = vmatprep.mubr.f32.mxu0 0.0
      %2898 = vmatmul.mubr.f32.gmra.mrb[0].mxu0 %v2810
      %v2899 = vpop.f32.mrb[0].mxu0
      %v2900 = vadd.f32 0.0, %v2899
      %v2901 = vpop.f32.mrb[0].mxu0
      %2902 = vmatprep.mubr.f32.mxu0 0.0
      %2903 = vmatmul.mubr.f32.gmra.mrb[0].mxu0 %v2813
      %v2904 = vpop.f32.mrb[0].mxu0
      %v2905 = vadd.f32 0.0, %v2904
      %v2906 = vpop.f32.mrb[0].mxu0
      %2907 = vmatprep.mubr.f32.mxu0 0.0
      %2908 = vmatmul.mubr.f32.gmra.mrb[0].mxu0 %v2816
      %v2909 = vpop.f32.mrb[0].mxu0
      %v2910 = vadd.f32 0.0, %v2909
      %v2911 = vpop.f32.mrb[0].mxu0
      %2912 = vmatprep.mubr.f32.mxu0 0.0
      %2913 = vmatmul.mubr.f32.gmra.mrb[0].mxu0 %v2819
      %v2914 = vpop.f32.mrb[0].mxu0
      %v2915 = vadd.f32 0.0, %v2914
      %v2916 = vpop.f32.mrb[0].mxu0
      %2917 = vmatprep.mubr.f32.mxu0 0.0
      %2918 = vmatmul.mubr.f32.gmra.mrb[0].mxu0 %v2822
      %v2919 = vpop.f32.mrb[0].mxu0
      %v2920 = vadd.f32 0.0, %v2919
      %v2921 = vpop.f32.mrb[0].mxu0
      %2922 = vmatprep.mubr.f32.mxu0 0.0
      %2923 = vmatmul.mubr.f32.gmra.mrb[0].mxu0 %v2825
      %v2924 = vpop.f32.mrb[0].mxu0
      %v2925 = vadd.f32 0.0, %v2924
      %v2926 = vpop.f32.mrb[0].mxu0
      %2927 = vmatprep.mubr.f32.mxu0 0.0
      %2928 = vmatmul.mubr.f32.gmra.mrb[0].mxu0 %v2828
      %v2929 = vpop.f32.mrb[0].mxu0
      %v2930 = vadd.f32 0.0, %v2929
      %v2931 = vpop.f32.mrb[0].mxu0
      %2932 = vmatprep.mubr.f32.mxu0 0.0
      %2933 = vmatmul.mubr.f32.gmra.mrb[0].mxu0 %v2831
      %v2934 = vpop.f32.mrb[0].mxu0
      %v2935 = vadd.f32 0.0, %v2934
      %v2936 = vpop.f32.mrb[0].mxu0
      %2937 = vdwg.mxu0
      %2938 = vrot.lane.b32.xlu0 %v742, 120
      %v2939 = vpop.permute.xlu0 %2938
      %2940 = vrot.lane.b32.xlu0 %v747, 120
      %v2941 = vpop.permute.xlu0 %2940
      %2942 = vrot.lane.b32.xlu0 %v752, 120
      %v2943 = vpop.permute.xlu0 %2942
      %2944 = vrot.lane.b32.xlu0 %v757, 120
      %v2945 = vpop.permute.xlu0 %2944
      %2946 = vrot.lane.b32.xlu0 %v762, 120
      %v2947 = vpop.permute.xlu0 %2946
      %2948 = vrot.lane.b32.xlu0 %v767, 120
      %v2949 = vpop.permute.xlu0 %2948
      %2950 = vrot.lane.b32.xlu0 %v772, 120
      %v2951 = vpop.permute.xlu0 %2950
      %2952 = vrot.lane.b32.xlu0 %v777, 120
      %v2953 = vpop.permute.xlu0 %2952
      %2954 = vrot.lane.b32.xlu0 %v742, 88
      %v2955 = vpop.permute.xlu0 %2954
      %2956 = vrot.lane.b32.xlu0 %v747, 88
      %v2957 = vpop.permute.xlu0 %2956
      %2958 = vrot.lane.b32.xlu0 %v752, 88
      %v2959 = vpop.permute.xlu0 %2958
      %2960 = vrot.lane.b32.xlu0 %v757, 88
      %v2961 = vpop.permute.xlu0 %2960
      %2962 = vrot.lane.b32.xlu0 %v762, 88
      %v2963 = vpop.permute.xlu0 %2962
      %2964 = vrot.lane.b32.xlu0 %v767, 88
      %v2965 = vpop.permute.xlu0 %2964
      %2966 = vrot.lane.b32.xlu0 %v772, 88
      %v2967 = vpop.permute.xlu0 %2966
      %2968 = vrot.lane.b32.xlu0 %v777, 88
      %v2969 = vpop.permute.xlu0 %2968
      %v2970 = vsel %vm804, %v2939, 0
      %v2972 = vsel %vm804, %v2941, 0
      %v2974 = vsel %vm804, %v2943, 0
      %v2976 = vsel %vm804, %v2945, 0
      %v2978 = vsel %vm804, %v2947, 0
      %v2980 = vsel %vm804, %v2949, 0
      %v2982 = vsel %vm804, %v2951, 0
      %v2984 = vsel %vm804, %v2953, 0
      %v2986 = vsel %vm804, %v2955, 0
      %v2988 = vsel %vm804, %v2957, 0
      %v2990 = vsel %vm804, %v2959, 0
      %v2992 = vsel %vm804, %v2961, 0
      %v2994 = vsel %vm804, %v2963, 0
      %v2996 = vsel %vm804, %v2965, 0
      %v2998 = vsel %vm804, %v2967, 0
      %v3000 = vsel %vm804, %v2969, 0
      %3002 = vmatprep.subr.mxu0 0.0
      %3003 = vmatpush1.xpose.msra.mxu0 %v2986
      %3004 = vmatprep.subr.mxu0 0.0
      %3005 = vmatpush1.xpose.msra.mxu0 %v2988
      %3006 = vmatprep.subr.mxu0 0.0
      %3007 = vmatpush1.xpose.msra.mxu0 %v2990
      %3008 = vmatprep.subr.mxu0 0.0
      %3009 = vmatpush1.xpose.msra.mxu0 %v2992
      %3010 = vmatprep.subr.mxu0 0.0
      %3011 = vmatpush1.xpose.msra.mxu0 %v2994
      %3012 = vmatprep.subr.mxu0 0.0
      %3013 = vmatpush1.xpose.msra.mxu0 %v2996
      %3014 = vmatprep.subr.mxu0 0.0
      %3015 = vmatpush1.xpose.msra.mxu0 %v2998
      %3016 = vmatprep.subr.mxu0 0.0
      %3017 = vmatpush1.xpose.msra.mxu0 %v3000
      %3018 = vmatprep.subr.mxu0 0.0
      %3019 = vmatpush1.xpose.msra.mxu0 0.0
      %3020 = vmatprep.subr.mxu0 0.0
      %3021 = vmatpush1.xpose.msra.mxu0 0.0
      %3022 = vmatprep.subr.mxu0 0.0
      %3023 = vmatpush1.xpose.msra.mxu0 0.0
      %3024 = vmatprep.subr.mxu0 0.0
      %3025 = vmatpush1.xpose.msra.mxu0 0.0
      %3026 = vmatprep.subr.mxu0 0.0
      %3027 = vmatpush1.xpose.msra.mxu0 0.0
      %3028 = vmatprep.subr.mxu0 0.0
      %3029 = vmatpush1.xpose.msra.mxu0 0.0
      %3030 = vmatprep.subr.mxu0 0.0
      %3031 = vmatpush1.xpose.msra.mxu0 0.0
      %3032 = vmatprep.subr.mxu0 0.0
      %3033 = vmatpush1.xpose.msra.mxu0 0.0
      %3034 = vmatprep.subr.mxu0 0.0
      %3035 = vmatpush1.xpose.msra.mxu0 0.0
      %3036 = vmatprep.subr.mxu0 0.0
      %3037 = vmatpush1.xpose.msra.mxu0 0.0
      %3038 = vmatprep.subr.mxu0 0.0
      %3039 = vmatpush1.xpose.msra.mxu0 0.0
      %3040 = vmatprep.subr.mxu0 0.0
      %3041 = vmatpush1.xpose.msra.mxu0 0.0
      %3042 = vmatprep.subr.mxu0 0.0
      %3043 = vmatpush1.xpose.msra.mxu0 0.0
      %3044 = vmatprep.subr.mxu0 0.0
      %3045 = vmatpush1.xpose.msra.mxu0 0.0
      %3046 = vmatprep.subr.mxu0 0.0
      %3047 = vmatpush1.xpose.msra.mxu0 0.0
      %3048 = vmatprep.subr.mxu0 0.0
      %3049 = vmatpush1.xpose.msra.mxu0 0.0
      %3050 = vmatprep.subr.mxu0 0.0
      %3051 = vmatpush1.xpose.msra.mxu0 0.0
      %3052 = vmatprep.subr.mxu0 0.0
      %3053 = vmatpush1.xpose.msra.mxu0 0.0
      %3054 = vmatprep.subr.mxu0 0.0
      %3055 = vmatpush1.xpose.msra.mxu0 0.0
      %3056 = vmatprep.subr.mxu0 0.0
      %3057 = vmatpush1.xpose.msra.mxu0 0.0
      %3058 = vmatprep.subr.mxu0 0.0
      %3059 = vmatpush1.xpose.msra.mxu0 0.0
      %3060 = vmatprep.subr.mxu0 0.0
      %3061 = vmatpush1.xpose.msra.mxu0 0.0
      %3062 = vmatprep.subr.mxu0 0.0
      %3063 = vmatpush1.xpose.msra.mxu0 0.0
      %3064 = vmatprep.subr.mxu0 0.0
      %3065 = vmatpush1.xpose.msra.mxu0 0.0
      %3066 = vmatprep.mubr.f32.mxu0 0.0
      %3067 = vmatmul.mubr.f32.gmra.mrb[0].mxu0 %v2970
      %v3068 = vpop.f32.mrb[0].mxu0
      %v3069 = vadd.f32 0.0, %v3068
      %v3070 = vpop.f32.mrb[0].mxu0
      %3071 = vmatprep.mubr.f32.mxu0 0.0
      %3072 = vmatmul.mubr.f32.gmra.mrb[0].mxu0 %v2972
      %v3073 = vpop.f32.mrb[0].mxu0
      %v3074 = vadd.f32 0.0, %v3073
      %v3075 = vpop.f32.mrb[0].mxu0
      %3076 = vmatprep.mubr.f32.mxu0 0.0
      %3077 = vmatmul.mubr.f32.gmra.mrb[0].mxu0 %v2974
      %v3078 = vpop.f32.mrb[0].mxu0
      %v3079 = vadd.f32 0.0, %v3078
      %v3080 = vpop.f32.mrb[0].mxu0
      %3081 = vmatprep.mubr.f32.mxu0 0.0
      %3082 = vmatmul.mubr.f32.gmra.mrb[0].mxu0 %v2976
      %v3083 = vpop.f32.mrb[0].mxu0
      %v3084 = vadd.f32 0.0, %v3083
      %v3085 = vpop.f32.mrb[0].mxu0
      %3086 = vmatprep.mubr.f32.mxu0 0.0
      %3087 = vmatmul.mubr.f32.gmra.mrb[0].mxu0 %v2978
      %v3088 = vpop.f32.mrb[0].mxu0
      %v3089 = vadd.f32 0.0, %v3088
      %v3090 = vpop.f32.mrb[0].mxu0
      %3091 = vmatprep.mubr.f32.mxu0 0.0
      %3092 = vmatmul.mubr.f32.gmra.mrb[0].mxu0 %v2980
      %v3093 = vpop.f32.mrb[0].mxu0
      %v3094 = vadd.f32 0.0, %v3093
      %v3095 = vpop.f32.mrb[0].mxu0
      %3096 = vmatprep.mubr.f32.mxu0 0.0
      %3097 = vmatmul.mubr.f32.gmra.mrb[0].mxu0 %v2982
      %v3098 = vpop.f32.mrb[0].mxu0
      %v3099 = vadd.f32 0.0, %v3098
      %v3100 = vpop.f32.mrb[0].mxu0
      %3101 = vmatprep.mubr.f32.mxu0 0.0
      %3102 = vmatmul.mubr.f32.gmra.mrb[0].mxu0 %v2984
      %v3103 = vpop.f32.mrb[0].mxu0
      %v3104 = vadd.f32 0.0, %v3103
      %v3105 = vpop.f32.mrb[0].mxu0
      %3106 = vdwg.mxu0
      %v3107 = vsel %vm942, %v3069, -inf
      %3108 = vmax.xlane.f32.xlu0 %v3107
      %v3109 = vpop.xlane.xlu0 %3108
      %v3110 = vsel %vm942, %v3074, -inf
      %3111 = vmax.xlane.f32.xlu0 %v3110
      %v3112 = vpop.xlane.xlu0 %3111
      %v3113 = vsel %vm942, %v3079, -inf
      %3114 = vmax.xlane.f32.xlu0 %v3113
      %v3115 = vpop.xlane.xlu0 %3114
      %v3116 = vsel %vm942, %v3084, -inf
      %3117 = vmax.xlane.f32.xlu0 %v3116
      %v3118 = vpop.xlane.xlu0 %3117
      %v3119 = vsel %vm942, %v3089, -inf
      %3120 = vmax.xlane.f32.xlu0 %v3119
      %v3121 = vpop.xlane.xlu0 %3120
      %v3122 = vsel %vm942, %v3094, -inf
      %3123 = vmax.xlane.f32.xlu0 %v3122
      %v3124 = vpop.xlane.xlu0 %3123
      %v3125 = vsel %vm942, %v3099, -inf
      %3126 = vmax.xlane.f32.xlu0 %v3125
      %v3127 = vpop.xlane.xlu0 %3126
      %v3128 = vsel %vm942, %v3104, -inf
      %3129 = vmax.xlane.f32.xlu0 %v3128
      %v3130 = vpop.xlane.xlu0 %3129
      %v3131 = vsub.f32 %v3069, %v3109
      %v3132 = vsub.f32 %v3074, %v3112
      %v3133 = vsub.f32 %v3079, %v3115
      %v3134 = vsub.f32 %v3084, %v3118
      %v3135 = vsub.f32 %v3089, %v3121
      %v3136 = vsub.f32 %v3094, %v3124
      %v3137 = vsub.f32 %v3099, %v3127
      %v3138 = vsub.f32 %v3104, %v3130
      %v3139 = vmul.f32 %v3131, 1.442695
      %v3140 = vpow.pop %v3139
      %v3141 = vmul.f32 %v3132, 1.442695
      %v3142 = vpow.pop %v3141
      %v3143 = vmul.f32 %v3133, 1.442695
      %v3144 = vpow.pop %v3143
      %v3145 = vmul.f32 %v3134, 1.442695
      %v3146 = vpow.pop %v3145
      %v3147 = vmul.f32 %v3135, 1.442695
      %v3148 = vpow.pop %v3147
      %v3149 = vmul.f32 %v3136, 1.442695
      %v3150 = vpow.pop %v3149
      %v3151 = vmul.f32 %v3137, 1.442695
      %v3152 = vpow.pop %v3151
      %v3153 = vmul.f32 %v3138, 1.442695
      %v3154 = vpow.pop %v3153
      %v3155 = vsel %vm942, %v3140, 0.0
      %3156 = vadd.xlane.f32.xlu0 %v3155
      %v3157 = vpop.xlane.xlu0 %3156
      %v3158 = vsel %vm942, %v3142, 0.0
      %3159 = vadd.xlane.f32.xlu0 %v3158
      %v3160 = vpop.xlane.xlu0 %3159
      %v3161 = vsel %vm942, %v3144, 0.0
      %3162 = vadd.xlane.f32.xlu0 %v3161
      %v3163 = vpop.xlane.xlu0 %3162
      %v3164 = vsel %vm942, %v3146, 0.0
      %3165 = vadd.xlane.f32.xlu0 %v3164
      %v3166 = vpop.xlane.xlu0 %3165
      %v3167 = vsel %vm942, %v3148, 0.0
      %3168 = vadd.xlane.f32.xlu0 %v3167
      %v3169 = vpop.xlane.xlu0 %3168
      %v3170 = vsel %vm942, %v3150, 0.0
      %3171 = vadd.xlane.f32.xlu0 %v3170
      %v3172 = vpop.xlane.xlu0 %3171
      %v3173 = vsel %vm942, %v3152, 0.0
      %3174 = vadd.xlane.f32.xlu0 %v3173
      %v3175 = vpop.xlane.xlu0 %3174
      %v3176 = vsel %vm942, %v3154, 0.0
      %3177 = vadd.xlane.f32.xlu0 %v3176
      %v3178 = vpop.xlane.xlu0 %3177
      %v3179 = vrcp.pop %v3157
      %v3180 = vrcp.pop %v3160
      %v3181 = vrcp.pop %v3163
      %v3182 = vrcp.pop %v3166
      %v3183 = vrcp.pop %v3169
      %v3184 = vrcp.pop %v3172
      %v3185 = vrcp.pop %v3175
      %v3186 = vrcp.pop %v3178
      %v3187 = vmul.f32 %v3140, %v3179
      %v3188 = vmul.f32 %v3142, %v3180
      %v3189 = vmul.f32 %v3144, %v3181
      %v3190 = vmul.f32 %v3146, %v3182
      %v3191 = vmul.f32 %v3148, %v3183
      %v3192 = vmul.f32 %v3150, %v3184
      %v3193 = vmul.f32 %v3152, %v3185
      %v3194 = vmul.f32 %v3154, %v3186
      %3195 = vrot.lane.b32.xlu0 %v742, 56
      %v3196 = vpop.permute.xlu0 %3195
      %3197 = vrot.lane.b32.xlu0 %v747, 56
      %v3198 = vpop.permute.xlu0 %3197
      %3199 = vrot.lane.b32.xlu0 %v752, 56
      %v3200 = vpop.permute.xlu0 %3199
      %3201 = vrot.lane.b32.xlu0 %v757, 56
      %v3202 = vpop.permute.xlu0 %3201
      %3203 = vrot.lane.b32.xlu0 %v762, 56
      %v3204 = vpop.permute.xlu0 %3203
      %3205 = vrot.lane.b32.xlu0 %v767, 56
      %v3206 = vpop.permute.xlu0 %3205
      %3207 = vrot.lane.b32.xlu0 %v772, 56
      %v3208 = vpop.permute.xlu0 %3207
      %3209 = vrot.lane.b32.xlu0 %v777, 56
      %v3210 = vpop.permute.xlu0 %3209
      %v3220 = vsel %vm942, %v3187, 0
      %v3223 = vsel %vm942, %v3188, 0
      %v3226 = vsel %vm942, %v3189, 0
      %v3229 = vsel %vm942, %v3190, 0
      %v3232 = vsel %vm942, %v3191, 0
      %v3235 = vsel %vm942, %v3192, 0
      %v3238 = vsel %vm942, %v3193, 0
      %v3241 = vsel %vm942, %v3194, 0
      %3243 = vmatprep.subr.mxu0 0.0
      %3244 = vmatpush1.msra.mxu0 %v3196
      %3245 = vmatprep.subr.mxu0 0.0
      %3246 = vmatpush1.msra.mxu0 %v3198
      %3247 = vmatprep.subr.mxu0 0.0
      %3248 = vmatpush1.msra.mxu0 %v3200
      %3249 = vmatprep.subr.mxu0 0.0
      %3250 = vmatpush1.msra.mxu0 %v3202
      %3251 = vmatprep.subr.mxu0 0.0
      %3252 = vmatpush1.msra.mxu0 %v3204
      %3253 = vmatprep.subr.mxu0 0.0
      %3254 = vmatpush1.msra.mxu0 %v3206
      %3255 = vmatprep.subr.mxu0 0.0
      %3256 = vmatpush1.msra.mxu0 %v3208
      %3257 = vmatprep.subr.mxu0 0.0
      %3258 = vmatpush1.msra.mxu0 %v3210
      %3259 = vmatprep.subr.mxu0 0.0
      %3260 = vmatpush1.msra.mxu0 0.0
      %3261 = vmatprep.subr.mxu0 0.0
      %3262 = vmatpush1.msra.mxu0 0.0
      %3263 = vmatprep.subr.mxu0 0.0
      %3264 = vmatpush1.msra.mxu0 0.0
      %3265 = vmatprep.subr.mxu0 0.0
      %3266 = vmatpush1.msra.mxu0 0.0
      %3267 = vmatprep.subr.mxu0 0.0
      %3268 = vmatpush1.msra.mxu0 0.0
      %3269 = vmatprep.subr.mxu0 0.0
      %3270 = vmatpush1.msra.mxu0 0.0
      %3271 = vmatprep.subr.mxu0 0.0
      %3272 = vmatpush1.msra.mxu0 0.0
      %3273 = vmatprep.subr.mxu0 0.0
      %3274 = vmatpush1.msra.mxu0 0.0
      %3275 = vmatprep.subr.mxu0 0.0
      %3276 = vmatpush1.msra.mxu0 0.0
      %3277 = vmatprep.subr.mxu0 0.0
      %3278 = vmatpush1.msra.mxu0 0.0
      %3279 = vmatprep.subr.mxu0 0.0
      %3280 = vmatpush1.msra.mxu0 0.0
      %3281 = vmatprep.subr.mxu0 0.0
      %3282 = vmatpush1.msra.mxu0 0.0
      %3283 = vmatprep.subr.mxu0 0.0
      %3284 = vmatpush1.msra.mxu0 0.0
      %3285 = vmatprep.subr.mxu0 0.0
      %3286 = vmatpush1.msra.mxu0 0.0
      %3287 = vmatprep.subr.mxu0 0.0
      %3288 = vmatpush1.msra.mxu0 0.0
      %3289 = vmatprep.subr.mxu0 0.0
      %3290 = vmatpush1.msra.mxu0 0.0
      %3291 = vmatprep.subr.mxu0 0.0
      %3292 = vmatpush1.msra.mxu0 0.0
      %3293 = vmatprep.subr.mxu0 0.0
      %3294 = vmatpush1.msra.mxu0 0.0
      %3295 = vmatprep.subr.mxu0 0.0
      %3296 = vmatpush1.msra.mxu0 0.0
      %3297 = vmatprep.subr.mxu0 0.0
      %3298 = vmatpush1.msra.mxu0 0.0
      %3299 = vmatprep.subr.mxu0 0.0
      %3300 = vmatpush1.msra.mxu0 0.0
      %3301 = vmatprep.subr.mxu0 0.0
      %3302 = vmatpush1.msra.mxu0 0.0
      %3303 = vmatprep.subr.mxu0 0.0
      %3304 = vmatpush1.msra.mxu0 0.0
      %3305 = vmatprep.subr.mxu0 0.0
      %3306 = vmatpush1.msra.mxu0 0.0
      %3307 = vmatprep.mubr.f32.mxu0 0.0
      %3308 = vmatmul.mubr.f32.gmra.mrb[0].mxu0 %v3220
      %v3309 = vpop.f32.mrb[0].mxu0
      %v3310 = vadd.f32 0.0, %v3309
      %v3311 = vpop.f32.mrb[0].mxu0
      %3312 = vmatprep.mubr.f32.mxu0 0.0
      %3313 = vmatmul.mubr.f32.gmra.mrb[0].mxu0 %v3223
      %v3314 = vpop.f32.mrb[0].mxu0
      %v3315 = vadd.f32 0.0, %v3314
      %v3316 = vpop.f32.mrb[0].mxu0
      %3317 = vmatprep.mubr.f32.mxu0 0.0
      %3318 = vmatmul.mubr.f32.gmra.mrb[0].mxu0 %v3226
      %v3319 = vpop.f32.mrb[0].mxu0
      %v3320 = vadd.f32 0.0, %v3319
      %v3321 = vpop.f32.mrb[0].mxu0
      %3322 = vmatprep.mubr.f32.mxu0 0.0
      %3323 = vmatmul.mubr.f32.gmra.mrb[0].mxu0 %v3229
      %v3324 = vpop.f32.mrb[0].mxu0
      %v3325 = vadd.f32 0.0, %v3324
      %v3326 = vpop.f32.mrb[0].mxu0
      %3327 = vmatprep.mubr.f32.mxu0 0.0
      %3328 = vmatmul.mubr.f32.gmra.mrb[0].mxu0 %v3232
      %v3329 = vpop.f32.mrb[0].mxu0
      %v3330 = vadd.f32 0.0, %v3329
      %v3331 = vpop.f32.mrb[0].mxu0
      %3332 = vmatprep.mubr.f32.mxu0 0.0
      %3333 = vmatmul.mubr.f32.gmra.mrb[0].mxu0 %v3235
      %v3334 = vpop.f32.mrb[0].mxu0
      %v3335 = vadd.f32 0.0, %v3334
      %v3336 = vpop.f32.mrb[0].mxu0
      %3337 = vmatprep.mubr.f32.mxu0 0.0
      %3338 = vmatmul.mubr.f32.gmra.mrb[0].mxu0 %v3238
      %v3339 = vpop.f32.mrb[0].mxu0
      %v3340 = vadd.f32 0.0, %v3339
      %v3341 = vpop.f32.mrb[0].mxu0
      %3342 = vmatprep.mubr.f32.mxu0 0.0
      %3343 = vmatmul.mubr.f32.gmra.mrb[0].mxu0 %v3241
      %v3344 = vpop.f32.mrb[0].mxu0
      %v3345 = vadd.f32 0.0, %v3344
      %v3346 = vpop.f32.mrb[0].mxu0
      %3347 = vdwg.mxu0
      %3348 = vrot.lane.b32.xlu0 %v742, 112
      %v3349 = vpop.permute.xlu0 %3348
      %3350 = vrot.lane.b32.xlu0 %v747, 112
      %v3351 = vpop.permute.xlu0 %3350
      %3352 = vrot.lane.b32.xlu0 %v752, 112
      %v3353 = vpop.permute.xlu0 %3352
      %3354 = vrot.lane.b32.xlu0 %v757, 112
      %v3355 = vpop.permute.xlu0 %3354
      %3356 = vrot.lane.b32.xlu0 %v762, 112
      %v3357 = vpop.permute.xlu0 %3356
      %3358 = vrot.lane.b32.xlu0 %v767, 112
      %v3359 = vpop.permute.xlu0 %3358
      %3360 = vrot.lane.b32.xlu0 %v772, 112
      %v3361 = vpop.permute.xlu0 %3360
      %3362 = vrot.lane.b32.xlu0 %v777, 112
      %v3363 = vpop.permute.xlu0 %3362
      %3364 = vrot.lane.b32.xlu0 %v742, 80
      %v3365 = vpop.permute.xlu0 %3364
      %3366 = vrot.lane.b32.xlu0 %v747, 80
      %v3367 = vpop.permute.xlu0 %3366
      %3368 = vrot.lane.b32.xlu0 %v752, 80
      %v3369 = vpop.permute.xlu0 %3368
      %3370 = vrot.lane.b32.xlu0 %v757, 80
      %v3371 = vpop.permute.xlu0 %3370
      %3372 = vrot.lane.b32.xlu0 %v762, 80
      %v3373 = vpop.permute.xlu0 %3372
      %3374 = vrot.lane.b32.xlu0 %v767, 80
      %v3375 = vpop.permute.xlu0 %3374
      %3376 = vrot.lane.b32.xlu0 %v772, 80
      %v3377 = vpop.permute.xlu0 %3376
      %3378 = vrot.lane.b32.xlu0 %v777, 80
      %v3379 = vpop.permute.xlu0 %3378
      %v3380 = vsel %vm804, %v3349, 0
      %v3382 = vsel %vm804, %v3351, 0
      %v3384 = vsel %vm804, %v3353, 0
      %v3386 = vsel %vm804, %v3355, 0
      %v3388 = vsel %vm804, %v3357, 0
      %v3390 = vsel %vm804, %v3359, 0
      %v3392 = vsel %vm804, %v3361, 0
      %v3394 = vsel %vm804, %v3363, 0
      %v3396 = vsel %vm804, %v3365, 0
      %v3398 = vsel %vm804, %v3367, 0
      %v3400 = vsel %vm804, %v3369, 0
      %v3402 = vsel %vm804, %v3371, 0
      %v3404 = vsel %vm804, %v3373, 0
      %v3406 = vsel %vm804, %v3375, 0
      %v3408 = vsel %vm804, %v3377, 0
      %v3410 = vsel %vm804, %v3379, 0
      %3412 = vmatprep.subr.mxu0 0.0
      %3413 = vmatpush1.xpose.msra.mxu0 %v3396
      %3414 = vmatprep.subr.mxu0 0.0
      %3415 = vmatpush1.xpose.msra.mxu0 %v3398
      %3416 = vmatprep.subr.mxu0 0.0
      %3417 = vmatpush1.xpose.msra.mxu0 %v3400
      %3418 = vmatprep.subr.mxu0 0.0
      %3419 = vmatpush1.xpose.msra.mxu0 %v3402
      %3420 = vmatprep.subr.mxu0 0.0
      %3421 = vmatpush1.xpose.msra.mxu0 %v3404
      %3422 = vmatprep.subr.mxu0 0.0
      %3423 = vmatpush1.xpose.msra.mxu0 %v3406
      %3424 = vmatprep.subr.mxu0 0.0
      %3425 = vmatpush1.xpose.msra.mxu0 %v3408
      %3426 = vmatprep.subr.mxu0 0.0
      %3427 = vmatpush1.xpose.msra.mxu0 %v3410
      %3428 = vmatprep.subr.mxu0 0.0
      %3429 = vmatpush1.xpose.msra.mxu0 0.0
      %3430 = vmatprep.subr.mxu0 0.0
      %3431 = vmatpush1.xpose.msra.mxu0 0.0
      %3432 = vmatprep.subr.mxu0 0.0
      %3433 = vmatpush1.xpose.msra.mxu0 0.0
      %3434 = vmatprep.subr.mxu0 0.0
      %3435 = vmatpush1.xpose.msra.mxu0 0.0
      %3436 = vmatprep.subr.mxu0 0.0
      %3437 = vmatpush1.xpose.msra.mxu0 0.0
      %3438 = vmatprep.subr.mxu0 0.0
      %3439 = vmatpush1.xpose.msra.mxu0 0.0
      %3440 = vmatprep.subr.mxu0 0.0
      %3441 = vmatpush1.xpose.msra.mxu0 0.0
      %3442 = vmatprep.subr.mxu0 0.0
      %3443 = vmatpush1.xpose.msra.mxu0 0.0
      %3444 = vmatprep.subr.mxu0 0.0
      %3445 = vmatpush1.xpose.msra.mxu0 0.0
      %3446 = vmatprep.subr.mxu0 0.0
      %3447 = vmatpush1.xpose.msra.mxu0 0.0
      %3448 = vmatprep.subr.mxu0 0.0
      %3449 = vmatpush1.xpose.msra.mxu0 0.0
      %3450 = vmatprep.subr.mxu0 0.0
      %3451 = vmatpush1.xpose.msra.mxu0 0.0
      %3452 = vmatprep.subr.mxu0 0.0
      %3453 = vmatpush1.xpose.msra.mxu0 0.0
      %3454 = vmatprep.subr.mxu0 0.0
      %3455 = vmatpush1.xpose.msra.mxu0 0.0
      %3456 = vmatprep.subr.mxu0 0.0
      %3457 = vmatpush1.xpose.msra.mxu0 0.0
      %3458 = vmatprep.subr.mxu0 0.0
      %3459 = vmatpush1.xpose.msra.mxu0 0.0
      %3460 = vmatprep.subr.mxu0 0.0
      %3461 = vmatpush1.xpose.msra.mxu0 0.0
      %3462 = vmatprep.subr.mxu0 0.0
      %3463 = vmatpush1.xpose.msra.mxu0 0.0
      %3464 = vmatprep.subr.mxu0 0.0
      %3465 = vmatpush1.xpose.msra.mxu0 0.0
      %3466 = vmatprep.subr.mxu0 0.0
      %3467 = vmatpush1.xpose.msra.mxu0 0.0
      %3468 = vmatprep.subr.mxu0 0.0
      %3469 = vmatpush1.xpose.msra.mxu0 0.0
      %3470 = vmatprep.subr.mxu0 0.0
      %3471 = vmatpush1.xpose.msra.mxu0 0.0
      %3472 = vmatprep.subr.mxu0 0.0
      %3473 = vmatpush1.xpose.msra.mxu0 0.0
      %3474 = vmatprep.subr.mxu0 0.0
      %3475 = vmatpush1.xpose.msra.mxu0 0.0
      %3476 = vmatprep.mubr.f32.mxu0 0.0
      %3477 = vmatmul.mubr.f32.gmra.mrb[0].mxu0 %v3380
      %v3478 = vpop.f32.mrb[0].mxu0
      %v3479 = vadd.f32 0.0, %v3478
      %v3480 = vpop.f32.mrb[0].mxu0
      %3481 = vmatprep.mubr.f32.mxu0 0.0
      %3482 = vmatmul.mubr.f32.gmra.mrb[0].mxu0 %v3382
      %v3483 = vpop.f32.mrb[0].mxu0
      %v3484 = vadd.f32 0.0, %v3483
      %v3485 = vpop.f32.mrb[0].mxu0
      %3486 = vmatprep.mubr.f32.mxu0 0.0
      %3487 = vmatmul.mubr.f32.gmra.mrb[0].mxu0 %v3384
      %v3488 = vpop.f32.mrb[0].mxu0
      %v3489 = vadd.f32 0.0, %v3488
      %v3490 = vpop.f32.mrb[0].mxu0
      %3491 = vmatprep.mubr.f32.mxu0 0.0
      %3492 = vmatmul.mubr.f32.gmra.mrb[0].mxu0 %v3386
      %v3493 = vpop.f32.mrb[0].mxu0
      %v3494 = vadd.f32 0.0, %v3493
      %v3495 = vpop.f32.mrb[0].mxu0
      %3496 = vmatprep.mubr.f32.mxu0 0.0
      %3497 = vmatmul.mubr.f32.gmra.mrb[0].mxu0 %v3388
      %v3498 = vpop.f32.mrb[0].mxu0
      %v3499 = vadd.f32 0.0, %v3498
      %v3500 = vpop.f32.mrb[0].mxu0
      %3501 = vmatprep.mubr.f32.mxu0 0.0
      %3502 = vmatmul.mubr.f32.gmra.mrb[0].mxu0 %v3390
      %v3503 = vpop.f32.mrb[0].mxu0
      %v3504 = vadd.f32 0.0, %v3503
      %v3505 = vpop.f32.mrb[0].mxu0
      %3506 = vmatprep.mubr.f32.mxu0 0.0
      %3507 = vmatmul.mubr.f32.gmra.mrb[0].mxu0 %v3392
      %v3508 = vpop.f32.mrb[0].mxu0
      %v3509 = vadd.f32 0.0, %v3508
      %v3510 = vpop.f32.mrb[0].mxu0
      %3511 = vmatprep.mubr.f32.mxu0 0.0
      %3512 = vmatmul.mubr.f32.gmra.mrb[0].mxu0 %v3394
      %v3513 = vpop.f32.mrb[0].mxu0
      %v3514 = vadd.f32 0.0, %v3513
      %v3515 = vpop.f32.mrb[0].mxu0
      %3516 = vdwg.mxu0
      %v3517 = vsel %vm942, %v3479, -inf
      %3518 = vmax.xlane.f32.xlu0 %v3517
      %v3519 = vpop.xlane.xlu0 %3518
      %v3520 = vsel %vm942, %v3484, -inf
      %3521 = vmax.xlane.f32.xlu0 %v3520
      %v3522 = vpop.xlane.xlu0 %3521
      %v3523 = vsel %vm942, %v3489, -inf
      %3524 = vmax.xlane.f32.xlu0 %v3523
      %v3525 = vpop.xlane.xlu0 %3524
      %v3526 = vsel %vm942, %v3494, -inf
      %3527 = vmax.xlane.f32.xlu0 %v3526
      %v3528 = vpop.xlane.xlu0 %3527
      %v3529 = vsel %vm942, %v3499, -inf
      %3530 = vmax.xlane.f32.xlu0 %v3529
      %v3531 = vpop.xlane.xlu0 %3530
      %v3532 = vsel %vm942, %v3504, -inf
      %3533 = vmax.xlane.f32.xlu0 %v3532
      %v3534 = vpop.xlane.xlu0 %3533
      %v3535 = vsel %vm942, %v3509, -inf
      %3536 = vmax.xlane.f32.xlu0 %v3535
      %v3537 = vpop.xlane.xlu0 %3536
      %v3538 = vsel %vm942, %v3514, -inf
      %3539 = vmax.xlane.f32.xlu0 %v3538
      %v3540 = vpop.xlane.xlu0 %3539
      %v3541 = vsub.f32 %v3479, %v3519
      %v3542 = vsub.f32 %v3484, %v3522
      %v3543 = vsub.f32 %v3489, %v3525
      %v3544 = vsub.f32 %v3494, %v3528
      %v3545 = vsub.f32 %v3499, %v3531
      %v3546 = vsub.f32 %v3504, %v3534
      %v3547 = vsub.f32 %v3509, %v3537
      %v3548 = vsub.f32 %v3514, %v3540
      %v3549 = vmul.f32 %v3541, 1.442695
      %v3550 = vpow.pop %v3549
      %v3551 = vmul.f32 %v3542, 1.442695
      %v3552 = vpow.pop %v3551
      %v3553 = vmul.f32 %v3543, 1.442695
      %v3554 = vpow.pop %v3553
      %v3555 = vmul.f32 %v3544, 1.442695
      %v3556 = vpow.pop %v3555
      %v3557 = vmul.f32 %v3545, 1.442695
      %v3558 = vpow.pop %v3557
      %v3559 = vmul.f32 %v3546, 1.442695
      %v3560 = vpow.pop %v3559
      %v3561 = vmul.f32 %v3547, 1.442695
      %v3562 = vpow.pop %v3561
      %v3563 = vmul.f32 %v3548, 1.442695
      %v3564 = vpow.pop %v3563
      %v3565 = vsel %vm942, %v3550, 0.0
      %3566 = vadd.xlane.f32.xlu0 %v3565
      %v3567 = vpop.xlane.xlu0 %3566
      %v3568 = vsel %vm942, %v3552, 0.0
      %3569 = vadd.xlane.f32.xlu0 %v3568
      %v3570 = vpop.xlane.xlu0 %3569
      %v3571 = vsel %vm942, %v3554, 0.0
      %3572 = vadd.xlane.f32.xlu0 %v3571
      %v3573 = vpop.xlane.xlu0 %3572
      %v3574 = vsel %vm942, %v3556, 0.0
      %3575 = vadd.xlane.f32.xlu0 %v3574
      %v3576 = vpop.xlane.xlu0 %3575
      %v3577 = vsel %vm942, %v3558, 0.0
      %3578 = vadd.xlane.f32.xlu0 %v3577
      %v3579 = vpop.xlane.xlu0 %3578
      %v3580 = vsel %vm942, %v3560, 0.0
      %3581 = vadd.xlane.f32.xlu0 %v3580
      %v3582 = vpop.xlane.xlu0 %3581
      %v3583 = vsel %vm942, %v3562, 0.0
      %3584 = vadd.xlane.f32.xlu0 %v3583
      %v3585 = vpop.xlane.xlu0 %3584
      %v3586 = vsel %vm942, %v3564, 0.0
      %3587 = vadd.xlane.f32.xlu0 %v3586
      %v3588 = vpop.xlane.xlu0 %3587
      %v3589 = vrcp.pop %v3567
      %v3590 = vrcp.pop %v3570
      %v3591 = vrcp.pop %v3573
      %v3592 = vrcp.pop %v3576
      %v3593 = vrcp.pop %v3579
      %v3594 = vrcp.pop %v3582
      %v3595 = vrcp.pop %v3585
      %v3596 = vrcp.pop %v3588
      %v3597 = vmul.f32 %v3550, %v3589
      %v3598 = vmul.f32 %v3552, %v3590
      %v3599 = vmul.f32 %v3554, %v3591
      %v3600 = vmul.f32 %v3556, %v3592
      %v3601 = vmul.f32 %v3558, %v3593
      %v3602 = vmul.f32 %v3560, %v3594
      %v3603 = vmul.f32 %v3562, %v3595
      %v3604 = vmul.f32 %v3564, %v3596
      %3605 = vrot.lane.b32.xlu0 %v742, 48
      %v3606 = vpop.permute.xlu0 %3605
      %3607 = vrot.lane.b32.xlu0 %v747, 48
      %v3608 = vpop.permute.xlu0 %3607
      %3609 = vrot.lane.b32.xlu0 %v752, 48
      %v3610 = vpop.permute.xlu0 %3609
      %3611 = vrot.lane.b32.xlu0 %v757, 48
      %v3612 = vpop.permute.xlu0 %3611
      %3613 = vrot.lane.b32.xlu0 %v762, 48
      %v3614 = vpop.permute.xlu0 %3613
      %3615 = vrot.lane.b32.xlu0 %v767, 48
      %v3616 = vpop.permute.xlu0 %3615
      %3617 = vrot.lane.b32.xlu0 %v772, 48
      %v3618 = vpop.permute.xlu0 %3617
      %3619 = vrot.lane.b32.xlu0 %v777, 48
      %v3620 = vpop.permute.xlu0 %3619
      %v3630 = vsel %vm942, %v3597, 0
      %v3633 = vsel %vm942, %v3598, 0
      %v3636 = vsel %vm942, %v3599, 0
      %v3639 = vsel %vm942, %v3600, 0
      %v3642 = vsel %vm942, %v3601, 0
      %v3645 = vsel %vm942, %v3602, 0
      %v3648 = vsel %vm942, %v3603, 0
      %v3651 = vsel %vm942, %v3604, 0
      %3653 = vmatprep.subr.mxu0 0.0
      %3654 = vmatpush1.msra.mxu0 %v3606
      %3655 = vmatprep.subr.mxu0 0.0
      %3656 = vmatpush1.msra.mxu0 %v3608
      %3657 = vmatprep.subr.mxu0 0.0
      %3658 = vmatpush1.msra.mxu0 %v3610
      %3659 = vmatprep.subr.mxu0 0.0
      %3660 = vmatpush1.msra.mxu0 %v3612
      %3661 = vmatprep.subr.mxu0 0.0
      %3662 = vmatpush1.msra.mxu0 %v3614
      %3663 = vmatprep.subr.mxu0 0.0
      %3664 = vmatpush1.msra.mxu0 %v3616
      %3665 = vmatprep.subr.mxu0 0.0
      %3666 = vmatpush1.msra.mxu0 %v3618
      %3667 = vmatprep.subr.mxu0 0.0
      %3668 = vmatpush1.msra.mxu0 %v3620
      %3669 = vmatprep.subr.mxu0 0.0
      %3670 = vmatpush1.msra.mxu0 0.0
      %3671 = vmatprep.subr.mxu0 0.0
      %3672 = vmatpush1.msra.mxu0 0.0
      %3673 = vmatprep.subr.mxu0 0.0
      %3674 = vmatpush1.msra.mxu0 0.0
      %3675 = vmatprep.subr.mxu0 0.0
      %3676 = vmatpush1.msra.mxu0 0.0
      %3677 = vmatprep.subr.mxu0 0.0
      %3678 = vmatpush1.msra.mxu0 0.0
      %3679 = vmatprep.subr.mxu0 0.0
      %3680 = vmatpush1.msra.mxu0 0.0
      %3681 = vmatprep.subr.mxu0 0.0
      %3682 = vmatpush1.msra.mxu0 0.0
      %3683 = vmatprep.subr.mxu0 0.0
      %3684 = vmatpush1.msra.mxu0 0.0
      %3685 = vmatprep.subr.mxu0 0.0
      %3686 = vmatpush1.msra.mxu0 0.0
      %3687 = vmatprep.subr.mxu0 0.0
      %3688 = vmatpush1.msra.mxu0 0.0
      %3689 = vmatprep.subr.mxu0 0.0
      %3690 = vmatpush1.msra.mxu0 0.0
      %3691 = vmatprep.subr.mxu0 0.0
      %3692 = vmatpush1.msra.mxu0 0.0
      %3693 = vmatprep.subr.mxu0 0.0
      %3694 = vmatpush1.msra.mxu0 0.0
      %3695 = vmatprep.subr.mxu0 0.0
      %3696 = vmatpush1.msra.mxu0 0.0
      %3697 = vmatprep.subr.mxu0 0.0
      %3698 = vmatpush1.msra.mxu0 0.0
      %3699 = vmatprep.subr.mxu0 0.0
      %3700 = vmatpush1.msra.mxu0 0.0
      %3701 = vmatprep.subr.mxu0 0.0
      %3702 = vmatpush1.msra.mxu0 0.0
      %3703 = vmatprep.subr.mxu0 0.0
      %3704 = vmatpush1.msra.mxu0 0.0
      %3705 = vmatprep.subr.mxu0 0.0
      %3706 = vmatpush1.msra.mxu0 0.0
      %3707 = vmatprep.subr.mxu0 0.0
      %3708 = vmatpush1.msra.mxu0 0.0
      %3709 = vmatprep.subr.mxu0 0.0
      %3710 = vmatpush1.msra.mxu0 0.0
      %3711 = vmatprep.subr.mxu0 0.0
      %3712 = vmatpush1.msra.mxu0 0.0
      %3713 = vmatprep.subr.mxu0 0.0
      %3714 = vmatpush1.msra.mxu0 0.0
      %3715 = vmatprep.subr.mxu0 0.0
      %3716 = vmatpush1.msra.mxu0 0.0
      %3717 = vmatprep.mubr.f32.mxu0 0.0
      %3718 = vmatmul.mubr.f32.gmra.mrb[0].mxu0 %v3630
      %v3719 = vpop.f32.mrb[0].mxu0
      %v3720 = vadd.f32 0.0, %v3719
      %v3721 = vpop.f32.mrb[0].mxu0
      %3722 = vmatprep.mubr.f32.mxu0 0.0
      %3723 = vmatmul.mubr.f32.gmra.mrb[0].mxu0 %v3633
      %v3724 = vpop.f32.mrb[0].mxu0
      %v3725 = vadd.f32 0.0, %v3724
      %v3726 = vpop.f32.mrb[0].mxu0
      %3727 = vmatprep.mubr.f32.mxu0 0.0
      %3728 = vmatmul.mubr.f32.gmra.mrb[0].mxu0 %v3636
      %v3729 = vpop.f32.mrb[0].mxu0
      %v3730 = vadd.f32 0.0, %v3729
      %v3731 = vpop.f32.mrb[0].mxu0
      %3732 = vmatprep.mubr.f32.mxu0 0.0
      %3733 = vmatmul.mubr.f32.gmra.mrb[0].mxu0 %v3639
      %v3734 = vpop.f32.mrb[0].mxu0
      %v3735 = vadd.f32 0.0, %v3734
      %v3736 = vpop.f32.mrb[0].mxu0
      %3737 = vmatprep.mubr.f32.mxu0 0.0
      %3738 = vmatmul.mubr.f32.gmra.mrb[0].mxu0 %v3642
      %v3739 = vpop.f32.mrb[0].mxu0
      %v3740 = vadd.f32 0.0, %v3739
      %v3741 = vpop.f32.mrb[0].mxu0
      %3742 = vmatprep.mubr.f32.mxu0 0.0
      %3743 = vmatmul.mubr.f32.gmra.mrb[0].mxu0 %v3645
      %v3744 = vpop.f32.mrb[0].mxu0
      %v3745 = vadd.f32 0.0, %v3744
      %v3746 = vpop.f32.mrb[0].mxu0
      %3747 = vmatprep.mubr.f32.mxu0 0.0
      %3748 = vmatmul.mubr.f32.gmra.mrb[0].mxu0 %v3648
      %v3749 = vpop.f32.mrb[0].mxu0
      %v3750 = vadd.f32 0.0, %v3749
      %v3751 = vpop.f32.mrb[0].mxu0
      %3752 = vmatprep.mubr.f32.mxu0 0.0
      %3753 = vmatmul.mubr.f32.gmra.mrb[0].mxu0 %v3651
      %v3754 = vpop.f32.mrb[0].mxu0
      %v3755 = vadd.f32 0.0, %v3754
      %v3756 = vpop.f32.mrb[0].mxu0
      %3757 = vdwg.mxu0
      %3758 = vrot.lane.b32.xlu0 %v742, 104
      %v3759 = vpop.permute.xlu0 %3758
      %3760 = vrot.lane.b32.xlu0 %v747, 104
      %v3761 = vpop.permute.xlu0 %3760
      %3762 = vrot.lane.b32.xlu0 %v752, 104
      %v3763 = vpop.permute.xlu0 %3762
      %3764 = vrot.lane.b32.xlu0 %v757, 104
      %v3765 = vpop.permute.xlu0 %3764
      %3766 = vrot.lane.b32.xlu0 %v762, 104
      %v3767 = vpop.permute.xlu0 %3766
      %3768 = vrot.lane.b32.xlu0 %v767, 104
      %v3769 = vpop.permute.xlu0 %3768
      %3770 = vrot.lane.b32.xlu0 %v772, 104
      %v3771 = vpop.permute.xlu0 %3770
      %3772 = vrot.lane.b32.xlu0 %v777, 104
      %v3773 = vpop.permute.xlu0 %3772
      %3774 = vrot.lane.b32.xlu0 %v742, 72
      %v3775 = vpop.permute.xlu0 %3774
      %3776 = vrot.lane.b32.xlu0 %v747, 72
      %v3777 = vpop.permute.xlu0 %3776
      %3778 = vrot.lane.b32.xlu0 %v752, 72
      %v3779 = vpop.permute.xlu0 %3778
      %3780 = vrot.lane.b32.xlu0 %v757, 72
      %v3781 = vpop.permute.xlu0 %3780
      %3782 = vrot.lane.b32.xlu0 %v762, 72
      %v3783 = vpop.permute.xlu0 %3782
      %3784 = vrot.lane.b32.xlu0 %v767, 72
      %v3785 = vpop.permute.xlu0 %3784
      %3786 = vrot.lane.b32.xlu0 %v772, 72
      %v3787 = vpop.permute.xlu0 %3786
      %3788 = vrot.lane.b32.xlu0 %v777, 72
      %v3789 = vpop.permute.xlu0 %3788
      %v3790 = vsel %vm804, %v3759, 0
      %v3792 = vsel %vm804, %v3761, 0
      %v3794 = vsel %vm804, %v3763, 0
      %v3796 = vsel %vm804, %v3765, 0
      %v3798 = vsel %vm804, %v3767, 0
      %v3800 = vsel %vm804, %v3769, 0
      %v3802 = vsel %vm804, %v3771, 0
      %v3804 = vsel %vm804, %v3773, 0
      %v3806 = vsel %vm804, %v3775, 0
      %v3808 = vsel %vm804, %v3777, 0
      %v3810 = vsel %vm804, %v3779, 0
      %v3812 = vsel %vm804, %v3781, 0
      %v3814 = vsel %vm804, %v3783, 0
      %v3816 = vsel %vm804, %v3785, 0
      %v3818 = vsel %vm804, %v3787, 0
      %v3820 = vsel %vm804, %v3789, 0
      %3822 = vmatprep.subr.mxu0 0.0
      %3823 = vmatpush1.xpose.msra.mxu0 %v3806
      %3824 = vmatprep.subr.mxu0 0.0
      %3825 = vmatpush1.xpose.msra.mxu0 %v3808
      %3826 = vmatprep.subr.mxu0 0.0
      %3827 = vmatpush1.xpose.msra.mxu0 %v3810
      %3828 = vmatprep.subr.mxu0 0.0
      %3829 = vmatpush1.xpose.msra.mxu0 %v3812
      %3830 = vmatprep.subr.mxu0 0.0
      %3831 = vmatpush1.xpose.msra.mxu0 %v3814
      %3832 = vmatprep.subr.mxu0 0.0
      %3833 = vmatpush1.xpose.msra.mxu0 %v3816
      %3834 = vmatprep.subr.mxu0 0.0
      %3835 = vmatpush1.xpose.msra.mxu0 %v3818
      %3836 = vmatprep.subr.mxu0 0.0
      %3837 = vmatpush1.xpose.msra.mxu0 %v3820
      %3838 = vmatprep.subr.mxu0 0.0
      %3839 = vmatpush1.xpose.msra.mxu0 0.0
      %3840 = vmatprep.subr.mxu0 0.0
      %3841 = vmatpush1.xpose.msra.mxu0 0.0
      %3842 = vmatprep.subr.mxu0 0.0
      %3843 = vmatpush1.xpose.msra.mxu0 0.0
      %3844 = vmatprep.subr.mxu0 0.0
      %3845 = vmatpush1.xpose.msra.mxu0 0.0
      %3846 = vmatprep.subr.mxu0 0.0
      %3847 = vmatpush1.xpose.msra.mxu0 0.0
      %3848 = vmatprep.subr.mxu0 0.0
      %3849 = vmatpush1.xpose.msra.mxu0 0.0
      %3850 = vmatprep.subr.mxu0 0.0
      %3851 = vmatpush1.xpose.msra.mxu0 0.0
      %3852 = vmatprep.subr.mxu0 0.0
      %3853 = vmatpush1.xpose.msra.mxu0 0.0
      %3854 = vmatprep.subr.mxu0 0.0
      %3855 = vmatpush1.xpose.msra.mxu0 0.0
      %3856 = vmatprep.subr.mxu0 0.0
      %3857 = vmatpush1.xpose.msra.mxu0 0.0
      %3858 = vmatprep.subr.mxu0 0.0
      %3859 = vmatpush1.xpose.msra.mxu0 0.0
      %3860 = vmatprep.subr.mxu0 0.0
      %3861 = vmatpush1.xpose.msra.mxu0 0.0
      %3862 = vmatprep.subr.mxu0 0.0
      %3863 = vmatpush1.xpose.msra.mxu0 0.0
      %3864 = vmatprep.subr.mxu0 0.0
      %3865 = vmatpush1.xpose.msra.mxu0 0.0
      %3866 = vmatprep.subr.mxu0 0.0
      %3867 = vmatpush1.xpose.msra.mxu0 0.0
      %3868 = vmatprep.subr.mxu0 0.0
      %3869 = vmatpush1.xpose.msra.mxu0 0.0
      %3870 = vmatprep.subr.mxu0 0.0
      %3871 = vmatpush1.xpose.msra.mxu0 0.0
      %3872 = vmatprep.subr.mxu0 0.0
      %3873 = vmatpush1.xpose.msra.mxu0 0.0
      %3874 = vmatprep.subr.mxu0 0.0
      %3875 = vmatpush1.xpose.msra.mxu0 0.0
      %3876 = vmatprep.subr.mxu0 0.0
      %3877 = vmatpush1.xpose.msra.mxu0 0.0
      %3878 = vmatprep.subr.mxu0 0.0
      %3879 = vmatpush1.xpose.msra.mxu0 0.0
      %3880 = vmatprep.subr.mxu0 0.0
      %3881 = vmatpush1.xpose.msra.mxu0 0.0
      %3882 = vmatprep.subr.mxu0 0.0
      %3883 = vmatpush1.xpose.msra.mxu0 0.0
      %3884 = vmatprep.subr.mxu0 0.0
      %3885 = vmatpush1.xpose.msra.mxu0 0.0
      %3886 = vmatprep.mubr.f32.mxu0 0.0
      %3887 = vmatmul.mubr.f32.gmra.mrb[0].mxu0 %v3790
      %v3888 = vpop.f32.mrb[0].mxu0
      %v3889 = vadd.f32 0.0, %v3888
      %v3890 = vpop.f32.mrb[0].mxu0
      %3891 = vmatprep.mubr.f32.mxu0 0.0
      %3892 = vmatmul.mubr.f32.gmra.mrb[0].mxu0 %v3792
      %v3893 = vpop.f32.mrb[0].mxu0
      %v3894 = vadd.f32 0.0, %v3893
      %v3895 = vpop.f32.mrb[0].mxu0
      %3896 = vmatprep.mubr.f32.mxu0 0.0
      %3897 = vmatmul.mubr.f32.gmra.mrb[0].mxu0 %v3794
      %v3898 = vpop.f32.mrb[0].mxu0
      %v3899 = vadd.f32 0.0, %v3898
      %v3900 = vpop.f32.mrb[0].mxu0
      %3901 = vmatprep.mubr.f32.mxu0 0.0
      %3902 = vmatmul.mubr.f32.gmra.mrb[0].mxu0 %v3796
      %v3903 = vpop.f32.mrb[0].mxu0
      %v3904 = vadd.f32 0.0, %v3903
      %v3905 = vpop.f32.mrb[0].mxu0
      %3906 = vmatprep.mubr.f32.mxu0 0.0
      %3907 = vmatmul.mubr.f32.gmra.mrb[0].mxu0 %v3798
      %v3908 = vpop.f32.mrb[0].mxu0
      %v3909 = vadd.f32 0.0, %v3908
      %v3910 = vpop.f32.mrb[0].mxu0
      %3911 = vmatprep.mubr.f32.mxu0 0.0
      %3912 = vmatmul.mubr.f32.gmra.mrb[0].mxu0 %v3800
      %v3913 = vpop.f32.mrb[0].mxu0
      %v3914 = vadd.f32 0.0, %v3913
      %v3915 = vpop.f32.mrb[0].mxu0
      %3916 = vmatprep.mubr.f32.mxu0 0.0
      %3917 = vmatmul.mubr.f32.gmra.mrb[0].mxu0 %v3802
      %v3918 = vpop.f32.mrb[0].mxu0
      %v3919 = vadd.f32 0.0, %v3918
      %v3920 = vpop.f32.mrb[0].mxu0
      %3921 = vmatprep.mubr.f32.mxu0 0.0
      %3922 = vmatmul.mubr.f32.gmra.mrb[0].mxu0 %v3804
      %v3923 = vpop.f32.mrb[0].mxu0
      %v3924 = vadd.f32 0.0, %v3923
      %v3925 = vpop.f32.mrb[0].mxu0
      %3926 = vdwg.mxu0
      %v3927 = vsel %vm942, %v3889, -inf
      %3928 = vmax.xlane.f32.xlu0 %v3927
      %v3929 = vpop.xlane.xlu0 %3928
      %v3930 = vsel %vm942, %v3894, -inf
      %3931 = vmax.xlane.f32.xlu0 %v3930
      %v3932 = vpop.xlane.xlu0 %3931
      %v3933 = vsel %vm942, %v3899, -inf
      %3934 = vmax.xlane.f32.xlu0 %v3933
      %v3935 = vpop.xlane.xlu0 %3934
      %v3936 = vsel %vm942, %v3904, -inf
      %3937 = vmax.xlane.f32.xlu0 %v3936
      %v3938 = vpop.xlane.xlu0 %3937
      %v3939 = vsel %vm942, %v3909, -inf
      %3940 = vmax.xlane.f32.xlu0 %v3939
      %v3941 = vpop.xlane.xlu0 %3940
      %v3942 = vsel %vm942, %v3914, -inf
      %3943 = vmax.xlane.f32.xlu0 %v3942
      %v3944 = vpop.xlane.xlu0 %3943
      %v3945 = vsel %vm942, %v3919, -inf
      %3946 = vmax.xlane.f32.xlu0 %v3945
      %v3947 = vpop.xlane.xlu0 %3946
      %v3948 = vsel %vm942, %v3924, -inf
      %3949 = vmax.xlane.f32.xlu0 %v3948
      %v3950 = vpop.xlane.xlu0 %3949
      %v3951 = vsub.f32 %v3889, %v3929
      %v3952 = vsub.f32 %v3894, %v3932
      %v3953 = vsub.f32 %v3899, %v3935
      %v3954 = vsub.f32 %v3904, %v3938
      %v3955 = vsub.f32 %v3909, %v3941
      %v3956 = vsub.f32 %v3914, %v3944
      %v3957 = vsub.f32 %v3919, %v3947
      %v3958 = vsub.f32 %v3924, %v3950
      %v3959 = vmul.f32 %v3951, 1.442695
      %v3960 = vpow.pop %v3959
      %v3961 = vmul.f32 %v3952, 1.442695
      %v3962 = vpow.pop %v3961
      %v3963 = vmul.f32 %v3953, 1.442695
      %v3964 = vpow.pop %v3963
      %v3965 = vmul.f32 %v3954, 1.442695
      %v3966 = vpow.pop %v3965
      %v3967 = vmul.f32 %v3955, 1.442695
      %v3968 = vpow.pop %v3967
      %v3969 = vmul.f32 %v3956, 1.442695
      %v3970 = vpow.pop %v3969
      %v3971 = vmul.f32 %v3957, 1.442695
      %v3972 = vpow.pop %v3971
      %v3973 = vmul.f32 %v3958, 1.442695
      %v3974 = vpow.pop %v3973
      %v3975 = vsel %vm942, %v3960, 0.0
      %3976 = vadd.xlane.f32.xlu0 %v3975
      %v3977 = vpop.xlane.xlu0 %3976
      %v3978 = vsel %vm942, %v3962, 0.0
      %3979 = vadd.xlane.f32.xlu0 %v3978
      %v3980 = vpop.xlane.xlu0 %3979
      %v3981 = vsel %vm942, %v3964, 0.0
      %3982 = vadd.xlane.f32.xlu0 %v3981
      %v3983 = vpop.xlane.xlu0 %3982
      %v3984 = vsel %vm942, %v3966, 0.0
      %3985 = vadd.xlane.f32.xlu0 %v3984
      %v3986 = vpop.xlane.xlu0 %3985
      %v3987 = vsel %vm942, %v3968, 0.0
      %3988 = vadd.xlane.f32.xlu0 %v3987
      %v3989 = vpop.xlane.xlu0 %3988
      %v3990 = vsel %vm942, %v3970, 0.0
      %3991 = vadd.xlane.f32.xlu0 %v3990
      %v3992 = vpop.xlane.xlu0 %3991
      %v3993 = vsel %vm942, %v3972, 0.0
      %3994 = vadd.xlane.f32.xlu0 %v3993
      %v3995 = vpop.xlane.xlu0 %3994
      %v3996 = vsel %vm942, %v3974, 0.0
      %3997 = vadd.xlane.f32.xlu0 %v3996
      %v3998 = vpop.xlane.xlu0 %3997
      %v3999 = vrcp.pop %v3977
      %v4000 = vrcp.pop %v3980
      %v4001 = vrcp.pop %v3983
      %v4002 = vrcp.pop %v3986
      %v4003 = vrcp.pop %v3989
      %v4004 = vrcp.pop %v3992
      %v4005 = vrcp.pop %v3995
      %v4006 = vrcp.pop %v3998
      %v4007 = vmul.f32 %v3960, %v3999
      %v4008 = vmul.f32 %v3962, %v4000
      %v4009 = vmul.f32 %v3964, %v4001
      %v4010 = vmul.f32 %v3966, %v4002
      %v4011 = vmul.f32 %v3968, %v4003
      %v4012 = vmul.f32 %v3970, %v4004
      %v4013 = vmul.f32 %v3972, %v4005
      %v4014 = vmul.f32 %v3974, %v4006
      %4015 = vrot.lane.b32.xlu0 %v742, 40
      %v4016 = vpop.permute.xlu0 %4015
      %4017 = vrot.lane.b32.xlu0 %v747, 40
      %v4018 = vpop.permute.xlu0 %4017
      %4019 = vrot.lane.b32.xlu0 %v752, 40
      %v4020 = vpop.permute.xlu0 %4019
      %4021 = vrot.lane.b32.xlu0 %v757, 40
      %v4022 = vpop.permute.xlu0 %4021
      %4023 = vrot.lane.b32.xlu0 %v762, 40
      %v4024 = vpop.permute.xlu0 %4023
      %4025 = vrot.lane.b32.xlu0 %v767, 40
      %v4026 = vpop.permute.xlu0 %4025
      %4027 = vrot.lane.b32.xlu0 %v772, 40
      %v4028 = vpop.permute.xlu0 %4027
      %4029 = vrot.lane.b32.xlu0 %v777, 40
      %v4030 = vpop.permute.xlu0 %4029
      %v4040 = vsel %vm942, %v4007, 0
      %v4043 = vsel %vm942, %v4008, 0
      %v4046 = vsel %vm942, %v4009, 0
      %v4049 = vsel %vm942, %v4010, 0
      %v4052 = vsel %vm942, %v4011, 0
      %v4055 = vsel %vm942, %v4012, 0
      %v4058 = vsel %vm942, %v4013, 0
      %v4061 = vsel %vm942, %v4014, 0
      %4063 = vmatprep.subr.mxu0 0.0
      %4064 = vmatpush1.msra.mxu0 %v4016
      %4065 = vmatprep.subr.mxu0 0.0
      %4066 = vmatpush1.msra.mxu0 %v4018
      %4067 = vmatprep.subr.mxu0 0.0
      %4068 = vmatpush1.msra.mxu0 %v4020
      %4069 = vmatprep.subr.mxu0 0.0
      %4070 = vmatpush1.msra.mxu0 %v4022
      %4071 = vmatprep.subr.mxu0 0.0
      %4072 = vmatpush1.msra.mxu0 %v4024
      %4073 = vmatprep.subr.mxu0 0.0
      %4074 = vmatpush1.msra.mxu0 %v4026
      %4075 = vmatprep.subr.mxu0 0.0
      %4076 = vmatpush1.msra.mxu0 %v4028
      %4077 = vmatprep.subr.mxu0 0.0
      %4078 = vmatpush1.msra.mxu0 %v4030
      %4079 = vmatprep.subr.mxu0 0.0
      %4080 = vmatpush1.msra.mxu0 0.0
      %4081 = vmatprep.subr.mxu0 0.0
      %4082 = vmatpush1.msra.mxu0 0.0
      %4083 = vmatprep.subr.mxu0 0.0
      %4084 = vmatpush1.msra.mxu0 0.0
      %4085 = vmatprep.subr.mxu0 0.0
      %4086 = vmatpush1.msra.mxu0 0.0
      %4087 = vmatprep.subr.mxu0 0.0
      %4088 = vmatpush1.msra.mxu0 0.0
      %4089 = vmatprep.subr.mxu0 0.0
      %4090 = vmatpush1.msra.mxu0 0.0
      %4091 = vmatprep.subr.mxu0 0.0
      %4092 = vmatpush1.msra.mxu0 0.0
      %4093 = vmatprep.subr.mxu0 0.0
      %4094 = vmatpush1.msra.mxu0 0.0
      %4095 = vmatprep.subr.mxu0 0.0
      %4096 = vmatpush1.msra.mxu0 0.0
      %4097 = vmatprep.subr.mxu0 0.0
      %4098 = vmatpush1.msra.mxu0 0.0
      %4099 = vmatprep.subr.mxu0 0.0
      %4100 = vmatpush1.msra.mxu0 0.0
      %4101 = vmatprep.subr.mxu0 0.0
      %4102 = vmatpush1.msra.mxu0 0.0
      %4103 = vmatprep.subr.mxu0 0.0
      %4104 = vmatpush1.msra.mxu0 0.0
      %4105 = vmatprep.subr.mxu0 0.0
      %4106 = vmatpush1.msra.mxu0 0.0
      %4107 = vmatprep.subr.mxu0 0.0
      %4108 = vmatpush1.msra.mxu0 0.0
      %4109 = vmatprep.subr.mxu0 0.0
      %4110 = vmatpush1.msra.mxu0 0.0
      %4111 = vmatprep.subr.mxu0 0.0
      %4112 = vmatpush1.msra.mxu0 0.0
      %4113 = vmatprep.subr.mxu0 0.0
      %4114 = vmatpush1.msra.mxu0 0.0
      %4115 = vmatprep.subr.mxu0 0.0
      %4116 = vmatpush1.msra.mxu0 0.0
      %4117 = vmatprep.subr.mxu0 0.0
      %4118 = vmatpush1.msra.mxu0 0.0
      %4119 = vmatprep.subr.mxu0 0.0
      %4120 = vmatpush1.msra.mxu0 0.0
      %4121 = vmatprep.subr.mxu0 0.0
      %4122 = vmatpush1.msra.mxu0 0.0
      %4123 = vmatprep.subr.mxu0 0.0
      %4124 = vmatpush1.msra.mxu0 0.0
      %4125 = vmatprep.subr.mxu0 0.0
      %4126 = vmatpush1.msra.mxu0 0.0
      %4127 = vmatprep.mubr.f32.mxu0 0.0
      %4128 = vmatmul.mubr.f32.gmra.mrb[0].mxu0 %v4040
      %v4129 = vpop.f32.mrb[0].mxu0
      %v4130 = vadd.f32 0.0, %v4129
      %v4131 = vpop.f32.mrb[0].mxu0
      %4132 = vmatprep.mubr.f32.mxu0 0.0
      %4133 = vmatmul.mubr.f32.gmra.mrb[0].mxu0 %v4043
      %v4134 = vpop.f32.mrb[0].mxu0
      %v4135 = vadd.f32 0.0, %v4134
      %v4136 = vpop.f32.mrb[0].mxu0
      %4137 = vmatprep.mubr.f32.mxu0 0.0
      %4138 = vmatmul.mubr.f32.gmra.mrb[0].mxu0 %v4046
      %v4139 = vpop.f32.mrb[0].mxu0
      %v4140 = vadd.f32 0.0, %v4139
      %v4141 = vpop.f32.mrb[0].mxu0
      %4142 = vmatprep.mubr.f32.mxu0 0.0
      %4143 = vmatmul.mubr.f32.gmra.mrb[0].mxu0 %v4049
      %v4144 = vpop.f32.mrb[0].mxu0
      %v4145 = vadd.f32 0.0, %v4144
      %v4146 = vpop.f32.mrb[0].mxu0
      %4147 = vmatprep.mubr.f32.mxu0 0.0
      %4148 = vmatmul.mubr.f32.gmra.mrb[0].mxu0 %v4052
      %v4149 = vpop.f32.mrb[0].mxu0
      %v4150 = vadd.f32 0.0, %v4149
      %v4151 = vpop.f32.mrb[0].mxu0
      %4152 = vmatprep.mubr.f32.mxu0 0.0
      %4153 = vmatmul.mubr.f32.gmra.mrb[0].mxu0 %v4055
      %v4154 = vpop.f32.mrb[0].mxu0
      %v4155 = vadd.f32 0.0, %v4154
      %v4156 = vpop.f32.mrb[0].mxu0
      %4157 = vmatprep.mubr.f32.mxu0 0.0
      %4158 = vmatmul.mubr.f32.gmra.mrb[0].mxu0 %v4058
      %v4159 = vpop.f32.mrb[0].mxu0
      %v4160 = vadd.f32 0.0, %v4159
      %v4161 = vpop.f32.mrb[0].mxu0
      %4162 = vmatprep.mubr.f32.mxu0 0.0
      %4163 = vmatmul.mubr.f32.gmra.mrb[0].mxu0 %v4061
      %v4164 = vpop.f32.mrb[0].mxu0
      %v4165 = vadd.f32 0.0, %v4164
      %v4166 = vpop.f32.mrb[0].mxu0
      %4167 = vdwg.mxu0
      %4176 = vrot.lane.b32.xlu0 %v3310, 8
      %v4177 = vpop.permute.xlu0 %4176
      %4178 = vrot.lane.b32.xlu0 %v3315, 8
      %v4179 = vpop.permute.xlu0 %4178
      %4180 = vrot.lane.b32.xlu0 %v3320, 8
      %v4181 = vpop.permute.xlu0 %4180
      %4182 = vrot.lane.b32.xlu0 %v3325, 8
      %v4183 = vpop.permute.xlu0 %4182
      %4184 = vrot.lane.b32.xlu0 %v3330, 8
      %v4185 = vpop.permute.xlu0 %4184
      %4186 = vrot.lane.b32.xlu0 %v3335, 8
      %v4187 = vpop.permute.xlu0 %4186
      %4188 = vrot.lane.b32.xlu0 %v3340, 8
      %v4189 = vpop.permute.xlu0 %4188
      %4190 = vrot.lane.b32.xlu0 %v3345, 8
      %v4191 = vpop.permute.xlu0 %4190
      %4208 = vrot.lane.b32.xlu0 %v3720, 16
      %v4209 = vpop.permute.xlu0 %4208
      %4210 = vrot.lane.b32.xlu0 %v3725, 16
      %v4211 = vpop.permute.xlu0 %4210
      %4212 = vrot.lane.b32.xlu0 %v3730, 16
      %v4213 = vpop.permute.xlu0 %4212
      %4214 = vrot.lane.b32.xlu0 %v3735, 16
      %v4215 = vpop.permute.xlu0 %4214
      %4216 = vrot.lane.b32.xlu0 %v3740, 16
      %v4217 = vpop.permute.xlu0 %4216
      %4218 = vrot.lane.b32.xlu0 %v3745, 16
      %v4219 = vpop.permute.xlu0 %4218
      %4220 = vrot.lane.b32.xlu0 %v3750, 16
      %v4221 = vpop.permute.xlu0 %4220
      %4222 = vrot.lane.b32.xlu0 %v3755, 16
      %v4223 = vpop.permute.xlu0 %4222
      %4240 = vrot.lane.b32.xlu0 %v4130, 24
      %v4241 = vpop.permute.xlu0 %4240
      %4242 = vrot.lane.b32.xlu0 %v4135, 24
      %v4243 = vpop.permute.xlu0 %4242
      %4244 = vrot.lane.b32.xlu0 %v4140, 24
      %v4245 = vpop.permute.xlu0 %4244
      %4246 = vrot.lane.b32.xlu0 %v4145, 24
      %v4247 = vpop.permute.xlu0 %4246
      %4248 = vrot.lane.b32.xlu0 %v4150, 24
      %v4249 = vpop.permute.xlu0 %4248
      %4250 = vrot.lane.b32.xlu0 %v4155, 24
      %v4251 = vpop.permute.xlu0 %4250
      %4252 = vrot.lane.b32.xlu0 %v4160, 24
      %v4253 = vpop.permute.xlu0 %4252
      %4254 = vrot.lane.b32.xlu0 %v4165, 24
      %v4255 = vpop.permute.xlu0 %4254
      %v4264 = vsel %vm804, %v2900, %v4177
      %v4265 = vsel %vm804, %v2905, %v4179
      %v4266 = vsel %vm804, %v2910, %v4181
      %v4267 = vsel %vm804, %v2915, %v4183
      %v4268 = vsel %vm804, %v2920, %v4185
      %v4269 = vsel %vm804, %v2925, %v4187
      %v4270 = vsel %vm804, %v2930, %v4189
      %v4271 = vsel %vm804, %v2935, %v4191
      %v4272 = vsel %vm2518, %v4264, %v4209
      %v4273 = vsel %vm2518, %v4265, %v4211
      %v4274 = vsel %vm2518, %v4266, %v4213
      %v4275 = vsel %vm2518, %v4267, %v4215
      %v4276 = vsel %vm2518, %v4268, %v4217
      %v4277 = vsel %vm2518, %v4269, %v4219
      %v4278 = vsel %vm2518, %v4270, %v4221
      %v4279 = vsel %vm2518, %v4271, %v4223
      %v4280 = vsel %vm2527, %v4272, %v4241
      %v4281 = vsel %vm2527, %v4273, %v4243
      %v4282 = vsel %vm2527, %v4274, %v4245
      %v4283 = vsel %vm2527, %v4275, %v4247
      %v4284 = vsel %vm2527, %v4276, %v4249
      %v4285 = vsel %vm2527, %v4277, %v4251
      %v4286 = vsel %vm2527, %v4278, %v4253
      %v4287 = vsel %vm2527, %v4279, %v4255
      %4292 = vrot.lane.b32.xlu0 %v310, 32
      %v4293 = vpop.permute.xlu0 %4292
      %4294 = vrot.lane.b32.xlu0 %v311, 32
      %v4295 = vpop.permute.xlu0 %4294
      %4296 = vrot.lane.b32.xlu0 %v312, 32
      %v4297 = vpop.permute.xlu0 %4296
      %4298 = vrot.lane.b32.xlu0 %v313, 32
      %v4299 = vpop.permute.xlu0 %4298
      %4305 = vrot.lane.b32.xlu0 %v322, 32
      %v4306 = vpop.permute.xlu0 %4305
      %v4309 = vsel %vm327, %v2528, 0
      %v4312 = vsel %vm327, %v2529, 0
      %v4315 = vsel %vm327, %v2530, 0
      %v4318 = vsel %vm327, %v2531, 0
      %v4321 = vsel %vm327, %v2532, 0
      %v4324 = vsel %vm327, %v2533, 0
      %v4327 = vsel %vm327, %v2534, 0
      %v4330 = vsel %vm327, %v2535, 0
      %v4333 = vsel %vm327, %v4280, 0
      %v4336 = vsel %vm327, %v4281, 0
      %v4339 = vsel %vm327, %v4282, 0
      %v4342 = vsel %vm327, %v4283, 0
      %v4345 = vsel %vm327, %v4284, 0
      %v4348 = vsel %vm327, %v4285, 0
      %v4351 = vsel %vm327, %v4286, 0
      %v4354 = vsel %vm327, %v4287, 0
      %4356 = vmatprep.subr.mxu0 0.0
      %4357 = vmatpush1.msra.mxu0 %v4293
      %4358 = vmatprep.subr.mxu0 0.0
      %4359 = vmatpush1.msra.mxu0 %v4295
      %4360 = vmatprep.subr.mxu0 0.0
      %4361 = vmatpush1.msra.mxu0 %v4297
      %4362 = vmatprep.subr.mxu0 0.0
      %4363 = vmatpush1.msra.mxu0 %v4299
      %4364 = vmatprep.subr.mxu0 0.0
      %4365 = vmatpush1.msra.mxu0 0.0
      %4366 = vmatprep.subr.mxu0 0.0
      %4367 = vmatpush1.msra.mxu0 0.0
      %4368 = vmatprep.subr.mxu0 0.0
      %4369 = vmatpush1.msra.mxu0 0.0
      %4370 = vmatprep.subr.mxu0 0.0
      %4371 = vmatpush1.msra.mxu0 0.0
      %4372 = vmatprep.subr.mxu0 0.0
      %4373 = vmatpush1.msra.mxu0 0.0
      %4374 = vmatprep.subr.mxu0 0.0
      %4375 = vmatpush1.msra.mxu0 0.0
      %4376 = vmatprep.subr.mxu0 0.0
      %4377 = vmatpush1.msra.mxu0 0.0
      %4378 = vmatprep.subr.mxu0 0.0
      %4379 = vmatpush1.msra.mxu0 0.0
      %4380 = vmatprep.subr.mxu0 0.0
      %4381 = vmatpush1.msra.mxu0 0.0
      %4382 = vmatprep.subr.mxu0 0.0
      %4383 = vmatpush1.msra.mxu0 0.0
      %4384 = vmatprep.subr.mxu0 0.0
      %4385 = vmatpush1.msra.mxu0 0.0
      %4386 = vmatprep.subr.mxu0 0.0
      %4387 = vmatpush1.msra.mxu0 0.0
      %4388 = vmatprep.subr.mxu0 0.0
      %4389 = vmatpush1.msra.mxu0 0.0
      %4390 = vmatprep.subr.mxu0 0.0
      %4391 = vmatpush1.msra.mxu0 0.0
      %4392 = vmatprep.subr.mxu0 0.0
      %4393 = vmatpush1.msra.mxu0 0.0
      %4394 = vmatprep.subr.mxu0 0.0
      %4395 = vmatpush1.msra.mxu0 0.0
      %4396 = vmatprep.subr.mxu0 0.0
      %4397 = vmatpush1.msra.mxu0 0.0
      %4398 = vmatprep.subr.mxu0 0.0
      %4399 = vmatpush1.msra.mxu0 0.0
      %4400 = vmatprep.subr.mxu0 0.0
      %4401 = vmatpush1.msra.mxu0 0.0
      %4402 = vmatprep.subr.mxu0 0.0
      %4403 = vmatpush1.msra.mxu0 0.0
      %4404 = vmatprep.subr.mxu0 0.0
      %4405 = vmatpush1.msra.mxu0 0.0
      %4406 = vmatprep.subr.mxu0 0.0
      %4407 = vmatpush1.msra.mxu0 0.0
      %4408 = vmatprep.subr.mxu0 0.0
      %4409 = vmatpush1.msra.mxu0 0.0
      %4410 = vmatprep.subr.mxu0 0.0
      %4411 = vmatpush1.msra.mxu0 0.0
      %4412 = vmatprep.subr.mxu0 0.0
      %4413 = vmatpush1.msra.mxu0 0.0
      %4414 = vmatprep.subr.mxu0 0.0
      %4415 = vmatpush1.msra.mxu0 0.0
      %4416 = vmatprep.subr.mxu0 0.0
      %4417 = vmatpush1.msra.mxu0 0.0
      %4418 = vmatprep.subr.mxu0 0.0
      %4419 = vmatpush1.msra.mxu0 0.0
      %4420 = vmatprep.mubr.f32.mxu0 0.0
      %4421 = vmatmul.mubr.f32.gmra.mrb[0].mxu0 %v4309
      %v4422 = vpop.f32.mrb[0].mxu0
      %v4423 = vadd.f32 %v4306, %v4422
      %v4424 = vpop.f32.mrb[0].mxu0
      %4425 = vmatprep.mubr.f32.mxu0 0.0
      %4426 = vmatmul.mubr.f32.gmra.mrb[0].mxu0 %v4312
      %v4427 = vpop.f32.mrb[0].mxu0
      %v4428 = vadd.f32 %v4306, %v4427
      %v4429 = vpop.f32.mrb[0].mxu0
      %4430 = vmatprep.mubr.f32.mxu0 0.0
      %4431 = vmatmul.mubr.f32.gmra.mrb[0].mxu0 %v4315
      %v4432 = vpop.f32.mrb[0].mxu0
      %v4433 = vadd.f32 %v4306, %v4432
      %v4434 = vpop.f32.mrb[0].mxu0
      %4435 = vmatprep.mubr.f32.mxu0 0.0
      %4436 = vmatmul.mubr.f32.gmra.mrb[0].mxu0 %v4318
      %v4437 = vpop.f32.mrb[0].mxu0
      %v4438 = vadd.f32 %v4306, %v4437
      %v4439 = vpop.f32.mrb[0].mxu0
      %4440 = vmatprep.mubr.f32.mxu0 0.0
      %4441 = vmatmul.mubr.f32.gmra.mrb[0].mxu0 %v4321
      %v4442 = vpop.f32.mrb[0].mxu0
      %v4443 = vadd.f32 %v4306, %v4442
      %v4444 = vpop.f32.mrb[0].mxu0
      %4445 = vmatprep.mubr.f32.mxu0 0.0
      %4446 = vmatmul.mubr.f32.gmra.mrb[0].mxu0 %v4324
      %v4447 = vpop.f32.mrb[0].mxu0
      %v4448 = vadd.f32 %v4306, %v4447
      %v4449 = vpop.f32.mrb[0].mxu0
      %4450 = vmatprep.mubr.f32.mxu0 0.0
      %4451 = vmatmul.mubr.f32.gmra.mrb[0].mxu0 %v4327
      %v4452 = vpop.f32.mrb[0].mxu0
      %v4453 = vadd.f32 %v4306, %v4452
      %v4454 = vpop.f32.mrb[0].mxu0
      %4455 = vmatprep.mubr.f32.mxu0 0.0
      %4456 = vmatmul.mubr.f32.gmra.mrb[0].mxu0 %v4330
      %v4457 = vpop.f32.mrb[0].mxu0
      %v4458 = vadd.f32 %v4306, %v4457
      %v4459 = vpop.f32.mrb[0].mxu0
      %4460 = vmatprep.mubr.f32.mxu0 0.0
      %4461 = vmatmul.mubr.f32.gmra.mrb[0].mxu0 %v4333
      %v4462 = vpop.f32.mrb[0].mxu0
      %v4463 = vadd.f32 %v4306, %v4462
      %v4464 = vpop.f32.mrb[0].mxu0
      %4465 = vmatprep.mubr.f32.mxu0 0.0
      %4466 = vmatmul.mubr.f32.gmra.mrb[0].mxu0 %v4336
      %v4467 = vpop.f32.mrb[0].mxu0
      %v4468 = vadd.f32 %v4306, %v4467
      %v4469 = vpop.f32.mrb[0].mxu0
      %4470 = vmatprep.mubr.f32.mxu0 0.0
      %4471 = vmatmul.mubr.f32.gmra.mrb[0].mxu0 %v4339
      %v4472 = vpop.f32.mrb[0].mxu0
      %v4473 = vadd.f32 %v4306, %v4472
      %v4474 = vpop.f32.mrb[0].mxu0
      %4475 = vmatprep.mubr.f32.mxu0 0.0
      %4476 = vmatmul.mubr.f32.gmra.mrb[0].mxu0 %v4342
      %v4477 = vpop.f32.mrb[0].mxu0
      %v4478 = vadd.f32 %v4306, %v4477
      %v4479 = vpop.f32.mrb[0].mxu0
      %4480 = vmatprep.mubr.f32.mxu0 0.0
      %4481 = vmatmul.mubr.f32.gmra.mrb[0].mxu0 %v4345
      %v4482 = vpop.f32.mrb[0].mxu0
      %v4483 = vadd.f32 %v4306, %v4482
      %v4484 = vpop.f32.mrb[0].mxu0
      %4485 = vmatprep.mubr.f32.mxu0 0.0
      %4486 = vmatmul.mubr.f32.gmra.mrb[0].mxu0 %v4348
      %v4487 = vpop.f32.mrb[0].mxu0
      %v4488 = vadd.f32 %v4306, %v4487
      %v4489 = vpop.f32.mrb[0].mxu0
      %4490 = vmatprep.mubr.f32.mxu0 0.0
      %4491 = vmatmul.mubr.f32.gmra.mrb[0].mxu0 %v4351
      %v4492 = vpop.f32.mrb[0].mxu0
      %v4493 = vadd.f32 %v4306, %v4492
      %v4494 = vpop.f32.mrb[0].mxu0
      %4495 = vmatprep.mubr.f32.mxu0 0.0
      %4496 = vmatmul.mubr.f32.gmra.mrb[0].mxu0 %v4354
      %v4497 = vpop.f32.mrb[0].mxu0
      %v4498 = vadd.f32 %v4306, %v4497
      %v4499 = vpop.f32.mrb[0].mxu0
      %4500 = vdwg.mxu0
      %v4501 = vlaneseq
      %v4502 = vshrl.u32 %v4501, 7
      %v4503 = vsub.s32 2, %v4502
      %v4504 = vrot.slane %v325, %v4503
      %v4505 = vlaneseq
      %v4506 = vshrl.u32 %v4505, 7
      %v4507 = vsub.s32 2, %v4506
      %v4508 = vrot.slane %v326, %v4507
      %v4509 = vmul.f32 %v4504, %v4423
      %v4510 = vmul.f32 %v4504, %v4428
      %v4511 = vmul.f32 %v4504, %v4433
      %v4512 = vmul.f32 %v4504, %v4438
      %v4513 = vmul.f32 %v4504, %v4443
      %v4514 = vmul.f32 %v4504, %v4448
      %v4515 = vmul.f32 %v4504, %v4453
      %v4516 = vmul.f32 %v4504, %v4458
      %v4517 = vmul.f32 %v4508, %v4463
      %v4518 = vmul.f32 %v4508, %v4468
      %v4519 = vmul.f32 %v4508, %v4473
      %v4520 = vmul.f32 %v4508, %v4478
      %v4521 = vmul.f32 %v4508, %v4483
      %v4522 = vmul.f32 %v4508, %v4488
      %v4523 = vmul.f32 %v4508, %v4493
      %v4524 = vmul.f32 %v4508, %v4498
      %v4525 = vadd.f32 %v294, %v4509
      %v4526 = vadd.f32 %v295, %v4510
      %v4527 = vadd.f32 %v296, %v4511
      %v4528 = vadd.f32 %v297, %v4512
      %v4529 = vadd.f32 %v298, %v4513
      %v4530 = vadd.f32 %v299, %v4514
      %v4531 = vadd.f32 %v300, %v4515
      %v4532 = vadd.f32 %v301, %v4516
      %v4533 = vadd.f32 %v302, %v4517
      %v4534 = vadd.f32 %v303, %v4518
      %v4535 = vadd.f32 %v304, %v4519
      %v4536 = vadd.f32 %v305, %v4520
      %v4537 = vadd.f32 %v306, %v4521
      %v4538 = vadd.f32 %v307, %v4522
      %v4539 = vadd.f32 %v308, %v4523
      %v4540 = vadd.f32 %v309, %v4524
      %v4541 = vsel %vm327, %v4525, 0.0
      %4542 = vadd.xlane.f32.xlu0 %v4541
      %v4543 = vpop.xlane.xlu0 %4542
      %v4544 = vsel %vm327, %v4526, 0.0
      %4545 = vadd.xlane.f32.xlu0 %v4544
      %v4546 = vpop.xlane.xlu0 %4545
      %v4547 = vsel %vm327, %v4527, 0.0
      %4548 = vadd.xlane.f32.xlu0 %v4547
      %v4549 = vpop.xlane.xlu0 %4548
      %v4550 = vsel %vm327, %v4528, 0.0
      %4551 = vadd.xlane.f32.xlu0 %v4550
      %v4552 = vpop.xlane.xlu0 %4551
      %v4553 = vsel %vm327, %v4529, 0.0
      %4554 = vadd.xlane.f32.xlu0 %v4553
      %v4555 = vpop.xlane.xlu0 %4554
      %v4556 = vsel %vm327, %v4530, 0.0
      %4557 = vadd.xlane.f32.xlu0 %v4556
      %v4558 = vpop.xlane.xlu0 %4557
      %v4559 = vsel %vm327, %v4531, 0.0
      %4560 = vadd.xlane.f32.xlu0 %v4559
      %v4561 = vpop.xlane.xlu0 %4560
      %v4562 = vsel %vm327, %v4532, 0.0
      %4563 = vadd.xlane.f32.xlu0 %v4562
      %v4564 = vpop.xlane.xlu0 %4563
      %v4565 = vsel %vm327, %v4533, 0.0
      %4566 = vadd.xlane.f32.xlu0 %v4565
      %v4567 = vpop.xlane.xlu0 %4566
      %v4568 = vsel %vm327, %v4534, 0.0
      %4569 = vadd.xlane.f32.xlu0 %v4568
      %v4570 = vpop.xlane.xlu0 %4569
      %v4571 = vsel %vm327, %v4535, 0.0
      %4572 = vadd.xlane.f32.xlu0 %v4571
      %v4573 = vpop.xlane.xlu0 %4572
      %v4574 = vsel %vm327, %v4536, 0.0
      %4575 = vadd.xlane.f32.xlu0 %v4574
      %v4576 = vpop.xlane.xlu0 %4575
      %v4577 = vsel %vm327, %v4537, 0.0
      %4578 = vadd.xlane.f32.xlu0 %v4577
      %v4579 = vpop.xlane.xlu0 %4578
      %v4580 = vsel %vm327, %v4538, 0.0
      %4581 = vadd.xlane.f32.xlu0 %v4580
      %v4582 = vpop.xlane.xlu0 %4581
      %v4583 = vsel %vm327, %v4539, 0.0
      %4584 = vadd.xlane.f32.xlu0 %v4583
      %v4585 = vpop.xlane.xlu0 %4584
      %v4586 = vsel %vm327, %v4540, 0.0
      %4587 = vadd.xlane.f32.xlu0 %v4586
      %v4588 = vpop.xlane.xlu0 %4587
      %v4589 = vmul.f32 %v4543, %v376
      %v4590 = vmul.f32 %v4546, %v376
      %v4591 = vmul.f32 %v4549, %v376
      %v4592 = vmul.f32 %v4552, %v376
      %v4593 = vmul.f32 %v4555, %v376
      %v4594 = vmul.f32 %v4558, %v376
      %v4595 = vmul.f32 %v4561, %v376
      %v4596 = vmul.f32 %v4564, %v376
      %v4597 = vmul.f32 %v4567, %v376
      %v4598 = vmul.f32 %v4570, %v376
      %v4599 = vmul.f32 %v4573, %v376
      %v4600 = vmul.f32 %v4576, %v376
      %v4601 = vmul.f32 %v4579, %v376
      %v4602 = vmul.f32 %v4582, %v376
      %v4603 = vmul.f32 %v4585, %v376
      %v4604 = vmul.f32 %v4588, %v376
      %v4605 = vsub.f32 %v4525, %v4589
      %v4606 = vsub.f32 %v4526, %v4590
      %v4607 = vsub.f32 %v4527, %v4591
      %v4608 = vsub.f32 %v4528, %v4592
      %v4609 = vsub.f32 %v4529, %v4593
      %v4610 = vsub.f32 %v4530, %v4594
      %v4611 = vsub.f32 %v4531, %v4595
      %v4612 = vsub.f32 %v4532, %v4596
      %v4613 = vsub.f32 %v4533, %v4597
      %v4614 = vsub.f32 %v4534, %v4598
      %v4615 = vsub.f32 %v4535, %v4599
      %v4616 = vsub.f32 %v4536, %v4600
      %v4617 = vsub.f32 %v4537, %v4601
      %v4618 = vsub.f32 %v4538, %v4602
      %v4619 = vsub.f32 %v4539, %v4603
      %v4620 = vsub.f32 %v4540, %v4604
      %v4621 = vmul.f32 %v4605, %v4605
      %v4622 = vmul.f32 %v4606, %v4606
      %v4623 = vmul.f32 %v4607, %v4607
      %v4624 = vmul.f32 %v4608, %v4608
      %v4625 = vmul.f32 %v4609, %v4609
      %v4626 = vmul.f32 %v4610, %v4610
      %v4627 = vmul.f32 %v4611, %v4611
      %v4628 = vmul.f32 %v4612, %v4612
      %v4629 = vmul.f32 %v4613, %v4613
      %v4630 = vmul.f32 %v4614, %v4614
      %v4631 = vmul.f32 %v4615, %v4615
      %v4632 = vmul.f32 %v4616, %v4616
      %v4633 = vmul.f32 %v4617, %v4617
      %v4634 = vmul.f32 %v4618, %v4618
      %v4635 = vmul.f32 %v4619, %v4619
      %v4636 = vmul.f32 %v4620, %v4620
      %v4637 = vsel %vm327, %v4621, 0.0
      %4638 = vadd.xlane.f32.xlu0 %v4637
      %v4639 = vpop.xlane.xlu0 %4638
      %v4640 = vsel %vm327, %v4622, 0.0
      %4641 = vadd.xlane.f32.xlu0 %v4640
      %v4642 = vpop.xlane.xlu0 %4641
      %v4643 = vsel %vm327, %v4623, 0.0
      %4644 = vadd.xlane.f32.xlu0 %v4643
      %v4645 = vpop.xlane.xlu0 %4644
      %v4646 = vsel %vm327, %v4624, 0.0
      %4647 = vadd.xlane.f32.xlu0 %v4646
      %v4648 = vpop.xlane.xlu0 %4647
      %v4649 = vsel %vm327, %v4625, 0.0
      %4650 = vadd.xlane.f32.xlu0 %v4649
      %v4651 = vpop.xlane.xlu0 %4650
      %v4652 = vsel %vm327, %v4626, 0.0
      %4653 = vadd.xlane.f32.xlu0 %v4652
      %v4654 = vpop.xlane.xlu0 %4653
      %v4655 = vsel %vm327, %v4627, 0.0
      %4656 = vadd.xlane.f32.xlu0 %v4655
      %v4657 = vpop.xlane.xlu0 %4656
      %v4658 = vsel %vm327, %v4628, 0.0
      %4659 = vadd.xlane.f32.xlu0 %v4658
      %v4660 = vpop.xlane.xlu0 %4659
      %v4661 = vsel %vm327, %v4629, 0.0
      %4662 = vadd.xlane.f32.xlu0 %v4661
      %v4663 = vpop.xlane.xlu0 %4662
      %v4664 = vsel %vm327, %v4630, 0.0
      %4665 = vadd.xlane.f32.xlu0 %v4664
      %v4666 = vpop.xlane.xlu0 %4665
      %v4667 = vsel %vm327, %v4631, 0.0
      %4668 = vadd.xlane.f32.xlu0 %v4667
      %v4669 = vpop.xlane.xlu0 %4668
      %v4670 = vsel %vm327, %v4632, 0.0
      %4671 = vadd.xlane.f32.xlu0 %v4670
      %v4672 = vpop.xlane.xlu0 %4671
      %v4673 = vsel %vm327, %v4633, 0.0
      %4674 = vadd.xlane.f32.xlu0 %v4673
      %v4675 = vpop.xlane.xlu0 %4674
      %v4676 = vsel %vm327, %v4634, 0.0
      %4677 = vadd.xlane.f32.xlu0 %v4676
      %v4678 = vpop.xlane.xlu0 %4677
      %v4679 = vsel %vm327, %v4635, 0.0
      %4680 = vadd.xlane.f32.xlu0 %v4679
      %v4681 = vpop.xlane.xlu0 %4680
      %v4682 = vsel %vm327, %v4636, 0.0
      %4683 = vadd.xlane.f32.xlu0 %v4682
      %v4684 = vpop.xlane.xlu0 %4683
      %v4685 = vmul.f32 %v4639, %v376
      %v4686 = vmul.f32 %v4642, %v376
      %v4687 = vmul.f32 %v4645, %v376
      %v4688 = vmul.f32 %v4648, %v376
      %v4689 = vmul.f32 %v4651, %v376
      %v4690 = vmul.f32 %v4654, %v376
      %v4691 = vmul.f32 %v4657, %v376
      %v4692 = vmul.f32 %v4660, %v376
      %v4693 = vmul.f32 %v4663, %v376
      %v4694 = vmul.f32 %v4666, %v376
      %v4695 = vmul.f32 %v4669, %v376
      %v4696 = vmul.f32 %v4672, %v376
      %v4697 = vmul.f32 %v4675, %v376
      %v4698 = vmul.f32 %v4678, %v376
      %v4699 = vmul.f32 %v4681, %v376
      %v4700 = vmul.f32 %v4684, %v376
      %v4701 = vadd.f32 %v4685, 1e-06
      %v4702 = vadd.f32 %v4686, 1e-06
      %v4703 = vadd.f32 %v4687, 1e-06
      %v4704 = vadd.f32 %v4688, 1e-06
      %v4705 = vadd.f32 %v4689, 1e-06
      %v4706 = vadd.f32 %v4690, 1e-06
      %v4707 = vadd.f32 %v4691, 1e-06
      %v4708 = vadd.f32 %v4692, 1e-06
      %v4709 = vadd.f32 %v4693, 1e-06
      %v4710 = vadd.f32 %v4694, 1e-06
      %v4711 = vadd.f32 %v4695, 1e-06
      %v4712 = vadd.f32 %v4696, 1e-06
      %v4713 = vadd.f32 %v4697, 1e-06
      %v4714 = vadd.f32 %v4698, 1e-06
      %v4715 = vadd.f32 %v4699, 1e-06
      %v4716 = vadd.f32 %v4700, 1e-06
      %v4717 = vrsqrt.pop %v4701
      %v4718 = vrsqrt.pop %v4702
      %v4719 = vrsqrt.pop %v4703
      %v4720 = vrsqrt.pop %v4704
      %v4721 = vrsqrt.pop %v4705
      %v4722 = vrsqrt.pop %v4706
      %v4723 = vrsqrt.pop %v4707
      %v4724 = vrsqrt.pop %v4708
      %v4725 = vrsqrt.pop %v4709
      %v4726 = vrsqrt.pop %v4710
      %v4727 = vrsqrt.pop %v4711
      %v4728 = vrsqrt.pop %v4712
      %v4729 = vrsqrt.pop %v4713
      %v4730 = vrsqrt.pop %v4714
      %v4731 = vrsqrt.pop %v4715
      %v4732 = vrsqrt.pop %v4716
      %v4733 = vmul.f32 %v4605, %v4717
      %v4734 = vmul.f32 %v4606, %v4718
      %v4735 = vmul.f32 %v4607, %v4719
      %v4736 = vmul.f32 %v4608, %v4720
      %v4737 = vmul.f32 %v4609, %v4721
      %v4738 = vmul.f32 %v4610, %v4722
      %v4739 = vmul.f32 %v4611, %v4723
      %v4740 = vmul.f32 %v4612, %v4724
      %v4741 = vmul.f32 %v4613, %v4725
      %v4742 = vmul.f32 %v4614, %v4726
      %v4743 = vmul.f32 %v4615, %v4727
      %v4744 = vmul.f32 %v4616, %v4728
      %v4745 = vmul.f32 %v4617, %v4729
      %v4746 = vmul.f32 %v4618, %v4730
      %v4747 = vmul.f32 %v4619, %v4731
      %v4748 = vmul.f32 %v4620, %v4732
      %v4749 = vlaneseq
      %v4750 = vshrl.u32 %v4749, 7
      %v4751 = vsub.s32 4, %v4750
      %v4752 = vrot.slane %v537, %v4751
      %v4753 = vlaneseq
      %v4754 = vshrl.u32 %v4753, 7
      %v4755 = vsub.s32 4, %v4754
      %v4756 = vrot.slane %v538, %v4755
      %v4757 = vmul.f32 %v4733, %v4752
      %v4758 = vmul.f32 %v4734, %v4752
      %v4759 = vmul.f32 %v4735, %v4752
      %v4760 = vmul.f32 %v4736, %v4752
      %v4761 = vmul.f32 %v4737, %v4752
      %v4762 = vmul.f32 %v4738, %v4752
      %v4763 = vmul.f32 %v4739, %v4752
      %v4764 = vmul.f32 %v4740, %v4752
      %v4765 = vmul.f32 %v4741, %v4756
      %v4766 = vmul.f32 %v4742, %v4756
      %v4767 = vmul.f32 %v4743, %v4756
      %v4768 = vmul.f32 %v4744, %v4756
      %v4769 = vmul.f32 %v4745, %v4756
      %v4770 = vmul.f32 %v4746, %v4756
      %v4771 = vmul.f32 %v4747, %v4756
      %v4772 = vmul.f32 %v4748, %v4756
      %v4773 = vlaneseq
      %v4774 = vshrl.u32 %v4773, 7
      %v4775 = vsub.s32 3, %v4774
      %v4776 = vrot.slane %v325, %v4775
      %v4777 = vlaneseq
      %v4778 = vshrl.u32 %v4777, 7
      %v4779 = vsub.s32 3, %v4778
      %v4780 = vrot.slane %v326, %v4779
      %v4781 = vadd.f32 %v4757, %v4776
      %v4782 = vadd.f32 %v4758, %v4776
      %v4783 = vadd.f32 %v4759, %v4776
      %v4784 = vadd.f32 %v4760, %v4776
      %v4785 = vadd.f32 %v4761, %v4776
      %v4786 = vadd.f32 %v4762, %v4776
      %v4787 = vadd.f32 %v4763, %v4776
      %v4788 = vadd.f32 %v4764, %v4776
      %v4789 = vadd.f32 %v4765, %v4780
      %v4790 = vadd.f32 %v4766, %v4780
      %v4791 = vadd.f32 %v4767, %v4780
      %v4792 = vadd.f32 %v4768, %v4780
      %v4793 = vadd.f32 %v4769, %v4780
      %v4794 = vadd.f32 %v4770, %v4780
      %v4795 = vadd.f32 %v4771, %v4780
      %v4796 = vadd.f32 %v4772, %v4780
      %v4798 = vsel %vm327, %v4781, 0
      %v4801 = vsel %vm327, %v4782, 0
      %v4804 = vsel %vm327, %v4783, 0
      %v4807 = vsel %vm327, %v4784, 0
      %v4810 = vsel %vm327, %v4785, 0
      %v4813 = vsel %vm327, %v4786, 0
      %v4816 = vsel %vm327, %v4787, 0
      %v4819 = vsel %vm327, %v4788, 0
      %v4822 = vsel %vm327, %v4789, 0
      %v4825 = vsel %vm327, %v4790, 0
      %v4828 = vsel %vm327, %v4791, 0
      %v4831 = vsel %vm327, %v4792, 0
      %v4834 = vsel %vm327, %v4793, 0
      %v4837 = vsel %vm327, %v4794, 0
      %v4840 = vsel %vm327, %v4795, 0
      %v4843 = vsel %vm327, %v4796, 0
      %4845 = vmatprep.subr.mxu0 0.0
      %4846 = vmatpush1.msra.mxu0 %v314
      %4847 = vmatprep.subr.mxu0 0.0
      %4848 = vmatpush1.msra.mxu0 %v315
      %4849 = vmatprep.subr.mxu0 0.0
      %4850 = vmatpush1.msra.mxu0 %v316
      %4851 = vmatprep.subr.mxu0 0.0
      %4852 = vmatpush1.msra.mxu0 %v317
      %4853 = vmatprep.subr.mxu0 0.0
      %4854 = vmatpush1.msra.mxu0 0.0
      %4855 = vmatprep.subr.mxu0 0.0
      %4856 = vmatpush1.msra.mxu0 0.0
      %4857 = vmatprep.subr.mxu0 0.0
      %4858 = vmatpush1.msra.mxu0 0.0
      %4859 = vmatprep.subr.mxu0 0.0
      %4860 = vmatpush1.msra.mxu0 0.0
      %4861 = vmatprep.subr.mxu0 0.0
      %4862 = vmatpush1.msra.mxu0 0.0
      %4863 = vmatprep.subr.mxu0 0.0
      %4864 = vmatpush1.msra.mxu0 0.0
      %4865 = vmatprep.subr.mxu0 0.0
      %4866 = vmatpush1.msra.mxu0 0.0
      %4867 = vmatprep.subr.mxu0 0.0
      %4868 = vmatpush1.msra.mxu0 0.0
      %4869 = vmatprep.subr.mxu0 0.0
      %4870 = vmatpush1.msra.mxu0 0.0
      %4871 = vmatprep.subr.mxu0 0.0
      %4872 = vmatpush1.msra.mxu0 0.0
      %4873 = vmatprep.subr.mxu0 0.0
      %4874 = vmatpush1.msra.mxu0 0.0
      %4875 = vmatprep.subr.mxu0 0.0
      %4876 = vmatpush1.msra.mxu0 0.0
      %4877 = vmatprep.subr.mxu0 0.0
      %4878 = vmatpush1.msra.mxu0 0.0
      %4879 = vmatprep.subr.mxu0 0.0
      %4880 = vmatpush1.msra.mxu0 0.0
      %4881 = vmatprep.subr.mxu0 0.0
      %4882 = vmatpush1.msra.mxu0 0.0
      %4883 = vmatprep.subr.mxu0 0.0
      %4884 = vmatpush1.msra.mxu0 0.0
      %4885 = vmatprep.subr.mxu0 0.0
      %4886 = vmatpush1.msra.mxu0 0.0
      %4887 = vmatprep.subr.mxu0 0.0
      %4888 = vmatpush1.msra.mxu0 0.0
      %4889 = vmatprep.subr.mxu0 0.0
      %4890 = vmatpush1.msra.mxu0 0.0
      %4891 = vmatprep.subr.mxu0 0.0
      %4892 = vmatpush1.msra.mxu0 0.0
      %4893 = vmatprep.subr.mxu0 0.0
      %4894 = vmatpush1.msra.mxu0 0.0
      %4895 = vmatprep.subr.mxu0 0.0
      %4896 = vmatpush1.msra.mxu0 0.0
      %4897 = vmatprep.subr.mxu0 0.0
      %4898 = vmatpush1.msra.mxu0 0.0
      %4899 = vmatprep.subr.mxu0 0.0
      %4900 = vmatpush1.msra.mxu0 0.0
      %4901 = vmatprep.subr.mxu0 0.0
      %4902 = vmatpush1.msra.mxu0 0.0
      %4903 = vmatprep.subr.mxu0 0.0
      %4904 = vmatpush1.msra.mxu0 0.0
      %4905 = vmatprep.subr.mxu0 0.0
      %4906 = vmatpush1.msra.mxu0 0.0
      %4907 = vmatprep.subr.mxu0 0.0
      %4908 = vmatpush1.msra.mxu0 0.0
      %4909 = vmatprep.mubr.f32.mxu0 0.0
      %4910 = vmatmul.mubr.f32.gmra.mrb[0].mxu0 %v4798
      %v4911 = vpop.f32.mrb[0].mxu0
      %v4912 = vadd.f32 %v323, %v4911
      %v4913 = vpop.f32.mrb[0].mxu0
      %4914 = vmatprep.mubr.f32.mxu0 0.0
      %4915 = vmatmul.mubr.f32.gmra.mrb[0].mxu0 %v4801
      %v4916 = vpop.f32.mrb[0].mxu0
      %v4917 = vadd.f32 %v323, %v4916
      %v4918 = vpop.f32.mrb[0].mxu0
      %4919 = vmatprep.mubr.f32.mxu0 0.0
      %4920 = vmatmul.mubr.f32.gmra.mrb[0].mxu0 %v4804
      %v4921 = vpop.f32.mrb[0].mxu0
      %v4922 = vadd.f32 %v323, %v4921
      %v4923 = vpop.f32.mrb[0].mxu0
      %4924 = vmatprep.mubr.f32.mxu0 0.0
      %4925 = vmatmul.mubr.f32.gmra.mrb[0].mxu0 %v4807
      %v4926 = vpop.f32.mrb[0].mxu0
      %v4927 = vadd.f32 %v323, %v4926
      %v4928 = vpop.f32.mrb[0].mxu0
      %4929 = vmatprep.mubr.f32.mxu0 0.0
      %4930 = vmatmul.mubr.f32.gmra.mrb[0].mxu0 %v4810
      %v4931 = vpop.f32.mrb[0].mxu0
      %v4932 = vadd.f32 %v323, %v4931
      %v4933 = vpop.f32.mrb[0].mxu0
      %4934 = vmatprep.mubr.f32.mxu0 0.0
      %4935 = vmatmul.mubr.f32.gmra.mrb[0].mxu0 %v4813
      %v4936 = vpop.f32.mrb[0].mxu0
      %v4937 = vadd.f32 %v323, %v4936
      %v4938 = vpop.f32.mrb[0].mxu0
      %4939 = vmatprep.mubr.f32.mxu0 0.0
      %4940 = vmatmul.mubr.f32.gmra.mrb[0].mxu0 %v4816
      %v4941 = vpop.f32.mrb[0].mxu0
      %v4942 = vadd.f32 %v323, %v4941
      %v4943 = vpop.f32.mrb[0].mxu0
      %4944 = vmatprep.mubr.f32.mxu0 0.0
      %4945 = vmatmul.mubr.f32.gmra.mrb[0].mxu0 %v4819
      %v4946 = vpop.f32.mrb[0].mxu0
      %v4947 = vadd.f32 %v323, %v4946
      %v4948 = vpop.f32.mrb[0].mxu0
      %4949 = vmatprep.mubr.f32.mxu0 0.0
      %4950 = vmatmul.mubr.f32.gmra.mrb[0].mxu0 %v4822
      %v4951 = vpop.f32.mrb[0].mxu0
      %v4952 = vadd.f32 %v323, %v4951
      %v4953 = vpop.f32.mrb[0].mxu0
      %4954 = vmatprep.mubr.f32.mxu0 0.0
      %4955 = vmatmul.mubr.f32.gmra.mrb[0].mxu0 %v4825
      %v4956 = vpop.f32.mrb[0].mxu0
      %v4957 = vadd.f32 %v323, %v4956
      %v4958 = vpop.f32.mrb[0].mxu0
      %4959 = vmatprep.mubr.f32.mxu0 0.0
      %4960 = vmatmul.mubr.f32.gmra.mrb[0].mxu0 %v4828
      %v4961 = vpop.f32.mrb[0].mxu0
      %v4962 = vadd.f32 %v323, %v4961
      %v4963 = vpop.f32.mrb[0].mxu0
      %4964 = vmatprep.mubr.f32.mxu0 0.0
      %4965 = vmatmul.mubr.f32.gmra.mrb[0].mxu0 %v4831
      %v4966 = vpop.f32.mrb[0].mxu0
      %v4967 = vadd.f32 %v323, %v4966
      %v4968 = vpop.f32.mrb[0].mxu0
      %4969 = vmatprep.mubr.f32.mxu0 0.0
      %4970 = vmatmul.mubr.f32.gmra.mrb[0].mxu0 %v4834
      %v4971 = vpop.f32.mrb[0].mxu0
      %v4972 = vadd.f32 %v323, %v4971
      %v4973 = vpop.f32.mrb[0].mxu0
      %4974 = vmatprep.mubr.f32.mxu0 0.0
      %4975 = vmatmul.mubr.f32.gmra.mrb[0].mxu0 %v4837
      %v4976 = vpop.f32.mrb[0].mxu0
      %v4977 = vadd.f32 %v323, %v4976
      %v4978 = vpop.f32.mrb[0].mxu0
      %4979 = vmatprep.mubr.f32.mxu0 0.0
      %4980 = vmatmul.mubr.f32.gmra.mrb[0].mxu0 %v4840
      %v4981 = vpop.f32.mrb[0].mxu0
      %v4982 = vadd.f32 %v323, %v4981
      %v4983 = vpop.f32.mrb[0].mxu0
      %4984 = vmatprep.mubr.f32.mxu0 0.0
      %4985 = vmatmul.mubr.f32.gmra.mrb[0].mxu0 %v4843
      %v4986 = vpop.f32.mrb[0].mxu0
      %v4987 = vadd.f32 %v323, %v4986
      %v4988 = vpop.f32.mrb[0].mxu0
      %4989 = vdwg.mxu0
      %v4990 = vmul.f32 %v4912, 0.5
      %v4991 = vmul.f32 %v4917, 0.5
      %v4992 = vmul.f32 %v4922, 0.5
      %v4993 = vmul.f32 %v4927, 0.5
      %v4994 = vmul.f32 %v4932, 0.5
      %v4995 = vmul.f32 %v4937, 0.5
      %v4996 = vmul.f32 %v4942, 0.5
      %v4997 = vmul.f32 %v4947, 0.5
      %v4998 = vmul.f32 %v4952, 0.5
      %v4999 = vmul.f32 %v4957, 0.5
      %v5000 = vmul.f32 %v4962, 0.5
      %v5001 = vmul.f32 %v4967, 0.5
      %v5002 = vmul.f32 %v4972, 0.5
      %v5003 = vmul.f32 %v4977, 0.5
      %v5004 = vmul.f32 %v4982, 0.5
      %v5005 = vmul.f32 %v4987, 0.5
      %v5006 = vmul.f32 %v4912, 0.044715
      %v5007 = vmul.f32 %v4917, 0.044715
      %v5008 = vmul.f32 %v4922, 0.044715
      %v5009 = vmul.f32 %v4927, 0.044715
      %v5010 = vmul.f32 %v4932, 0.044715
      %v5011 = vmul.f32 %v4937, 0.044715
      %v5012 = vmul.f32 %v4942, 0.044715
      %v5013 = vmul.f32 %v4947, 0.044715
      %v5014 = vmul.f32 %v4952, 0.044715
      %v5015 = vmul.f32 %v4957, 0.044715
      %v5016 = vmul.f32 %v4962, 0.044715
      %v5017 = vmul.f32 %v4967, 0.044715
      %v5018 = vmul.f32 %v4972, 0.044715
      %v5019 = vmul.f32 %v4977, 0.044715
      %v5020 = vmul.f32 %v4982, 0.044715
      %v5021 = vmul.f32 %v4987, 0.044715
      %v5022 = vmul.f32 %v5006, %v4912
      %v5023 = vmul.f32 %v5007, %v4917
      %v5024 = vmul.f32 %v5008, %v4922
      %v5025 = vmul.f32 %v5009, %v4927
      %v5026 = vmul.f32 %v5010, %v4932
      %v5027 = vmul.f32 %v5011, %v4937
      %v5028 = vmul.f32 %v5012, %v4942
      %v5029 = vmul.f32 %v5013, %v4947
      %v5030 = vmul.f32 %v5014, %v4952
      %v5031 = vmul.f32 %v5015, %v4957
      %v5032 = vmul.f32 %v5016, %v4962
      %v5033 = vmul.f32 %v5017, %v4967
      %v5034 = vmul.f32 %v5018, %v4972
      %v5035 = vmul.f32 %v5019, %v4977
      %v5036 = vmul.f32 %v5020, %v4982
      %v5037 = vmul.f32 %v5021, %v4987
      %v5038 = vmul.f32 %v5022, %v4912
      %v5039 = vmul.f32 %v5023, %v4917
      %v5040 = vmul.f32 %v5024, %v4922
      %v5041 = vmul.f32 %v5025, %v4927
      %v5042 = vmul.f32 %v5026, %v4932
      %v5043 = vmul.f32 %v5027, %v4937
      %v5044 = vmul.f32 %v5028, %v4942
      %v5045 = vmul.f32 %v5029, %v4947
      %v5046 = vmul.f32 %v5030, %v4952
      %v5047 = vmul.f32 %v5031, %v4957
      %v5048 = vmul.f32 %v5032, %v4962
      %v5049 = vmul.f32 %v5033, %v4967
      %v5050 = vmul.f32 %v5034, %v4972
      %v5051 = vmul.f32 %v5035, %v4977
      %v5052 = vmul.f32 %v5036, %v4982
      %v5053 = vmul.f32 %v5037, %v4987
      %v5054 = vadd.f32 %v4912, %v5038
      %v5055 = vadd.f32 %v4917, %v5039
      %v5056 = vadd.f32 %v4922, %v5040
      %v5057 = vadd.f32 %v4927, %v5041
      %v5058 = vadd.f32 %v4932, %v5042
      %v5059 = vadd.f32 %v4937, %v5043
      %v5060 = vadd.f32 %v4942, %v5044
      %v5061 = vadd.f32 %v4947, %v5045
      %v5062 = vadd.f32 %v4952, %v5046
      %v5063 = vadd.f32 %v4957, %v5047
      %v5064 = vadd.f32 %v4962, %v5048
      %v5065 = vadd.f32 %v4967, %v5049
      %v5066 = vadd.f32 %v4972, %v5050
      %v5067 = vadd.f32 %v4977, %v5051
      %v5068 = vadd.f32 %v4982, %v5052
      %v5069 = vadd.f32 %v4987, %v5053
      %v5070 = vmul.f32 %v5054, 0.7978846
      %v5071 = vmul.f32 %v5055, 0.7978846
      %v5072 = vmul.f32 %v5056, 0.7978846
      %v5073 = vmul.f32 %v5057, 0.7978846
      %v5074 = vmul.f32 %v5058, 0.7978846
      %v5075 = vmul.f32 %v5059, 0.7978846
      %v5076 = vmul.f32 %v5060, 0.7978846
      %v5077 = vmul.f32 %v5061, 0.7978846
      %v5078 = vmul.f32 %v5062, 0.7978846
      %v5079 = vmul.f32 %v5063, 0.7978846
      %v5080 = vmul.f32 %v5064, 0.7978846
      %v5081 = vmul.f32 %v5065, 0.7978846
      %v5082 = vmul.f32 %v5066, 0.7978846
      %v5083 = vmul.f32 %v5067, 0.7978846
      %v5084 = vmul.f32 %v5068, 0.7978846
      %v5085 = vmul.f32 %v5069, 0.7978846
      %v5086 = vtanh.pop %v5070
      %v5087 = vtanh.pop %v5071
      %v5088 = vtanh.pop %v5072
      %v5089 = vtanh.pop %v5073
      %v5090 = vtanh.pop %v5074
      %v5091 = vtanh.pop %v5075
      %v5092 = vtanh.pop %v5076
      %v5093 = vtanh.pop %v5077
      %v5094 = vtanh.pop %v5078
      %v5095 = vtanh.pop %v5079
      %v5096 = vtanh.pop %v5080
      %v5097 = vtanh.pop %v5081
      %v5098 = vtanh.pop %v5082
      %v5099 = vtanh.pop %v5083
      %v5100 = vtanh.pop %v5084
      %v5101 = vtanh.pop %v5085
      %v5102 = vadd.f32 %v5086, 1.0
      %v5103 = vadd.f32 %v5087, 1.0
      %v5104 = vadd.f32 %v5088, 1.0
      %v5105 = vadd.f32 %v5089, 1.0
      %v5106 = vadd.f32 %v5090, 1.0
      %v5107 = vadd.f32 %v5091, 1.0
      %v5108 = vadd.f32 %v5092, 1.0
      %v5109 = vadd.f32 %v5093, 1.0
      %v5110 = vadd.f32 %v5094, 1.0
      %v5111 = vadd.f32 %v5095, 1.0
      %v5112 = vadd.f32 %v5096, 1.0
      %v5113 = vadd.f32 %v5097, 1.0
      %v5114 = vadd.f32 %v5098, 1.0
      %v5115 = vadd.f32 %v5099, 1.0
      %v5116 = vadd.f32 %v5100, 1.0
      %v5117 = vadd.f32 %v5101, 1.0
      %v5118 = vmul.f32 %v4990, %v5102
      %v5119 = vmul.f32 %v4991, %v5103
      %v5120 = vmul.f32 %v4992, %v5104
      %v5121 = vmul.f32 %v4993, %v5105
      %v5122 = vmul.f32 %v4994, %v5106
      %v5123 = vmul.f32 %v4995, %v5107
      %v5124 = vmul.f32 %v4996, %v5108
      %v5125 = vmul.f32 %v4997, %v5109
      %v5126 = vmul.f32 %v4998, %v5110
      %v5127 = vmul.f32 %v4999, %v5111
      %v5128 = vmul.f32 %v5000, %v5112
      %v5129 = vmul.f32 %v5001, %v5113
      %v5130 = vmul.f32 %v5002, %v5114
      %v5131 = vmul.f32 %v5003, %v5115
      %v5132 = vmul.f32 %v5004, %v5116
      %v5133 = vmul.f32 %v5005, %v5117
      %5134 = vmatprep.subr.mxu0 0.0
      %5135 = vmatpush1.xpose.msra.mxu0 %v318
      %5136 = vmatprep.subr.mxu0 0.0
      %5137 = vmatpush1.xpose.msra.mxu0 %v319
      %5138 = vmatprep.subr.mxu0 0.0
      %5139 = vmatpush1.xpose.msra.mxu0 %v320
      %5140 = vmatprep.subr.mxu0 0.0
      %5141 = vmatpush1.xpose.msra.mxu0 %v321
      %5142 = vmatprep.subr.mxu0 0.0
      %5143 = vmatpush1.xpose.msra.mxu0 0.0
      %5144 = vmatprep.subr.mxu0 0.0
      %5145 = vmatpush1.xpose.msra.mxu0 0.0
      %5146 = vmatprep.subr.mxu0 0.0
      %5147 = vmatpush1.xpose.msra.mxu0 0.0
      %5148 = vmatprep.subr.mxu0 0.0
      %5149 = vmatpush1.xpose.msra.mxu0 0.0
      %5150 = vmatprep.subr.mxu0 0.0
      %5151 = vmatpush1.xpose.msra.mxu0 0.0
      %5152 = vmatprep.subr.mxu0 0.0
      %5153 = vmatpush1.xpose.msra.mxu0 0.0
      %5154 = vmatprep.subr.mxu0 0.0
      %5155 = vmatpush1.xpose.msra.mxu0 0.0
      %5156 = vmatprep.subr.mxu0 0.0
      %5157 = vmatpush1.xpose.msra.mxu0 0.0
      %5158 = vmatprep.subr.mxu0 0.0
      %5159 = vmatpush1.xpose.msra.mxu0 0.0
      %5160 = vmatprep.subr.mxu0 0.0
      %5161 = vmatpush1.xpose.msra.mxu0 0.0
      %5162 = vmatprep.subr.mxu0 0.0
      %5163 = vmatpush1.xpose.msra.mxu0 0.0
      %5164 = vmatprep.subr.mxu0 0.0
      %5165 = vmatpush1.xpose.msra.mxu0 0.0
      %5166 = vmatprep.subr.mxu0 0.0
      %5167 = vmatpush1.xpose.msra.mxu0 0.0
      %5168 = vmatprep.subr.mxu0 0.0
      %5169 = vmatpush1.xpose.msra.mxu0 0.0
      %5170 = vmatprep.subr.mxu0 0.0
      %5171 = vmatpush1.xpose.msra.mxu0 0.0
      %5172 = vmatprep.subr.mxu0 0.0
      %5173 = vmatpush1.xpose.msra.mxu0 0.0
      %5174 = vmatprep.subr.mxu0 0.0
      %5175 = vmatpush1.xpose.msra.mxu0 0.0
      %5176 = vmatprep.subr.mxu0 0.0
      %5177 = vmatpush1.xpose.msra.mxu0 0.0
      %5178 = vmatprep.subr.mxu0 0.0
      %5179 = vmatpush1.xpose.msra.mxu0 0.0
      %5180 = vmatprep.subr.mxu0 0.0
      %5181 = vmatpush1.xpose.msra.mxu0 0.0
      %5182 = vmatprep.subr.mxu0 0.0
      %5183 = vmatpush1.xpose.msra.mxu0 0.0
      %5184 = vmatprep.subr.mxu0 0.0
      %5185 = vmatpush1.xpose.msra.mxu0 0.0
      %5186 = vmatprep.subr.mxu0 0.0
      %5187 = vmatpush1.xpose.msra.mxu0 0.0
      %5188 = vmatprep.subr.mxu0 0.0
      %5189 = vmatpush1.xpose.msra.mxu0 0.0
      %5190 = vmatprep.subr.mxu0 0.0
      %5191 = vmatpush1.xpose.msra.mxu0 0.0
      %5192 = vmatprep.subr.mxu0 0.0
      %5193 = vmatpush1.xpose.msra.mxu0 0.0
      %5194 = vmatprep.subr.mxu0 0.0
      %5195 = vmatpush1.xpose.msra.mxu0 0.0
      %5196 = vmatprep.subr.mxu0 0.0
      %5197 = vmatpush1.xpose.msra.mxu0 0.0
      %5198 = vmatprep.mubr.f32.mxu0 0.0
      %5199 = vmatmul.mubr.f32.gmra.mrb[0].mxu0 %v5118
      %v5200 = vpop.f32.mrb[0].mxu0
      %v5201 = vadd.f32 %v324, %v5200
      %v5202 = vpop.f32.mrb[0].mxu0
      %5203 = vmatprep.mubr.f32.mxu0 0.0
      %5204 = vmatmul.mubr.f32.gmra.mrb[0].mxu0 %v5119
      %v5205 = vpop.f32.mrb[0].mxu0
      %v5206 = vadd.f32 %v324, %v5205
      %v5207 = vpop.f32.mrb[0].mxu0
      %5208 = vmatprep.mubr.f32.mxu0 0.0
      %5209 = vmatmul.mubr.f32.gmra.mrb[0].mxu0 %v5120
      %v5210 = vpop.f32.mrb[0].mxu0
      %v5211 = vadd.f32 %v324, %v5210
      %v5212 = vpop.f32.mrb[0].mxu0
      %5213 = vmatprep.mubr.f32.mxu0 0.0
      %5214 = vmatmul.mubr.f32.gmra.mrb[0].mxu0 %v5121
      %v5215 = vpop.f32.mrb[0].mxu0
      %v5216 = vadd.f32 %v324, %v5215
      %v5217 = vpop.f32.mrb[0].mxu0
      %5218 = vmatprep.mubr.f32.mxu0 0.0
      %5219 = vmatmul.mubr.f32.gmra.mrb[0].mxu0 %v5122
      %v5220 = vpop.f32.mrb[0].mxu0
      %v5221 = vadd.f32 %v324, %v5220
      %v5222 = vpop.f32.mrb[0].mxu0
      %5223 = vmatprep.mubr.f32.mxu0 0.0
      %5224 = vmatmul.mubr.f32.gmra.mrb[0].mxu0 %v5123
      %v5225 = vpop.f32.mrb[0].mxu0
      %v5226 = vadd.f32 %v324, %v5225
      %v5227 = vpop.f32.mrb[0].mxu0
      %5228 = vmatprep.mubr.f32.mxu0 0.0
      %5229 = vmatmul.mubr.f32.gmra.mrb[0].mxu0 %v5124
      %v5230 = vpop.f32.mrb[0].mxu0
      %v5231 = vadd.f32 %v324, %v5230
      %v5232 = vpop.f32.mrb[0].mxu0
      %5233 = vmatprep.mubr.f32.mxu0 0.0
      %5234 = vmatmul.mubr.f32.gmra.mrb[0].mxu0 %v5125
      %v5235 = vpop.f32.mrb[0].mxu0
      %v5236 = vadd.f32 %v324, %v5235
      %v5237 = vpop.f32.mrb[0].mxu0
      %5238 = vmatprep.mubr.f32.mxu0 0.0
      %5239 = vmatmul.mubr.f32.gmra.mrb[0].mxu0 %v5126
      %v5240 = vpop.f32.mrb[0].mxu0
      %v5241 = vadd.f32 %v324, %v5240
      %v5242 = vpop.f32.mrb[0].mxu0
      %5243 = vmatprep.mubr.f32.mxu0 0.0
      %5244 = vmatmul.mubr.f32.gmra.mrb[0].mxu0 %v5127
      %v5245 = vpop.f32.mrb[0].mxu0
      %v5246 = vadd.f32 %v324, %v5245
      %v5247 = vpop.f32.mrb[0].mxu0
      %5248 = vmatprep.mubr.f32.mxu0 0.0
      %5249 = vmatmul.mubr.f32.gmra.mrb[0].mxu0 %v5128
      %v5250 = vpop.f32.mrb[0].mxu0
      %v5251 = vadd.f32 %v324, %v5250
      %v5252 = vpop.f32.mrb[0].mxu0
      %5253 = vmatprep.mubr.f32.mxu0 0.0
      %5254 = vmatmul.mubr.f32.gmra.mrb[0].mxu0 %v5129
      %v5255 = vpop.f32.mrb[0].mxu0
      %v5256 = vadd.f32 %v324, %v5255
      %v5257 = vpop.f32.mrb[0].mxu0
      %5258 = vmatprep.mubr.f32.mxu0 0.0
      %5259 = vmatmul.mubr.f32.gmra.mrb[0].mxu0 %v5130
      %v5260 = vpop.f32.mrb[0].mxu0
      %v5261 = vadd.f32 %v324, %v5260
      %v5262 = vpop.f32.mrb[0].mxu0
      %5263 = vmatprep.mubr.f32.mxu0 0.0
      %5264 = vmatmul.mubr.f32.gmra.mrb[0].mxu0 %v5131
      %v5265 = vpop.f32.mrb[0].mxu0
      %v5266 = vadd.f32 %v324, %v5265
      %v5267 = vpop.f32.mrb[0].mxu0
      %5268 = vmatprep.mubr.f32.mxu0 0.0
      %5269 = vmatmul.mubr.f32.gmra.mrb[0].mxu0 %v5132
      %v5270 = vpop.f32.mrb[0].mxu0
      %v5271 = vadd.f32 %v324, %v5270
      %v5272 = vpop.f32.mrb[0].mxu0
      %5273 = vmatprep.mubr.f32.mxu0 0.0
      %5274 = vmatmul.mubr.f32.gmra.mrb[0].mxu0 %v5133
      %v5275 = vpop.f32.mrb[0].mxu0
      %v5276 = vadd.f32 %v324, %v5275
      %v5277 = vpop.f32.mrb[0].mxu0
      %5278 = vdwg.mxu0
      %v5279 = vlaneseq
      %v5280 = vshrl.u32 %v5279, 7
      %v5281 = vsub.s32 5, %v5280
      %v5282 = vrot.slane %v325, %v5281
      %v5283 = vlaneseq
      %v5284 = vshrl.u32 %v5283, 7
      %v5285 = vsub.s32 5, %v5284
      %v5286 = vrot.slane %v326, %v5285
      %v5287 = vmul.f32 %v5282, %v5201
      %v5288 = vmul.f32 %v5282, %v5206
      %v5289 = vmul.f32 %v5282, %v5211
      %v5290 = vmul.f32 %v5282, %v5216
      %v5291 = vmul.f32 %v5282, %v5221
      %v5292 = vmul.f32 %v5282, %v5226
      %v5293 = vmul.f32 %v5282, %v5231
      %v5294 = vmul.f32 %v5282, %v5236
      %v5295 = vmul.f32 %v5286, %v5241
      %v5296 = vmul.f32 %v5286, %v5246
      %v5297 = vmul.f32 %v5286, %v5251
      %v5298 = vmul.f32 %v5286, %v5256
      %v5299 = vmul.f32 %v5286, %v5261
      %v5300 = vmul.f32 %v5286, %v5266
      %v5301 = vmul.f32 %v5286, %v5271
      %v5302 = vmul.f32 %v5286, %v5276
      %v5303 = vadd.f32 %v4525, %v5287
      %v5304 = vadd.f32 %v4526, %v5288
      %v5305 = vadd.f32 %v4527, %v5289
      %v5306 = vadd.f32 %v4528, %v5290
      %v5307 = vadd.f32 %v4529, %v5291
      %v5308 = vadd.f32 %v4530, %v5292
      %v5309 = vadd.f32 %v4531, %v5293
      %v5310 = vadd.f32 %v4532, %v5294
      %v5311 = vadd.f32 %v4533, %v5295
      %v5312 = vadd.f32 %v4534, %v5296
      %v5313 = vadd.f32 %v4535, %v5297
      %v5314 = vadd.f32 %v4536, %v5298
      %v5315 = vadd.f32 %v4537, %v5299
      %v5316 = vadd.f32 %v4538, %v5300
      %v5317 = vadd.f32 %v4539, %v5301
      %v5318 = vadd.f32 %v4540, %v5302
      %5319 = vst.msk [vmem:[#allocation2] sm:$0xff] %vm327, %v5303
      %5320 = vst.msk [vmem:[#allocation2 + $0x8] sm:$0xff] %vm327, %v5304
      %5321 = vst.msk [vmem:[#allocation2 + $0x10] sm:$0xff] %vm327, %v5305
      %5322 = vst.msk [vmem:[#allocation2 + $0x18] sm:$0xff] %vm327, %v5306
      %5323 = vst.msk [vmem:[#allocation2 + $0x20] sm:$0xff] %vm327, %v5307
      %5324 = vst.msk [vmem:[#allocation2 + $0x28] sm:$0xff] %vm327, %v5308
      %5325 = vst.msk [vmem:[#allocation2 + $0x30] sm:$0xff] %vm327, %v5309
      %5326 = vst.msk [vmem:[#allocation2 + $0x38] sm:$0xff] %vm327, %v5310
      %5327 = vst.msk [vmem:[#allocation2 + $0x40] sm:$0xff] %vm327, %v5311
      %5328 = vst.msk [vmem:[#allocation2 + $0x48] sm:$0xff] %vm327, %v5312
      %5329 = vst.msk [vmem:[#allocation2 + $0x50] sm:$0xff] %vm327, %v5313
      %5330 = vst.msk [vmem:[#allocation2 + $0x58] sm:$0xff] %vm327, %v5314
      %5331 = vst.msk [vmem:[#allocation2 + $0x60] sm:$0xff] %vm327, %v5315
      %5332 = vst.msk [vmem:[#allocation2 + $0x68] sm:$0xff] %vm327, %v5316
      %5333 = vst.msk [vmem:[#allocation2 + $0x70] sm:$0xff] %vm327, %v5317
      %5334 = vst.msk [vmem:[#allocation2 + $0x78] sm:$0xff] %vm327, %v5318
      %p5335 = scmp.eq.s32.totalorder %s17, 1
      // Predicated region
      $region49: #{dit_forward.1} parent=43 // pred_check
        %p5336 = pneg %p5335
      $region50: #{dit_forward.1} parent=43 // pred_check_branch
        %5338 = sbr.rel (%p5336) target = $region52
      $region51: #{dit_forward.1} parent=43 // pred_region
        %v5339 = vld [vmem:[%s2] sm:$0x3]
        %v5340 = vld [vmem:[%s2 + $0x2] sm:$0x3]
        %v5341 = vsel %vm327, %v5303, 0.0
        %5342 = vadd.xlane.f32.xlu0 %v5341
        %v5343 = vpop.xlane.xlu0 %5342
        %v5344 = vsel %vm327, %v5304, 0.0
        %5345 = vadd.xlane.f32.xlu0 %v5344
        %v5346 = vpop.xlane.xlu0 %5345
        %v5347 = vsel %vm327, %v5305, 0.0
        %5348 = vadd.xlane.f32.xlu0 %v5347
        %v5349 = vpop.xlane.xlu0 %5348
        %v5350 = vsel %vm327, %v5306, 0.0
        %5351 = vadd.xlane.f32.xlu0 %v5350
        %v5352 = vpop.xlane.xlu0 %5351
        %v5353 = vsel %vm327, %v5307, 0.0
        %5354 = vadd.xlane.f32.xlu0 %v5353
        %v5355 = vpop.xlane.xlu0 %5354
        %v5356 = vsel %vm327, %v5308, 0.0
        %5357 = vadd.xlane.f32.xlu0 %v5356
        %v5358 = vpop.xlane.xlu0 %5357
        %v5359 = vsel %vm327, %v5309, 0.0
        %5360 = vadd.xlane.f32.xlu0 %v5359
        %v5361 = vpop.xlane.xlu0 %5360
        %v5362 = vsel %vm327, %v5310, 0.0
        %5363 = vadd.xlane.f32.xlu0 %v5362
        %v5364 = vpop.xlane.xlu0 %5363
        %v5365 = vsel %vm327, %v5311, 0.0
        %5366 = vadd.xlane.f32.xlu0 %v5365
        %v5367 = vpop.xlane.xlu0 %5366
        %v5368 = vsel %vm327, %v5312, 0.0
        %5369 = vadd.xlane.f32.xlu0 %v5368
        %v5370 = vpop.xlane.xlu0 %5369
        %v5371 = vsel %vm327, %v5313, 0.0
        %5372 = vadd.xlane.f32.xlu0 %v5371
        %v5373 = vpop.xlane.xlu0 %5372
        %v5374 = vsel %vm327, %v5314, 0.0
        %5375 = vadd.xlane.f32.xlu0 %v5374
        %v5376 = vpop.xlane.xlu0 %5375
        %v5377 = vsel %vm327, %v5315, 0.0
        %5378 = vadd.xlane.f32.xlu0 %v5377
        %v5379 = vpop.xlane.xlu0 %5378
        %v5380 = vsel %vm327, %v5316, 0.0
        %5381 = vadd.xlane.f32.xlu0 %v5380
        %v5382 = vpop.xlane.xlu0 %5381
        %v5383 = vsel %vm327, %v5317, 0.0
        %5384 = vadd.xlane.f32.xlu0 %v5383
        %v5385 = vpop.xlane.xlu0 %5384
        %v5386 = vsel %vm327, %v5318, 0.0
        %5387 = vadd.xlane.f32.xlu0 %v5386
        %v5388 = vpop.xlane.xlu0 %5387
        %v5389 = vmul.f32 %v5343, %v376
        %v5390 = vmul.f32 %v5346, %v376
        %v5391 = vmul.f32 %v5349, %v376
        %v5392 = vmul.f32 %v5352, %v376
        %v5393 = vmul.f32 %v5355, %v376
        %v5394 = vmul.f32 %v5358, %v376
        %v5395 = vmul.f32 %v5361, %v376
        %v5396 = vmul.f32 %v5364, %v376
        %v5397 = vmul.f32 %v5367, %v376
        %v5398 = vmul.f32 %v5370, %v376
        %v5399 = vmul.f32 %v5373, %v376
        %v5400 = vmul.f32 %v5376, %v376
        %v5401 = vmul.f32 %v5379, %v376
        %v5402 = vmul.f32 %v5382, %v376
        %v5403 = vmul.f32 %v5385, %v376
        %v5404 = vmul.f32 %v5388, %v376
        %v5405 = vsub.f32 %v5303, %v5389
        %v5406 = vsub.f32 %v5304, %v5390
        %v5407 = vsub.f32 %v5305, %v5391
        %v5408 = vsub.f32 %v5306, %v5392
        %v5409 = vsub.f32 %v5307, %v5393
        %v5410 = vsub.f32 %v5308, %v5394
        %v5411 = vsub.f32 %v5309, %v5395
        %v5412 = vsub.f32 %v5310, %v5396
        %v5413 = vsub.f32 %v5311, %v5397
        %v5414 = vsub.f32 %v5312, %v5398
        %v5415 = vsub.f32 %v5313, %v5399
        %v5416 = vsub.f32 %v5314, %v5400
        %v5417 = vsub.f32 %v5315, %v5401
        %v5418 = vsub.f32 %v5316, %v5402
        %v5419 = vsub.f32 %v5317, %v5403
        %v5420 = vsub.f32 %v5318, %v5404
        %v5421 = vmul.f32 %v5405, %v5405
        %v5422 = vmul.f32 %v5406, %v5406
        %v5423 = vmul.f32 %v5407, %v5407
        %v5424 = vmul.f32 %v5408, %v5408
        %v5425 = vmul.f32 %v5409, %v5409
        %v5426 = vmul.f32 %v5410, %v5410
        %v5427 = vmul.f32 %v5411, %v5411
        %v5428 = vmul.f32 %v5412, %v5412
        %v5429 = vmul.f32 %v5413, %v5413
        %v5430 = vmul.f32 %v5414, %v5414
        %v5431 = vmul.f32 %v5415, %v5415
        %v5432 = vmul.f32 %v5416, %v5416
        %v5433 = vmul.f32 %v5417, %v5417
        %v5434 = vmul.f32 %v5418, %v5418
        %v5435 = vmul.f32 %v5419, %v5419
        %v5436 = vmul.f32 %v5420, %v5420
        %v5437 = vsel %vm327, %v5421, 0.0
        %5438 = vadd.xlane.f32.xlu0 %v5437
        %v5439 = vpop.xlane.xlu0 %5438
        %v5440 = vsel %vm327, %v5422, 0.0
        %5441 = vadd.xlane.f32.xlu0 %v5440
        %v5442 = vpop.xlane.xlu0 %5441
        %v5443 = vsel %vm327, %v5423, 0.0
        %5444 = vadd.xlane.f32.xlu0 %v5443
        %v5445 = vpop.xlane.xlu0 %5444
        %v5446 = vsel %vm327, %v5424, 0.0
        %5447 = vadd.xlane.f32.xlu0 %v5446
        %v5448 = vpop.xlane.xlu0 %5447
        %v5449 = vsel %vm327, %v5425, 0.0
        %5450 = vadd.xlane.f32.xlu0 %v5449
        %v5451 = vpop.xlane.xlu0 %5450
        %v5452 = vsel %vm327, %v5426, 0.0
        %5453 = vadd.xlane.f32.xlu0 %v5452
        %v5454 = vpop.xlane.xlu0 %5453
        %v5455 = vsel %vm327, %v5427, 0.0
        %5456 = vadd.xlane.f32.xlu0 %v5455
        %v5457 = vpop.xlane.xlu0 %5456
        %v5458 = vsel %vm327, %v5428, 0.0
        %5459 = vadd.xlane.f32.xlu0 %v5458
        %v5460 = vpop.xlane.xlu0 %5459
        %v5461 = vsel %vm327, %v5429, 0.0
        %5462 = vadd.xlane.f32.xlu0 %v5461
        %v5463 = vpop.xlane.xlu0 %5462
        %v5464 = vsel %vm327, %v5430, 0.0
        %5465 = vadd.xlane.f32.xlu0 %v5464
        %v5466 = vpop.xlane.xlu0 %5465
        %v5467 = vsel %vm327, %v5431, 0.0
        %5468 = vadd.xlane.f32.xlu0 %v5467
        %v5469 = vpop.xlane.xlu0 %5468
        %v5470 = vsel %vm327, %v5432, 0.0
        %5471 = vadd.xlane.f32.xlu0 %v5470
        %v5472 = vpop.xlane.xlu0 %5471
        %v5473 = vsel %vm327, %v5433, 0.0
        %5474 = vadd.xlane.f32.xlu0 %v5473
        %v5475 = vpop.xlane.xlu0 %5474
        %v5476 = vsel %vm327, %v5434, 0.0
        %5477 = vadd.xlane.f32.xlu0 %v5476
        %v5478 = vpop.xlane.xlu0 %5477
        %v5479 = vsel %vm327, %v5435, 0.0
        %5480 = vadd.xlane.f32.xlu0 %v5479
        %v5481 = vpop.xlane.xlu0 %5480
        %v5482 = vsel %vm327, %v5436, 0.0
        %5483 = vadd.xlane.f32.xlu0 %v5482
        %v5484 = vpop.xlane.xlu0 %5483
        %v5485 = vmul.f32 %v5439, %v376
        %v5486 = vmul.f32 %v5442, %v376
        %v5487 = vmul.f32 %v5445, %v376
        %v5488 = vmul.f32 %v5448, %v376
        %v5489 = vmul.f32 %v5451, %v376
        %v5490 = vmul.f32 %v5454, %v376
        %v5491 = vmul.f32 %v5457, %v376
        %v5492 = vmul.f32 %v5460, %v376
        %v5493 = vmul.f32 %v5463, %v376
        %v5494 = vmul.f32 %v5466, %v376
        %v5495 = vmul.f32 %v5469, %v376
        %v5496 = vmul.f32 %v5472, %v376
        %v5497 = vmul.f32 %v5475, %v376
        %v5498 = vmul.f32 %v5478, %v376
        %v5499 = vmul.f32 %v5481, %v376
        %v5500 = vmul.f32 %v5484, %v376
        %v5501 = vadd.f32 %v5485, 1e-06
        %v5502 = vadd.f32 %v5486, 1e-06
        %v5503 = vadd.f32 %v5487, 1e-06
        %v5504 = vadd.f32 %v5488, 1e-06
        %v5505 = vadd.f32 %v5489, 1e-06
        %v5506 = vadd.f32 %v5490, 1e-06
        %v5507 = vadd.f32 %v5491, 1e-06
        %v5508 = vadd.f32 %v5492, 1e-06
        %v5509 = vadd.f32 %v5493, 1e-06
        %v5510 = vadd.f32 %v5494, 1e-06
        %v5511 = vadd.f32 %v5495, 1e-06
        %v5512 = vadd.f32 %v5496, 1e-06
        %v5513 = vadd.f32 %v5497, 1e-06
        %v5514 = vadd.f32 %v5498, 1e-06
        %v5515 = vadd.f32 %v5499, 1e-06
        %v5516 = vadd.f32 %v5500, 1e-06
        %v5517 = vrsqrt.pop %v5501
        %v5518 = vrsqrt.pop %v5502
        %v5519 = vrsqrt.pop %v5503
        %v5520 = vrsqrt.pop %v5504
        %v5521 = vrsqrt.pop %v5505
        %v5522 = vrsqrt.pop %v5506
        %v5523 = vrsqrt.pop %v5507
        %v5524 = vrsqrt.pop %v5508
        %v5525 = vrsqrt.pop %v5509
        %v5526 = vrsqrt.pop %v5510
        %v5527 = vrsqrt.pop %v5511
        %v5528 = vrsqrt.pop %v5512
        %v5529 = vrsqrt.pop %v5513
        %v5530 = vrsqrt.pop %v5514
        %v5531 = vrsqrt.pop %v5515
        %v5532 = vrsqrt.pop %v5516
        %v5533 = vmul.f32 %v5405, %v5517
        %v5534 = vmul.f32 %v5406, %v5518
        %v5535 = vmul.f32 %v5407, %v5519
        %v5536 = vmul.f32 %v5408, %v5520
        %v5537 = vmul.f32 %v5409, %v5521
        %v5538 = vmul.f32 %v5410, %v5522
        %v5539 = vmul.f32 %v5411, %v5523
        %v5540 = vmul.f32 %v5412, %v5524
        %v5541 = vmul.f32 %v5413, %v5525
        %v5542 = vmul.f32 %v5414, %v5526
        %v5543 = vmul.f32 %v5415, %v5527
        %v5544 = vmul.f32 %v5416, %v5528
        %v5545 = vmul.f32 %v5417, %v5529
        %v5546 = vmul.f32 %v5418, %v5530
        %v5547 = vmul.f32 %v5419, %v5531
        %v5548 = vmul.f32 %v5420, %v5532
        %v5549 = vadd.f32 %v5339, 1.0
        %v5550 = vadd.f32 %v5340, 1.0
        %v5551 = vlaneseq
        %v5552 = vshrl.u32 %v5551, 7
        %v5553 = vsub.s32 1, %v5552
        %v5554 = vrot.slane %v5549, %v5553
        %v5555 = vlaneseq
        %v5556 = vshrl.u32 %v5555, 7
        %v5557 = vsub.s32 1, %v5556
        %v5558 = vrot.slane %v5550, %v5557
        %v5559 = vmul.f32 %v5533, %v5554
        %v5560 = vmul.f32 %v5534, %v5554
        %v5561 = vmul.f32 %v5535, %v5554
        %v5562 = vmul.f32 %v5536, %v5554
        %v5563 = vmul.f32 %v5537, %v5554
        %v5564 = vmul.f32 %v5538, %v5554
        %v5565 = vmul.f32 %v5539, %v5554
        %v5566 = vmul.f32 %v5540, %v5554
        %v5567 = vmul.f32 %v5541, %v5558
        %v5568 = vmul.f32 %v5542, %v5558
        %v5569 = vmul.f32 %v5543, %v5558
        %v5570 = vmul.f32 %v5544, %v5558
        %v5571 = vmul.f32 %v5545, %v5558
        %v5572 = vmul.f32 %v5546, %v5558
        %v5573 = vmul.f32 %v5547, %v5558
        %v5574 = vmul.f32 %v5548, %v5558
        %v5575 = vlaneseq
        %v5576 = vshrl.u32 %v5575, 7
        %v5577 = vsub.s32 0, %v5576
        %v5578 = vrot.slane %v5339, %v5577
        %v5579 = vlaneseq
        %v5580 = vshrl.u32 %v5579, 7
        %v5581 = vsub.s32 0, %v5580
        %v5582 = vrot.slane %v5340, %v5581
        %v5583 = vadd.f32 %v5559, %v5578
        %v5584 = vadd.f32 %v5560, %v5578
        %v5585 = vadd.f32 %v5561, %v5578
        %v5586 = vadd.f32 %v5562, %v5578
        %v5587 = vadd.f32 %v5563, %v5578
        %v5588 = vadd.f32 %v5564, %v5578
        %v5589 = vadd.f32 %v5565, %v5578
        %v5590 = vadd.f32 %v5566, %v5578
        %v5591 = vadd.f32 %v5567, %v5582
        %v5592 = vadd.f32 %v5568, %v5582
        %v5593 = vadd.f32 %v5569, %v5582
        %v5594 = vadd.f32 %v5570, %v5582
        %v5595 = vadd.f32 %v5571, %v5582
        %v5596 = vadd.f32 %v5572, %v5582
        %v5597 = vadd.f32 %v5573, %v5582
        %v5598 = vadd.f32 %v5574, %v5582
        %v5599 = vld [vmem:[%s4] sm:$0xff]
        %v5600 = vld [vmem:[%s4 + $0x8] sm:$0xff]
        %v5601 = vld [vmem:[%s4 + $0x10] sm:$0xff]
        %v5602 = vld [vmem:[%s4 + $0x18] sm:$0xff]
        %v5603 = vld [vmem:[%s5] sm:$0x1]
        %v5605 = vlaneseq
        %v5606 = vshrl.u32 %v5605, 7
        %v5607 = vsub.s32 0, %v5606
        %v5608 = vrot.slane %v5603, %v5607
        %v5611 = vsel %vm327, %v5583, 0
        %v5614 = vsel %vm327, %v5584, 0
        %v5617 = vsel %vm327, %v5585, 0
        %v5620 = vsel %vm327, %v5586, 0
        %v5623 = vsel %vm327, %v5587, 0
        %v5626 = vsel %vm327, %v5588, 0
        %v5629 = vsel %vm327, %v5589, 0
        %v5632 = vsel %vm327, %v5590, 0
        %v5635 = vsel %vm327, %v5591, 0
        %v5638 = vsel %vm327, %v5592, 0
        %v5641 = vsel %vm327, %v5593, 0
        %v5644 = vsel %vm327, %v5594, 0
        %v5647 = vsel %vm327, %v5595, 0
        %v5650 = vsel %vm327, %v5596, 0
        %v5653 = vsel %vm327, %v5597, 0
        %v5656 = vsel %vm327, %v5598, 0
        %5658 = vmatprep.subr.mxu0 0.0
        %5659 = vmatpush1.msra.mxu0 %v5599
        %5660 = vmatprep.subr.mxu0 0.0
        %5661 = vmatpush1.msra.mxu0 %v5600
        %5662 = vmatprep.subr.mxu0 0.0
        %5663 = vmatpush1.msra.mxu0 %v5601
        %5664 = vmatprep.subr.mxu0 0.0
        %5665 = vmatpush1.msra.mxu0 %v5602
        %5666 = vmatprep.subr.mxu0 0.0
        %5667 = vmatpush1.msra.mxu0 0.0
        %5668 = vmatprep.subr.mxu0 0.0
        %5669 = vmatpush1.msra.mxu0 0.0
        %5670 = vmatprep.subr.mxu0 0.0
        %5671 = vmatpush1.msra.mxu0 0.0
        %5672 = vmatprep.subr.mxu0 0.0
        %5673 = vmatpush1.msra.mxu0 0.0
        %5674 = vmatprep.subr.mxu0 0.0
        %5675 = vmatpush1.msra.mxu0 0.0
        %5676 = vmatprep.subr.mxu0 0.0
        %5677 = vmatpush1.msra.mxu0 0.0
        %5678 = vmatprep.subr.mxu0 0.0
        %5679 = vmatpush1.msra.mxu0 0.0
        %5680 = vmatprep.subr.mxu0 0.0
        %5681 = vmatpush1.msra.mxu0 0.0
        %5682 = vmatprep.subr.mxu0 0.0
        %5683 = vmatpush1.msra.mxu0 0.0
        %5684 = vmatprep.subr.mxu0 0.0
        %5685 = vmatpush1.msra.mxu0 0.0
        %5686 = vmatprep.subr.mxu0 0.0
        %5687 = vmatpush1.msra.mxu0 0.0
        %5688 = vmatprep.subr.mxu0 0.0
        %5689 = vmatpush1.msra.mxu0 0.0
        %5690 = vmatprep.subr.mxu0 0.0
        %5691 = vmatpush1.msra.mxu0 0.0
        %5692 = vmatprep.subr.mxu0 0.0
        %5693 = vmatpush1.msra.mxu0 0.0
        %5694 = vmatprep.subr.mxu0 0.0
        %5695 = vmatpush1.msra.mxu0 0.0
        %5696 = vmatprep.subr.mxu0 0.0
        %5697 = vmatpush1.msra.mxu0 0.0
        %5698 = vmatprep.subr.mxu0 0.0
        %5699 = vmatpush1.msra.mxu0 0.0
        %5700 = vmatprep.subr.mxu0 0.0
        %5701 = vmatpush1.msra.mxu0 0.0
        %5702 = vmatprep.subr.mxu0 0.0
        %5703 = vmatpush1.msra.mxu0 0.0
        %5704 = vmatprep.subr.mxu0 0.0
        %5705 = vmatpush1.msra.mxu0 0.0
        %5706 = vmatprep.subr.mxu0 0.0
        %5707 = vmatpush1.msra.mxu0 0.0
        %5708 = vmatprep.subr.mxu0 0.0
        %5709 = vmatpush1.msra.mxu0 0.0
        %5710 = vmatprep.subr.mxu0 0.0
        %5711 = vmatpush1.msra.mxu0 0.0
        %5712 = vmatprep.subr.mxu0 0.0
        %5713 = vmatpush1.msra.mxu0 0.0
        %5714 = vmatprep.subr.mxu0 0.0
        %5715 = vmatpush1.msra.mxu0 0.0
        %5716 = vmatprep.subr.mxu0 0.0
        %5717 = vmatpush1.msra.mxu0 0.0
        %5718 = vmatprep.subr.mxu0 0.0
        %5719 = vmatpush1.msra.mxu0 0.0
        %5720 = vmatprep.subr.mxu0 0.0
        %5721 = vmatpush1.msra.mxu0 0.0
        %5722 = vmatprep.mubr.f32.mxu0 0.0
        %5723 = vmatmul.mubr.f32.gmra.mrb[0].mxu0 %v5611
        %v5724 = vpop.f32.mrb[0].mxu0
        %v5725 = vadd.f32 %v5608, %v5724
        %v5726 = vpop.f32.mrb[0].mxu0
        %5727 = vmatprep.mubr.f32.mxu0 0.0
        %5728 = vmatmul.mubr.f32.gmra.mrb[0].mxu0 %v5614
        %v5729 = vpop.f32.mrb[0].mxu0
        %v5730 = vadd.f32 %v5608, %v5729
        %v5731 = vpop.f32.mrb[0].mxu0
        %5732 = vmatprep.mubr.f32.mxu0 0.0
        %5733 = vmatmul.mubr.f32.gmra.mrb[0].mxu0 %v5617
        %v5734 = vpop.f32.mrb[0].mxu0
        %v5735 = vadd.f32 %v5608, %v5734
        %v5736 = vpop.f32.mrb[0].mxu0
        %5737 = vmatprep.mubr.f32.mxu0 0.0
        %5738 = vmatmul.mubr.f32.gmra.mrb[0].mxu0 %v5620
        %v5739 = vpop.f32.mrb[0].mxu0
        %v5740 = vadd.f32 %v5608, %v5739
        %v5741 = vpop.f32.mrb[0].mxu0
        %5742 = vmatprep.mubr.f32.mxu0 0.0
        %5743 = vmatmul.mubr.f32.gmra.mrb[0].mxu0 %v5623
        %v5744 = vpop.f32.mrb[0].mxu0
        %v5745 = vadd.f32 %v5608, %v5744
        %v5746 = vpop.f32.mrb[0].mxu0
        %5747 = vmatprep.mubr.f32.mxu0 0.0
        %5748 = vmatmul.mubr.f32.gmra.mrb[0].mxu0 %v5626
        %v5749 = vpop.f32.mrb[0].mxu0
        %v5750 = vadd.f32 %v5608, %v5749
        %v5751 = vpop.f32.mrb[0].mxu0
        %5752 = vmatprep.mubr.f32.mxu0 0.0
        %5753 = vmatmul.mubr.f32.gmra.mrb[0].mxu0 %v5629
        %v5754 = vpop.f32.mrb[0].mxu0
        %v5755 = vadd.f32 %v5608, %v5754
        %v5756 = vpop.f32.mrb[0].mxu0
        %5757 = vmatprep.mubr.f32.mxu0 0.0
        %5758 = vmatmul.mubr.f32.gmra.mrb[0].mxu0 %v5632
        %v5759 = vpop.f32.mrb[0].mxu0
        %v5760 = vadd.f32 %v5608, %v5759
        %v5761 = vpop.f32.mrb[0].mxu0
        %5762 = vmatprep.mubr.f32.mxu0 0.0
        %5763 = vmatmul.mubr.f32.gmra.mrb[0].mxu0 %v5635
        %v5764 = vpop.f32.mrb[0].mxu0
        %v5765 = vadd.f32 %v5608, %v5764
        %v5766 = vpop.f32.mrb[0].mxu0
        %5767 = vmatprep.mubr.f32.mxu0 0.0
        %5768 = vmatmul.mubr.f32.gmra.mrb[0].mxu0 %v5638
        %v5769 = vpop.f32.mrb[0].mxu0
        %v5770 = vadd.f32 %v5608, %v5769
        %v5771 = vpop.f32.mrb[0].mxu0
        %5772 = vmatprep.mubr.f32.mxu0 0.0
        %5773 = vmatmul.mubr.f32.gmra.mrb[0].mxu0 %v5641
        %v5774 = vpop.f32.mrb[0].mxu0
        %v5775 = vadd.f32 %v5608, %v5774
        %v5776 = vpop.f32.mrb[0].mxu0
        %5777 = vmatprep.mubr.f32.mxu0 0.0
        %5778 = vmatmul.mubr.f32.gmra.mrb[0].mxu0 %v5644
        %v5779 = vpop.f32.mrb[0].mxu0
        %v5780 = vadd.f32 %v5608, %v5779
        %v5781 = vpop.f32.mrb[0].mxu0
        %5782 = vmatprep.mubr.f32.mxu0 0.0
        %5783 = vmatmul.mubr.f32.gmra.mrb[0].mxu0 %v5647
        %v5784 = vpop.f32.mrb[0].mxu0
        %v5785 = vadd.f32 %v5608, %v5784
        %v5786 = vpop.f32.mrb[0].mxu0
        %5787 = vmatprep.mubr.f32.mxu0 0.0
        %5788 = vmatmul.mubr.f32.gmra.mrb[0].mxu0 %v5650
        %v5789 = vpop.f32.mrb[0].mxu0
        %v5790 = vadd.f32 %v5608, %v5789
        %v5791 = vpop.f32.mrb[0].mxu0
        %5792 = vmatprep.mubr.f32.mxu0 0.0
        %5793 = vmatmul.mubr.f32.gmra.mrb[0].mxu0 %v5653
        %v5794 = vpop.f32.mrb[0].mxu0
        %v5795 = vadd.f32 %v5608, %v5794
        %v5796 = vpop.f32.mrb[0].mxu0
        %5797 = vmatprep.mubr.f32.mxu0 0.0
        %5798 = vmatmul.mubr.f32.gmra.mrb[0].mxu0 %v5656
        %v5799 = vpop.f32.mrb[0].mxu0
        %v5800 = vadd.f32 %v5608, %v5799
        %v5801 = vpop.f32.mrb[0].mxu0
        %5802 = vdwg.mxu0
        %5803 = vst [vmem:[%s6] sm:$0xff] %v5725
        %5804 = vst [vmem:[%s6 + $0x8] sm:$0xff] %v5730
        %5805 = vst [vmem:[%s6 + $0x10] sm:$0xff] %v5735
        %5806 = vst [vmem:[%s6 + $0x18] sm:$0xff] %v5740
        %5807 = vst [vmem:[%s6 + $0x20] sm:$0xff] %v5745
        %5808 = vst [vmem:[%s6 + $0x28] sm:$0xff] %v5750
        %5809 = vst [vmem:[%s6 + $0x30] sm:$0xff] %v5755
        %5810 = vst [vmem:[%s6 + $0x38] sm:$0xff] %v5760
        %5811 = vst [vmem:[%s6 + $0x40] sm:$0xff] %v5765
        %5812 = vst [vmem:[%s6 + $0x48] sm:$0xff] %v5770
        %5813 = vst [vmem:[%s6 + $0x50] sm:$0xff] %v5775
        %5814 = vst [vmem:[%s6 + $0x58] sm:$0xff] %v5780
        %5815 = vst [vmem:[%s6 + $0x60] sm:$0xff] %v5785
        %5816 = vst [vmem:[%s6 + $0x68] sm:$0xff] %v5790
        %5817 = vst [vmem:[%s6 + $0x70] sm:$0xff] %v5795
        %5818 = vst [vmem:[%s6 + $0x78] sm:$0xff] %v5800
      $region52: #{dit_forward.1} parent=43 // pred_fallthru
        _
      // Predicated region
      $region53: #{dit_forward.1} parent=43 // pred_check
        %p5819 = pneg %p166
      $region54: #{dit_forward.1} parent=43 // pred_check_branch
        %5821 = sbr.rel (%p5819) target = $region56
      $region55: #{dit_forward.1} parent=43 // pred_region
        _
      $region56: #{dit_forward.1} parent=43 // pred_fallthru
        _
      // Predicated region
      $region57: #{dit_forward.1} parent=43 // pred_check
        %p5822 = pneg %p166
      $region58: #{dit_forward.1} parent=43 // pred_check_branch
        %5824 = sbr.rel (%p5822) target = $region60
      $region59: #{dit_forward.1} parent=43 // pred_region
        _
      $region60: #{dit_forward.1} parent=43 // pred_fallthru
        _
    $region44: #{dit_forward.1} parent=5 // pred_fallthru
      _
    %p5825 = scmp.le.s32.totalorder 2, %s12
    // Predicated region
    $region61: #{dit_forward.1} parent=5 // pred_check
      %p5826 = pneg %p5825
    $region62: #{dit_forward.1} parent=5 // pred_check_branch
      %5828 = sbr.rel (%p5826) target = $region64
    $region63: #{dit_forward.1} parent=5 // pred_region
      %s5829 = ssub.s32 %s12, 2
    $region64: #{dit_forward.1} parent=5 // pred_fallthru
      _
  $region6: #{dit_forward.1} parent=0 // loop_footer
    %s16 = sadd.s32 1, %s12
  $region7: #{dit_forward.1} parent=0 // loop_footer_branch
    %11 = sbr.rel target = $region3
  $region8: #{dit_forward.1} parent=0 // loop_exit
    _

</llo_original>
